<compile_context>
chip_gen: v7x
topology: tpu7x:2x2x1
jax: 0.10.0
libtpu: 0.0.40
codegen_flags: <defaults>
</compile_context>

<pallas_src>
import functools
import math

import jax
import jax.numpy as jnp
from jax.experimental import pallas as pl
from jax.experimental.pallas import tpu as pltpu

EPS = 1e-5        # nn.LayerNorm default eps
NEG_INF = -1e9    # masked_fill value in the reference attention
_MIN_VMEM = 32 * 1024 * 1024
_MAX_VMEM = 64 * 1024 * 1024   # v7x physical VMEM per TensorCore


def _vmem_budget(nbytes):
    """Explicit scoped-VMEM limit: 2x headroom over resident blocks, clamped to a v7x-safe range."""
    return int(min(max(2 * int(nbytes), _MIN_VMEM), _MAX_VMEM))


def _spec(shape, index_map, *, single=False):
    """BlockSpec helper; single=True => Buffered(1) for constant-index blocks."""
    if single:
        return pl.BlockSpec(shape, index_map, pipeline_mode=pl.Buffered(1))
    return pl.BlockSpec(shape, index_map)


def _pick_row_tile(n, preferred=(256, 128)):
    """Largest preferred tile dividing n; else largest multiple-of-8 divisor; else n (full dim)."""
    for t in preferred:
        if n % t == 0:
            return t
    t = min(n, preferred[-1])
    t -= t % 8
    while t >= 8:
        if n % t == 0:
            return t
        t -= 8
    return n


def _pick_lane_tile(n, preferred=(512, 256, 128)):
    for t in preferred:
        if n % t == 0:
            return t
    return n


def _layernorm_f32(x, gamma, beta):
    """LayerNorm with f32 statistics (biased variance, torch semantics)."""
    mu = jnp.mean(x, axis=-1, keepdims=True)
    var = jnp.mean((x - mu) ** 2, axis=-1, keepdims=True)
    return (x - mu) * jax.lax.rsqrt(var + EPS) * gamma + beta


# ----------------------------- shared per-head attention core ---------------------------
def _mha_heads(q, k, v, mask_zero, wo, bo, x_res, o_ref, attn_ref, heads, dk):
    """q pre-scaled bf16 [tq,D]; k/v bf16 [Lk,D]. Writes attn weights and out (+residual)."""
    heads_out = []
    for h in range(heads):                                # static unroll over heads
        lo = h * dk
        s = jax.lax.dot_general(q[:, lo:lo + dk], k[:, lo:lo + dk],
                                (((1,), (1,)), ((), ())),
                                preferred_element_type=jnp.float32)
        s = jnp.where(mask_zero, NEG_INF, s)              # mask compare hoisted (mask_zero)
        s = s - jnp.max(s, axis=-1, keepdims=True)
        e = jnp.exp(s)
        p = e / jnp.sum(e, axis=-1, keepdims=True)        # exact divide (torch softmax parity)
        attn_ref[0, h] = p.astype(attn_ref.dtype)
        heads_out.append(jnp.dot(p.astype(jnp.bfloat16), v[:, lo:lo + dk],
                                 preferred_element_type=jnp.float32))
    # ONE full-K out-projection instead of H small K=dk matmuls.
    concat = jnp.concatenate(heads_out, axis=-1).astype(jnp.bfloat16)   # [tq, D]
    o_ref[0] = x_res + bo + jnp.dot(concat, wo, preferred_element_type=jnp.float32)


# ----------------------- fused SELF-attention sublayer (LN + MHA + res) ------------------
def _self_attn_kernel(x_ref, m_ref, g_ref, b_ref, wqkv_ref, bqkv_ref, wo_ref, bo_ref,
                      o_ref, attn_ref, q_sc, k_sc, v_sc, *, heads, scale, tq):
    qi = pl.program_id(1)
    D = x_ref.shape[-1]
    dk = D // heads

    # LN + fused [D,3D] QKV projection for the whole sequence, computed once per batch
    # (qi == 0) and cached in VMEM scratch; later q-tiles reuse it.
    @pl.when(qi == 0)
    def _():
        xn = _layernorm_f32(x_ref[0], g_ref[...], b_ref[...]).astype(jnp.bfloat16)
        qkv = jnp.dot(xn, wqkv_ref[...], preferred_element_type=jnp.float32) + bqkv_ref[...]
        q_sc[...] = (qkv[:, :D] * scale).astype(jnp.bfloat16)   # fold 1/sqrt(dk) into q
        k_sc[...] = qkv[:, D:2 * D].astype(jnp.bfloat16)
        v_sc[...] = qkv[:, 2 * D:].astype(jnp.bfloat16)

    q_start = pl.multiple_of(qi * tq, tq)
    q = q_sc[pl.ds(q_start, tq), :]                       # [tq, D] bf16, pre-scaled
    mask_zero = (m_ref[0] == 0.0)                         # hoisted out of the head loop
    x_res = x_ref[0, pl.ds(q_start, tq), :]               # residual rows for this q tile
    _mha_heads(q, k_sc[...], v_sc[...], mask_zero, wo_ref[...], bo_ref[...],
               x_res, o_ref, attn_ref, heads, dk)


def self_attention_sublayer(x, mask, ln_g, ln_b, p, heads, attn_dtype=jnp.float32):
    """x: [B,Lq,D]; mask: [B,Mq,Lq] (Mq in {1,Lq}). Returns (x + attn, attn [B,H,Lq,Lq])."""
    B, Lq, D = x.shape
    Lk = Lq
    dk = D // heads
    mask = mask.astype(jnp.float32)
    Mq = mask.shape[1]
    tq = _pick_row_tile(Lq)
    nq = Lq // tq

    if Mq == 1:
        mask_spec = _spec((1, 1, Lk), lambda b, qi: (b, 0, 0))
        mq_blk = 1
    else:
        mask_spec = _spec((1, tq, Lk), lambda b, qi: (b, qi, 0))
        mq_blk = tq

    const = lambda b, qi: (0, 0)
    attn_bytes = jnp.dtype(attn_dtype).itemsize
    vmem = _vmem_budget(
        2 * Lq * D * 4                              # x block (double-buffered)
        + 2 * mq_blk * Lk * 4                       # mask block
        + (3 * D * D + D * D) * 2 + 6 * D * 4       # bf16 weights (single-buffered) + biases/ln
        + 2 * tq * D * 4                            # out block
        + 2 * heads * tq * Lk * attn_bytes          # attn-weights block
        + 3 * Lq * D * 2)                           # q/k/v bf16 scratch

    kernel = functools.partial(_self_attn_kernel, heads=heads,
                               scale=1.0 / math.sqrt(dk), tq=tq)
    out, attn = pl.pallas_call(
        kernel,
        out_shape=(jax.ShapeDtypeStruct((B, Lq, D), jnp.float32),
                   jax.ShapeDtypeStruct((B, heads, Lq, Lk), attn_dtype)),
        grid=(B, nq),
        in_specs=[
            _spec((1, Lq, D), lambda b, qi: (b, 0, 0)),   # x (full seq: residual + QKV source)
            mask_spec,
            _spec((1, D), const, single=True),            # ln gamma
            _spec((1, D), const, single=True),            # ln beta
            _spec((D, 3 * D), const, single=True),        # fused Wqkv
            _spec((1, 3 * D), const, single=True),        # fused bqkv
            _spec((D, D), const, single=True),            # Wo
            _spec((1, D), const, single=True),            # bo
        ],
        out_specs=(
            pl.BlockSpec((1, tq, D), lambda b, qi: (b, qi, 0)),
            pl.BlockSpec((1, heads, tq, Lk), lambda b, qi: (b, 0, qi, 0)),
        ),
        scratch_shapes=[pltpu.VMEM((Lq, D), jnp.bfloat16),
                        pltpu.VMEM((Lk, D), jnp.bfloat16),
                        pltpu.VMEM((Lk, D), jnp.bfloat16)],
        compiler_params=pltpu.CompilerParams(
            dimension_semantics=("parallel", "arbitrary"),
            vmem_limit_bytes=vmem),
    )(x, mask, ln_g, ln_b, p["wqkv"], p["bqkv"], p["wo"], p["bo"])
    return out, attn


# ---------------------- fused CROSS-attention sublayer (LN + MHA + res) ------------------
def _cross_attn_kernel(x_ref, e_ref, m_ref, g_ref, b_ref, wq_ref, bq_ref,
                       wkv_ref, bkv_ref, wo_ref, bo_ref,
                       o_ref, attn_ref, k_sc, v_sc, *, heads, scale):
    qi = pl.program_id(1)
    D = x_ref.shape[-1]
    dk = D // heads

    # K/V come from encoder outputs (no LayerNorm on them, per reference); computed once
    # per batch via one fused [D,2D] matmul and cached across q tiles.
    @pl.when(qi == 0)
    def _():
        e_bf = e_ref[0].astype(jnp.bfloat16)
        kv = jnp.dot(e_bf, wkv_ref[...], preferred_element_type=jnp.float32) + bkv_ref[...]
        k_sc[...] = kv[:, :D].astype(jnp.bfloat16)
        v_sc[...] = kv[:, D:].astype(jnp.bfloat16)

    x_tile = x_ref[0]                                     # [tq, D]: residual AND LN input
    xn = _layernorm_f32(x_tile, g_ref[...], b_ref[...]).astype(jnp.bfloat16)
    q = ((jnp.dot(xn, wq_ref[...], preferred_element_type=jnp.float32) + bq_ref[...])
         * scale).astype(jnp.bfloat16)                    # scale folded into q
    mask_zero = (m_ref[0] == 0.0)
    _mha_heads(q, k_sc[...], v_sc[...], mask_zero, wo_ref[...], bo_ref[...],
               x_tile, o_ref, attn_ref, heads, dk)


def cross_attention_sublayer(x, e_outputs, mask, ln_g, ln_b, p, heads, attn_dtype=jnp.float32):
    """x: [B,Lq,D]; e_outputs: [B,Le,D]; mask: [B,Mq,Le]. Returns (x + attn, attn [B,H,Lq,Le])."""
    B, Lq, D = x.shape
    Le = e_outputs.shape[1]
    dk = D // heads
    mask = mask.astype(jnp.float32)
    Mq = mask.shape[1]
    tq = _pick_row_tile(Lq)
    nq = Lq // tq

    if Mq == 1:
        mask_spec = _spec((1, 1, Le), lambda b, qi: (b, 0, 0))
        mq_blk = 1
    else:
        mask_spec = _spec((1, tq, Le), lambda b, qi: (b, qi, 0))
        mq_blk = tq

    const = lambda b, qi: (0, 0)
    attn_bytes = jnp.dtype(attn_dtype).itemsize
    vmem = _vmem_budget(
        2 * tq * D * 4                               # x tile
        + 2 * Le * D * 4                             # e_outputs block
        + 2 * mq_blk * Le * 4                        # mask
        + (D * D + 2 * D * D + D * D) * 2 + 6 * D * 4  # weights + biases/ln
        + 2 * tq * D * 4                             # out block
        + 2 * heads * tq * Le * attn_bytes           # attn-weights block
        + 2 * Le * D * 2)                            # k/v bf16 scratch

    kernel = functools.partial(_cross_attn_kernel, heads=heads, scale=1.0 / math.sqrt(dk))
    out, attn = pl.pallas_call(
        kernel,
        out_shape=(jax.ShapeDtypeStruct((B, Lq, D), jnp.float32),
                   jax.ShapeDtypeStruct((B, heads, Lq, Le), attn_dtype)),
        grid=(B, nq),
        in_specs=[
            _spec((1, tq, D), lambda b, qi: (b, qi, 0)),   # x tile (residual + LN + Q source)
            _spec((1, Le, D), lambda b, qi: (b, 0, 0)),    # encoder outputs (KV source)
            mask_spec,
            _spec((1, D), const, single=True),             # ln gamma
            _spec((1, D), const, single=True),             # ln beta
            _spec((D, D), const, single=True),             # Wq
            _spec((1, D), const, single=True),             # bq
            _spec((D, 2 * D), const, single=True),         # fused Wkv
            _spec((1, 2 * D), const, single=True),         # fused bkv
            _spec((D, D), const, single=True),             # Wo
            _spec((1, D), const, single=True),             # bo
        ],
        out_specs=(
            pl.BlockSpec((1, tq, D), lambda b, qi: (b, qi, 0)),
            pl.BlockSpec((1, heads, tq, Le), lambda b, qi: (b, 0, qi, 0)),
        ),
        scratch_shapes=[pltpu.VMEM((Le, D), jnp.bfloat16),
                        pltpu.VMEM((Le, D), jnp.bfloat16)],
        compiler_params=pltpu.CompilerParams(
            dimension_semantics=("parallel", "arbitrary"),
            vmem_limit_bytes=vmem),
    )(x, e_outputs, mask, ln_g, ln_b, p["wq"], p["bq"], p["wkv"], p["bkv"], p["wo"], p["bo"])
    return out, attn


# -------------------- fused feed-forward sublayer (LN + FF + res, d_ff tiled) ------------
def _ln_ff_res_kernel(x_ref, g_ref, b_ref, w1_ref, b1_ref, w2_ref, b2_ref, o_ref,
                      xn_sc, acc_sc):
    k = pl.program_id(1)

    @pl.when(k == 0)
    def _():
        xn_sc[...] = _layernorm_f32(x_ref[...], g_ref[...], b_ref[...]).astype(jnp.bfloat16)
        acc_sc[...] = jnp.zeros_like(acc_sc)

    h = jnp.dot(xn_sc[...], w1_ref[...], preferred_element_type=jnp.float32) + b1_ref[...]
    h = jnp.maximum(h, 0.0)                                # ReLU
    acc_sc[...] += jnp.dot(h.astype(jnp.bfloat16), w2_ref[...],
                           preferred_element_type=jnp.float32)

    @pl.when(k == pl.num_programs(1) - 1)
    def _():
        o_ref[...] = x_ref[...] + acc_sc[...] + b2_ref[...]


def ln_ff_res(x2d, ln_g, ln_b, w1, b1, w2, b2):
    M, D = x2d.shape
    d_ff = w1.shape[1]
    tm = _pick_row_tile(M, preferred=(512, 256))  # >=256 rows keeps the 256-wide MXU full (v6e/v7x)
    tf = _pick_lane_tile(d_ff)                    # d_ff reduction chunk (multiple of 128)
    nm, nf = M // tm, d_ff // tf
    single_w = (nf == 1)                          # weight chunks are constant only when nf == 1

    vmem = _vmem_budget(
        2 * tm * D * 4                                            # x block
        + (1 if single_w else 2) * (D * tf + tf * D) * 2          # w1/w2 chunks (bf16)
        + (1 if single_w else 2) * tf * 4                         # b1 chunk
        + 3 * D * 4                                               # ln g/b + b2 (single-buffered)
        + 2 * tm * D * 4                                          # out block
        + tm * D * 2 + tm * D * 4)                                # xn + acc scratch

    return pl.pallas_call(
        _ln_ff_res_kernel,
        out_shape=jax.ShapeDtypeStruct((M, D), jnp.float32),
        grid=(nm, nf),
        in_specs=[
            _spec((tm, D), lambda i, k: (i, 0)),                  # x (residual + LN input)
            _spec((1, D), lambda i, k: (0, 0), single=True),      # ln gamma
            _spec((1, D), lambda i, k: (0, 0), single=True),      # ln beta
            _spec((D, tf), lambda i, k: (0, k), single=single_w), # W1 chunk
            _spec((1, tf), lambda i, k: (0, k), single=single_w), # b1 chunk
            _spec((tf, D), lambda i, k: (k, 0), single=single_w), # W2 chunk
            _spec((1, D), lambda i, k: (0, 0), single=True),      # b2
        ],
        out_specs=pl.BlockSpec((tm, D), lambda i, k: (i, 0)),
        scratch_shapes=[pltpu.VMEM((tm, D), jnp.bfloat16),        # LN(x) cache (bf16)
                        pltpu.VMEM((tm, D), jnp.float32)],        # f32 accumulator
        compiler_params=pltpu.CompilerParams(
            dimension_semantics=("parallel", "arbitrary"),
            vmem_limit_bytes=vmem),
    )(x2d, ln_g, ln_b, w1, b1, w2, b2)


# ----------------------------------- Decoder layer ---------------------------------------
def decoder_layer(x, e_outputs, src_mask, trg_mask, params, heads):
    B, Lq, D = x.shape
    # Dropout layers are identity (eval mode) — no RNG used.
    # x2 = norm_1(x); x = x + attn_1(x2, x2, x2, trg_mask)
    x, attn_dec_dec = self_attention_sublayer(x, trg_mask, params["ln1_g"], params["ln1_b"],
                                              params["attn1"], heads)
    # x2 = norm_2(x); x = x + attn_2(x2, e_outputs, e_outputs, src_mask)
    x, attn_dec_enc = cross_attention_sublayer(x, e_outputs, src_mask,
                                               params["ln2_g"], params["ln2_b"],
                                               params["attn2"], heads)
    # x2 = norm_3(x); x = x + ff(x2)
    x = ln_ff_res(x.reshape(B * Lq, D), params["ln3_g"], params["ln3_b"],
                  params["ff_w1"], params["ff_b1"],
                  params["ff_w2"], params["ff_b2"]).reshape(B, Lq, D)
    return x, attn_dec_dec, attn_dec_enc


# ----------------------------------- Param helpers ---------------------------------------
def _init_linear(key, d_in, d_out, scale=0.05):
    kw, kb = jax.random.split(key)
    # stored already transposed [d_in, d_out]; weights bf16 (halves HBM bytes, doubles MXU
    # throughput), biases f32 (added post-accumulation).
    w = (scale * jax.random.normal(kw, (d_in, d_out), jnp.float32)).astype(jnp.bfloat16)
    b = scale * jax.random.normal(kb, (1, d_out), jnp.float32)
    return w, b


def _init_attn(key, d_model, fuse_q):
    ks = jax.random.split(key, 4)
    wq, bq = _init_linear(ks[0], d_model, d_model)
    wk, bk = _init_linear(ks[1], d_model, d_model)
    wv, bv = _init_linear(ks[2], d_model, d_model)
    wo, bo = _init_linear(ks[3], d_model, d_model)
    if fuse_q:   # self-attention: one fused [D, 3D] QKV matmul
        return dict(wqkv=jnp.concatenate([wq, wk, wv], axis=1),
                    bqkv=jnp.concatenate([bq, bk, bv], axis=1), wo=wo, bo=bo)
    # cross-attention: Q alone ([D,D]) + fused KV ([D,2D])
    return dict(wq=wq, bq=bq, wkv=jnp.concatenate([wk, wv], axis=1),
                bkv=jnp.concatenate([bk, bv], axis=1), wo=wo, bo=bo)


def init_params(key, d_model, d_ff):
    ks = jax.random.split(key, 4)
    params = dict(
        ln1_g=jnp.ones((1, d_model), jnp.float32), ln1_b=jnp.zeros((1, d_model), jnp.float32),
        ln2_g=jnp.ones((1, d_model), jnp.float32), ln2_b=jnp.zeros((1, d_model), jnp.float32),
        ln3_g=jnp.ones((1, d_model), jnp.float32), ln3_b=jnp.zeros((1, d_model), jnp.float32),
        attn1=_init_attn(ks[0], d_model, fuse_q=True),
        attn2=_init_attn(ks[1], d_model, fuse_q=False),
    )
    w1, b1 = _init_linear(ks[2], d_model, d_ff)
    w2, b2 = _init_linear(ks[3], d_ff, d_model)
    params.update(ff_w1=w1, ff_b1=b1, ff_w2=w2, ff_b2=b2)
    return params


# --------------------------------------- main ---------------------------------------------
if __name__ == "__main__":
    # NOTE: demo sizes are functional-only; for perf, use D >= 128, dk >= 64, Lq/Lk % 128 == 0.
    B, Lq, Le = 2, 8, 8
    d_model, heads = 32, 4
    d_ff = 4 * d_model

    key = jax.random.PRNGKey(0)
    k_x, k_e, k_p = jax.random.split(key, 3)

    x = jax.random.normal(k_x, (B, Lq, d_model), jnp.float32)
    e_outputs = jax.random.normal(k_e, (B, Le, d_model), jnp.float32)

    # trg_mask: causal [B, Lq, Lq]; src_mask: all-ones padding mask [B, 1, Le]
    trg_mask = jnp.broadcast_to(jnp.tril(jnp.ones((Lq, Lq), jnp.float32)), (B, Lq, Lq))
    src_mask = jnp.ones((B, 1, Le), jnp.float32)

    params = init_params(k_p, d_model, d_ff)

    fwd = jax.jit(functools.partial(decoder_layer, heads=heads))
    out, attn_dd, attn_de = fwd(x, e_outputs, src_mask, trg_mask, params)
    jax.block_until_ready((out, attn_dd, attn_de))

    assert out.shape == (B, Lq, d_model)
    assert attn_dd.shape == (B, heads, Lq, Lq)
    assert attn_de.shape == (B, heads, Lq, Le)
    assert bool(jnp.all(jnp.isfinite(out)))
    assert bool(jnp.all(jnp.isfinite(attn_dd))) and bool(jnp.all(jnp.isfinite(attn_de)))
    # attention rows should sum to ~1
    assert bool(jnp.allclose(jnp.sum(attn_dd, axis=-1), 1.0, atol=1e-3))
    assert bool(jnp.allclose(jnp.sum(attn_de, axis=-1), 1.0, atol=1e-3))

    print("KERNEL_OK")
</pallas_src>

<mosaic_0001>
module attributes {stable_mosaic.version = 11 : i64} {
  func.func @_ln_ff_res_kernel(%arg0: i32, %arg1: i32, %arg2: memref<16x32xf32, #tpu.memory_space<vmem>>, %arg3: memref<1x32xf32, #tpu.memory_space<vmem>>, %arg4: memref<1x32xf32, #tpu.memory_space<vmem>>, %arg5: memref<32x128xbf16, #tpu.memory_space<vmem>>, %arg6: memref<1x128xf32, #tpu.memory_space<vmem>>, %arg7: memref<128x32xbf16, #tpu.memory_space<vmem>>, %arg8: memref<1x32xf32, #tpu.memory_space<vmem>>, %arg9: memref<16x32xf32, #tpu.memory_space<vmem>>, %arg10: memref<16x32xbf16, #tpu.memory_space<vmem>>, %arg11: memref<16x32xf32, #tpu.memory_space<vmem>>) attributes {dimension_semantics = [#tpu.dimension_semantics<parallel>, #tpu.dimension_semantics<arbitrary>], iteration_bounds = array<i64: 1, 1>, scalar_prefetch = 0 : i64, scratch_operands = 2 : i64, tpu.core_type = #tpu.core_type<tc>, window_params = [{transform_indices = @transform_0, window_bounds = array<i64: 16, 32>}, {pipeline_mode = #tpu.pipeline_mode<synchronous>, transform_indices = @transform_1, window_bounds = array<i64: 1, 32>}, {pipeline_mode = #tpu.pipeline_mode<synchronous>, transform_indices = @transform_2, window_bounds = array<i64: 1, 32>}, {pipeline_mode = #tpu.pipeline_mode<synchronous>, transform_indices = @transform_3, window_bounds = array<i64: 32, 128>}, {pipeline_mode = #tpu.pipeline_mode<synchronous>, transform_indices = @transform_4, window_bounds = array<i64: 1, 128>}, {pipeline_mode = #tpu.pipeline_mode<synchronous>, transform_indices = @transform_5, window_bounds = array<i64: 128, 32>}, {pipeline_mode = #tpu.pipeline_mode<synchronous>, transform_indices = @transform_6, window_bounds = array<i64: 1, 32>}, {transform_indices = @transform_7, window_bounds = array<i64: 16, 32>}]} {
    %c0_i32 = arith.constant 0 : i32
    %0 = arith.cmpi eq, %arg1, %c0_i32 : i32
    %1 = arith.extui %0 : i1 to i32
    %c0_i32_0 = arith.constant 0 : i32
    %2 = arith.cmpi ne, %1, %c0_i32_0 : i32
    scf.if %2 {
      %c0_16 = arith.constant 0 : index
      %c0_17 = arith.constant 0 : index
      %20 = vector.load %arg2[%c0_16, %c0_17] : memref<16x32xf32, #tpu.memory_space<vmem>>, vector<16x32xf32>
      %c0_18 = arith.constant 0 : index
      %c0_19 = arith.constant 0 : index
      %21 = vector.load %arg3[%c0_18, %c0_19] : memref<1x32xf32, #tpu.memory_space<vmem>>, vector<1x32xf32>
      %c0_20 = arith.constant 0 : index
      %c0_21 = arith.constant 0 : index
      %22 = vector.load %arg4[%c0_20, %c0_21] : memref<1x32xf32, #tpu.memory_space<vmem>>, vector<1x32xf32>
      %cst_22 = arith.constant dense<0.000000e+00> : vector<16xf32>
      %23 = vector.multi_reduction <add>, %20, %cst_22 [1] : vector<16x32xf32> to vector<16xf32>
      %24 = vector.shape_cast %23 : vector<16xf32> to vector<16x1xf32>
      %cst_23 = arith.constant 3.200000e+01 : f32
      %25 = vector.broadcast %cst_23 : f32 to vector<16x1xf32>
      %26 = arith.divf %24, %25 : vector<16x1xf32>
      %27 = vector.broadcast %26 : vector<16x1xf32> to vector<16x32xf32>
      %28 = arith.subf %20, %27 : vector<16x32xf32>
      %29 = arith.mulf %28, %28 : vector<16x32xf32>
      %cst_24 = arith.constant dense<0.000000e+00> : vector<16xf32>
      %30 = vector.multi_reduction <add>, %29, %cst_24 [1] : vector<16x32xf32> to vector<16xf32>
      %31 = vector.shape_cast %30 : vector<16xf32> to vector<16x1xf32>
      %cst_25 = arith.constant 3.200000e+01 : f32
      %32 = vector.broadcast %cst_25 : f32 to vector<16x1xf32>
      %33 = arith.divf %31, %32 : vector<16x1xf32>
      %34 = vector.broadcast %26 : vector<16x1xf32> to vector<16x32xf32>
      %35 = arith.subf %20, %34 : vector<16x32xf32>
      %cst_26 = arith.constant 9.99999974E-6 : f32
      %36 = vector.broadcast %cst_26 : f32 to vector<16x1xf32>
      %37 = arith.addf %33, %36 : vector<16x1xf32>
      %38 = math.rsqrt %37 : vector<16x1xf32>
      %39 = vector.broadcast %38 : vector<16x1xf32> to vector<16x32xf32>
      %40 = arith.mulf %35, %39 : vector<16x32xf32>
      %41 = vector.broadcast %21 : vector<1x32xf32> to vector<16x32xf32>
      %42 = arith.mulf %40, %41 : vector<16x32xf32>
      %43 = vector.broadcast %22 : vector<1x32xf32> to vector<16x32xf32>
      %44 = arith.addf %42, %43 : vector<16x32xf32>
      %45 = arith.truncf %44 : vector<16x32xf32> to vector<16x32xbf16>
      %c0_27 = arith.constant 0 : index
      %c0_28 = arith.constant 0 : index
      %46 = vector.load %arg10[%c0_27, %c0_28] : memref<16x32xbf16, #tpu.memory_space<vmem>>, vector<16x32xbf16>
      tpu.vector_store %arg10[%c0_27, %c0_28], %45 {strides = array<i32>} : memref<16x32xbf16, #tpu.memory_space<vmem>>, vector<16x32xbf16>,
      %cst_29 = arith.constant 0.000000e+00 : f32
      %47 = vector.broadcast %cst_29 : f32 to vector<16x32xf32>
      %c0_30 = arith.constant 0 : index
      %c0_31 = arith.constant 0 : index
      %48 = vector.load %arg11[%c0_30, %c0_31] : memref<16x32xf32, #tpu.memory_space<vmem>>, vector<16x32xf32>
      tpu.vector_store %arg11[%c0_30, %c0_31], %47 {strides = array<i32>} : memref<16x32xf32, #tpu.memory_space<vmem>>, vector<16x32xf32>,
    } else {
    }
    %c0 = arith.constant 0 : index
    %c0_1 = arith.constant 0 : index
    %3 = vector.load %arg10[%c0, %c0_1] : memref<16x32xbf16, #tpu.memory_space<vmem>>, vector<16x32xbf16>
    %c0_2 = arith.constant 0 : index
    %c0_3 = arith.constant 0 : index
    %4 = vector.load %arg5[%c0_2, %c0_3] : memref<32x128xbf16, #tpu.memory_space<vmem>>, vector<32x128xbf16>
    %cst = arith.constant dense<0.000000e+00> : vector<16x128xf32>
    %5 = tpu.matmul %3, %4, %cst {dimension_numbers = #tpu.dot_dimension_numbers<[1], [0], [0], [1], [0, 0, 1, 1], [], []>} : vector<16x32xbf16>, vector<32x128xbf16>, vector<16x128xf32> -> vector<16x128xf32>
    %c0_4 = arith.constant 0 : index
    %c0_5 = arith.constant 0 : index
    %6 = vector.load %arg6[%c0_4, %c0_5] : memref<1x128xf32, #tpu.memory_space<vmem>>, vector<1x128xf32>
    %7 = vector.broadcast %6 : vector<1x128xf32> to vector<16x128xf32>
    %8 = arith.addf %5, %7 : vector<16x128xf32>
    %cst_6 = arith.constant 0.000000e+00 : f32
    %9 = vector.broadcast %cst_6 : f32 to vector<16x128xf32>
    %10 = arith.maximumf %8, %9 : vector<16x128xf32>
    %c0_7 = arith.constant 0 : index
    %c0_8 = arith.constant 0 : index
    %11 = vector.load %arg11[%c0_7, %c0_8] : memref<16x32xf32, #tpu.memory_space<vmem>>, vector<16x32xf32>
    %12 = arith.truncf %10 : vector<16x128xf32> to vector<16x128xbf16>
    %c0_9 = arith.constant 0 : index
    %c0_10 = arith.constant 0 : index
    %13 = vector.load %arg7[%c0_9, %c0_10] : memref<128x32xbf16, #tpu.memory_space<vmem>>, vector<128x32xbf16>
    %cst_11 = arith.constant dense<0.000000e+00> : vector<16x32xf32>
    %14 = tpu.matmul %12, %13, %cst_11 {dimension_numbers = #tpu.dot_dimension_numbers<[1], [0], [0], [1], [0, 0, 1, 1], [], []>} : vector<16x128xbf16>, vector<128x32xbf16>, vector<16x32xf32> -> vector<16x32xf32>
    %15 = arith.addf %11, %14 : vector<16x32xf32>
    %c0_12 = arith.constant 0 : index
    %c0_13 = arith.constant 0 : index
    %16 = vector.load %arg11[%c0_12, %c0_13] : memref<16x32xf32, #tpu.memory_space<vmem>>, vector<16x32xf32>
    tpu.vector_store %arg11[%c0_12, %c0_13], %15 {strides = array<i32>} : memref<16x32xf32, #tpu.memory_space<vmem>>, vector<16x32xf32>,
    %c0_i32_14 = arith.constant 0 : i32
    %17 = arith.cmpi eq, %arg1, %c0_i32_14 : i32
    %18 = arith.extui %17 : i1 to i32
    %c0_i32_15 = arith.constant 0 : i32
    %19 = arith.cmpi ne, %18, %c0_i32_15 : i32
    scf.if %19 {
      %c0_16 = arith.constant 0 : index
      %c0_17 = arith.constant 0 : index
      %20 = vector.load %arg2[%c0_16, %c0_17] : memref<16x32xf32, #tpu.memory_space<vmem>>, vector<16x32xf32>
      %c0_18 = arith.constant 0 : index
      %c0_19 = arith.constant 0 : index
      %21 = vector.load %arg11[%c0_18, %c0_19] : memref<16x32xf32, #tpu.memory_space<vmem>>, vector<16x32xf32>
      %22 = arith.addf %20, %21 : vector<16x32xf32>
      %c0_20 = arith.constant 0 : index
      %c0_21 = arith.constant 0 : index
      %23 = vector.load %arg8[%c0_20, %c0_21] : memref<1x32xf32, #tpu.memory_space<vmem>>, vector<1x32xf32>
      %24 = vector.broadcast %23 : vector<1x32xf32> to vector<16x32xf32>
      %25 = arith.addf %22, %24 : vector<16x32xf32>
      %c0_22 = arith.constant 0 : index
      %c0_23 = arith.constant 0 : index
      %26 = vector.load %arg9[%c0_22, %c0_23] : memref<16x32xf32, #tpu.memory_space<vmem>>, vector<16x32xf32>
      tpu.vector_store %arg9[%c0_22, %c0_23], %25 {strides = array<i32>} : memref<16x32xf32, #tpu.memory_space<vmem>>, vector<16x32xf32>,
    } else {
    }
    return
  }
  func.func @transform_0(%arg0: i32, %arg1: i32) -> (i32, i32) {
    %c0_i32 = arith.constant 0 : i32
    %c0_i32_0 = arith.constant 0 : i32
    return %arg0, %c0_i32 : i32, i32
  }
  func.func @transform_1(%arg0: i32, %arg1: i32) -> (i32, i32) {
    %c0_i32 = arith.constant 0 : i32
    %c0_i32_0 = arith.constant 0 : i32
    %c0_i32_1 = arith.constant 0 : i32
    return %c0_i32, %c0_i32_0 : i32, i32
  }
  func.func @transform_2(%arg0: i32, %arg1: i32) -> (i32, i32) {
    %c0_i32 = arith.constant 0 : i32
    %c0_i32_0 = arith.constant 0 : i32
    %c0_i32_1 = arith.constant 0 : i32
    return %c0_i32, %c0_i32_0 : i32, i32
  }
  func.func @transform_3(%arg0: i32, %arg1: i32) -> (i32, i32) {
    %c0_i32 = arith.constant 0 : i32
    %c0_i32_0 = arith.constant 0 : i32
    return %c0_i32, %arg1 : i32, i32
  }
  func.func @transform_4(%arg0: i32, %arg1: i32) -> (i32, i32) {
    %c0_i32 = arith.constant 0 : i32
    %c0_i32_0 = arith.constant 0 : i32
    return %c0_i32, %arg1 : i32, i32
  }
  func.func @transform_5(%arg0: i32, %arg1: i32) -> (i32, i32) {
    %c0_i32 = arith.constant 0 : i32
    %c0_i32_0 = arith.constant 0 : i32
    return %arg1, %c0_i32 : i32, i32
  }
  func.func @transform_6(%arg0: i32, %arg1: i32) -> (i32, i32) {
    %c0_i32 = arith.constant 0 : i32
    %c0_i32_0 = arith.constant 0 : i32
    %c0_i32_1 = arith.constant 0 : i32
    return %c0_i32, %c0_i32_0 : i32, i32
  }
  func.func @transform_7(%arg0: i32, %arg1: i32) -> (i32, i32) {
    %c0_i32 = arith.constant 0 : i32
    %c0_i32_0 = arith.constant 0 : i32
    return %arg0, %c0_i32 : i32, i32
  }
}

module attributes {stable_mosaic.version = 11 : i64} {
  func.func @_self_attn_kernel(%arg0: i32, %arg1: i32, %arg2: memref<1x8x32xf32, #tpu.memory_space<vmem>>, %arg3: memref<1x8x8xf32, #tpu.memory_space<vmem>>, %arg4: memref<1x32xf32, #tpu.memory_space<vmem>>, %arg5: memref<1x32xf32, #tpu.memory_space<vmem>>, %arg6: memref<32x96xbf16, #tpu.memory_space<vmem>>, %arg7: memref<1x96xf32, #tpu.memory_space<vmem>>, %arg8: memref<32x32xbf16, #tpu.memory_space<vmem>>, %arg9: memref<1x32xf32, #tpu.memory_space<vmem>>, %arg10: memref<1x8x32xf32, #tpu.memory_space<vmem>>, %arg11: memref<1x4x8x8xf32, #tpu.memory_space<vmem>>, %arg12: memref<8x32xbf16, #tpu.memory_space<vmem>>, %arg13: memref<8x32xbf16, #tpu.memory_space<vmem>>, %arg14: memref<8x32xbf16, #tpu.memory_space<vmem>>) attributes {dimension_semantics = [#tpu.dimension_semantics<parallel>, #tpu.dimension_semantics<arbitrary>], iteration_bounds = array<i64: 2, 1>, scalar_prefetch = 0 : i64, scratch_operands = 3 : i64, tpu.core_type = #tpu.core_type<tc>, window_params = [{transform_indices = @transform_0, window_bounds = array<i64: 1, 8, 32>}, {transform_indices = @transform_1, window_bounds = array<i64: 1, 8, 8>}, {pipeline_mode = #tpu.pipeline_mode<synchronous>, transform_indices = @transform_2, window_bounds = array<i64: 1, 32>}, {pipeline_mode = #tpu.pipeline_mode<synchronous>, transform_indices = @transform_3, window_bounds = array<i64: 1, 32>}, {pipeline_mode = #tpu.pipeline_mode<synchronous>, transform_indices = @transform_4, window_bounds = array<i64: 32, 96>}, {pipeline_mode = #tpu.pipeline_mode<synchronous>, transform_indices = @transform_5, window_bounds = array<i64: 1, 96>}, {pipeline_mode = #tpu.pipeline_mode<synchronous>, transform_indices = @transform_6, window_bounds = array<i64: 32, 32>}, {pipeline_mode = #tpu.pipeline_mode<synchronous>, transform_indices = @transform_7, window_bounds = array<i64: 1, 32>}, {transform_indices = @transform_8, window_bounds = array<i64: 1, 8, 32>}, {transform_indices = @transform_9, window_bounds = array<i64: 1, 4, 8, 8>}]} {
    %c0_i32 = arith.constant 0 : i32
    %0 = arith.cmpi eq, %arg1, %c0_i32 : i32
    %1 = arith.extui %0 : i1 to i32
    %c0_i32_0 = arith.constant 0 : i32
    %2 = arith.cmpi ne, %1, %c0_i32_0 : i32
    scf.if %2 {
      %c0_51 = arith.constant 0 : index
      %c0_52 = arith.constant 0 : index
      %c0_53 = arith.constant 0 : index
      %107 = vector.load %arg2[%c0_51, %c0_52, %c0_53] : memref<1x8x32xf32, #tpu.memory_space<vmem>>, vector<1x8x32xf32>
      %108 = vector.shape_cast %107 : vector<1x8x32xf32> to vector<8x32xf32>
      %c0_54 = arith.constant 0 : index
      %c0_55 = arith.constant 0 : index
      %109 = vector.load %arg4[%c0_54, %c0_55] : memref<1x32xf32, #tpu.memory_space<vmem>>, vector<1x32xf32>
      %c0_56 = arith.constant 0 : index
      %c0_57 = arith.constant 0 : index
      %110 = vector.load %arg5[%c0_56, %c0_57] : memref<1x32xf32, #tpu.memory_space<vmem>>, vector<1x32xf32>
      %cst_58 = arith.constant dense<0.000000e+00> : vector<8xf32>
      %111 = vector.multi_reduction <add>, %108, %cst_58 [1] : vector<8x32xf32> to vector<8xf32>
      %112 = vector.shape_cast %111 : vector<8xf32> to vector<8x1xf32>
      %cst_59 = arith.constant 3.200000e+01 : f32
      %113 = vector.broadcast %cst_59 : f32 to vector<8x1xf32>
      %114 = arith.divf %112, %113 : vector<8x1xf32>
      %115 = vector.broadcast %114 : vector<8x1xf32> to vector<8x32xf32>
      %116 = arith.subf %108, %115 : vector<8x32xf32>
      %117 = arith.mulf %116, %116 : vector<8x32xf32>
      %cst_60 = arith.constant dense<0.000000e+00> : vector<8xf32>
      %118 = vector.multi_reduction <add>, %117, %cst_60 [1] : vector<8x32xf32> to vector<8xf32>
      %119 = vector.shape_cast %118 : vector<8xf32> to vector<8x1xf32>
      %cst_61 = arith.constant 3.200000e+01 : f32
      %120 = vector.broadcast %cst_61 : f32 to vector<8x1xf32>
      %121 = arith.divf %119, %120 : vector<8x1xf32>
      %122 = vector.broadcast %114 : vector<8x1xf32> to vector<8x32xf32>
      %123 = arith.subf %108, %122 : vector<8x32xf32>
      %cst_62 = arith.constant 9.99999974E-6 : f32
      %124 = vector.broadcast %cst_62 : f32 to vector<8x1xf32>
      %125 = arith.addf %121, %124 : vector<8x1xf32>
      %126 = math.rsqrt %125 : vector<8x1xf32>
      %127 = vector.broadcast %126 : vector<8x1xf32> to vector<8x32xf32>
      %128 = arith.mulf %123, %127 : vector<8x32xf32>
      %129 = vector.broadcast %109 : vector<1x32xf32> to vector<8x32xf32>
      %130 = arith.mulf %128, %129 : vector<8x32xf32>
      %131 = vector.broadcast %110 : vector<1x32xf32> to vector<8x32xf32>
      %132 = arith.addf %130, %131 : vector<8x32xf32>
      %133 = arith.truncf %132 : vector<8x32xf32> to vector<8x32xbf16>
      %c0_63 = arith.constant 0 : index
      %c0_64 = arith.constant 0 : index
      %134 = vector.load %arg6[%c0_63, %c0_64] : memref<32x96xbf16, #tpu.memory_space<vmem>>, vector<32x96xbf16>
      %cst_65 = arith.constant dense<0.000000e+00> : vector<8x96xf32>
      %135 = tpu.matmul %133, %134, %cst_65 {dimension_numbers = #tpu.dot_dimension_numbers<[1], [0], [0], [1], [0, 0, 1, 1], [], []>} : vector<8x32xbf16>, vector<32x96xbf16>, vector<8x96xf32> -> vector<8x96xf32>
      %c0_66 = arith.constant 0 : index
      %c0_67 = arith.constant 0 : index
      %136 = vector.load %arg7[%c0_66, %c0_67] : memref<1x96xf32, #tpu.memory_space<vmem>>, vector<1x96xf32>
      %137 = vector.broadcast %136 : vector<1x96xf32> to vector<8x96xf32>
      %138 = arith.addf %135, %137 : vector<8x96xf32>
      %139 = vector.extract_strided_slice %138 {offsets = [0, 0], sizes = [8, 32], strides = [1, 1]} : vector<8x96xf32> to vector<8x32xf32>
      %cst_68 = arith.constant 0.353553385 : f32
      %140 = vector.broadcast %cst_68 : f32 to vector<8x32xf32>
      %141 = arith.mulf %139, %140 : vector<8x32xf32>
      %142 = arith.truncf %141 : vector<8x32xf32> to vector<8x32xbf16>
      %c0_69 = arith.constant 0 : index
      %c0_70 = arith.constant 0 : index
      %143 = vector.load %arg12[%c0_69, %c0_70] : memref<8x32xbf16, #tpu.memory_space<vmem>>, vector<8x32xbf16>
      tpu.vector_store %arg12[%c0_69, %c0_70], %142 {strides = array<i32>} : memref<8x32xbf16, #tpu.memory_space<vmem>>, vector<8x32xbf16>,
      %144 = vector.extract_strided_slice %138 {offsets = [0, 32], sizes = [8, 32], strides = [1, 1]} : vector<8x96xf32> to vector<8x32xf32>
      %145 = arith.truncf %144 : vector<8x32xf32> to vector<8x32xbf16>
      %c0_71 = arith.constant 0 : index
      %c0_72 = arith.constant 0 : index
      %146 = vector.load %arg13[%c0_71, %c0_72] : memref<8x32xbf16, #tpu.memory_space<vmem>>, vector<8x32xbf16>
      tpu.vector_store %arg13[%c0_71, %c0_72], %145 {strides = array<i32>} : memref<8x32xbf16, #tpu.memory_space<vmem>>, vector<8x32xbf16>,
      %147 = vector.extract_strided_slice %138 {offsets = [0, 64], sizes = [8, 32], strides = [1, 1]} : vector<8x96xf32> to vector<8x32xf32>
      %148 = arith.truncf %147 : vector<8x32xf32> to vector<8x32xbf16>
      %c0_73 = arith.constant 0 : index
      %c0_74 = arith.constant 0 : index
      %149 = vector.load %arg14[%c0_73, %c0_74] : memref<8x32xbf16, #tpu.memory_space<vmem>>, vector<8x32xbf16>
      tpu.vector_store %arg14[%c0_73, %c0_74], %148 {strides = array<i32>} : memref<8x32xbf16, #tpu.memory_space<vmem>>, vector<8x32xbf16>,
    } else {
    }
    %c8_i32 = arith.constant 8 : i32
    %3 = arith.muli %arg1, %c8_i32 : i32
    %4 = tpu.assume_multiple %3, 8 : i32
    %5 = arith.index_cast %4 : i32 to index
    %c0 = arith.constant 0 : index
    %6 = vector.load %arg12[%5, %c0] : memref<8x32xbf16, #tpu.memory_space<vmem>>, vector<8x32xbf16>
    %c0_1 = arith.constant 0 : index
    %c0_2 = arith.constant 0 : index
    %c0_3 = arith.constant 0 : index
    %7 = vector.load %arg3[%c0_1, %c0_2, %c0_3] : memref<1x8x8xf32, #tpu.memory_space<vmem>>, vector<1x8x8xf32>
    %8 = vector.shape_cast %7 : vector<1x8x8xf32> to vector<8x8xf32>
    %cst = arith.constant 0.000000e+00 : f32
    %9 = vector.broadcast %cst : f32 to vector<8x8xf32>
    %10 = arith.cmpf oeq, %8, %9 : vector<8x8xf32>
    %c0_4 = arith.constant 0 : index
    %11 = arith.index_cast %4 : i32 to index
    %c0_5 = arith.constant 0 : index
    %12 = vector.load %arg2[%c0_4, %11, %c0_5] : memref<1x8x32xf32, #tpu.memory_space<vmem>>, vector<1x8x32xf32>
    %13 = vector.shape_cast %12 : vector<1x8x32xf32> to vector<8x32xf32>
    %c0_6 = arith.constant 0 : index
    %c0_7 = arith.constant 0 : index
    %14 = vector.load %arg13[%c0_6, %c0_7] : memref<8x32xbf16, #tpu.memory_space<vmem>>, vector<8x32xbf16>
    %c0_8 = arith.constant 0 : index
    %c0_9 = arith.constant 0 : index
    %15 = vector.load %arg14[%c0_8, %c0_9] : memref<8x32xbf16, #tpu.memory_space<vmem>>, vector<8x32xbf16>
    %c0_10 = arith.constant 0 : index
    %c0_11 = arith.constant 0 : index
    %16 = vector.load %arg8[%c0_10, %c0_11] : memref<32x32xbf16, #tpu.memory_space<vmem>>, vector<32x32xbf16>
    %c0_12 = arith.constant 0 : index
    %c0_13 = arith.constant 0 : index
    %17 = vector.load %arg9[%c0_12, %c0_13] : memref<1x32xf32, #tpu.memory_space<vmem>>, vector<1x32xf32>
    %18 = vector.extract_strided_slice %6 {offsets = [0, 0], sizes = [8, 8], strides = [1, 1]} : vector<8x32xbf16> to vector<8x8xbf16>
    %19 = vector.extract_strided_slice %14 {offsets = [0, 0], sizes = [8, 8], strides = [1, 1]} : vector<8x32xbf16> to vector<8x8xbf16>
    %cst_14 = arith.constant dense<0.000000e+00> : vector<8x8xf32>
    %20 = tpu.matmul %18, %19, %cst_14 {dimension_numbers = #tpu.dot_dimension_numbers<[1], [1], [0], [0], [0, 0, 1, 0], [], []>} : vector<8x8xbf16>, vector<8x8xbf16>, vector<8x8xf32> -> vector<8x8xf32>
    %cst_15 = arith.constant -1.000000e+09 : f32
    %21 = vector.broadcast %cst_15 : f32 to vector<8x8xf32>
    %22 = arith.select %10, %21, %20 : vector<8x8xi1>, vector<8x8xf32>
    %cst_16 = arith.constant dense<0xFF800000> : vector<8xf32>
    %23 = vector.multi_reduction <maximumf>, %22, %cst_16 [1] : vector<8x8xf32> to vector<8xf32>
    %24 = vector.shape_cast %23 : vector<8xf32> to vector<8x1xf32>
    %25 = vector.broadcast %24 : vector<8x1xf32> to vector<8x8xf32>
    %26 = arith.subf %22, %25 : vector<8x8xf32>
    %27 = math.exp %26 : vector<8x8xf32>
    %cst_17 = arith.constant dense<0.000000e+00> : vector<8xf32>
    %28 = vector.multi_reduction <add>, %27, %cst_17 [1] : vector<8x8xf32> to vector<8xf32>
    %29 = vector.shape_cast %28 : vector<8xf32> to vector<8x1xf32>
    %30 = vector.broadcast %29 : vector<8x1xf32> to vector<8x8xf32>
    %31 = arith.divf %27, %30 : vector<8x8xf32>
    %c0_18 = arith.constant 0 : index
    %c0_19 = arith.constant 0 : index
    %c0_20 = arith.constant 0 : index
    %c0_21 = arith.constant 0 : index
    %32 = vector.load %arg11[%c0_18, %c0_19, %c0_20, %c0_21] : memref<1x4x8x8xf32, #tpu.memory_space<vmem>>, vector<1x1x8x8xf32>
    %33 = vector.shape_cast %32 : vector<1x1x8x8xf32> to vector<8x8xf32>
    %34 = vector.shape_cast %31 : vector<8x8xf32> to vector<1x1x8x8xf32>
    tpu.vector_store %arg11[%c0_18, %c0_19, %c0_20, %c0_21], %34 {strides = array<i32>} : memref<1x4x8x8xf32, #tpu.memory_space<vmem>>, vector<1x1x8x8xf32>,
    %35 = arith.truncf %31 : vector<8x8xf32> to vector<8x8xbf16>
    %36 = vector.extract_strided_slice %15 {offsets = [0, 0], sizes = [8, 8], strides = [1, 1]} : vector<8x32xbf16> to vector<8x8xbf16>
    %cst_22 = arith.constant dense<0.000000e+00> : vector<8x8xf32>
    %37 = tpu.matmul %35, %36, %cst_22 {dimension_numbers = #tpu.dot_dimension_numbers<[1], [0], [0], [1], [0, 0, 1, 1], [], []>} : vector<8x8xbf16>, vector<8x8xbf16>, vector<8x8xf32> -> vector<8x8xf32>
    %38 = vector.extract_strided_slice %6 {offsets = [0, 8], sizes = [8, 8], strides = [1, 1]} : vector<8x32xbf16> to vector<8x8xbf16>
    %39 = vector.extract_strided_slice %14 {offsets = [0, 8], sizes = [8, 8], strides = [1, 1]} : vector<8x32xbf16> to vector<8x8xbf16>
    %cst_23 = arith.constant dense<0.000000e+00> : vector<8x8xf32>
    %40 = tpu.matmul %38, %39, %cst_23 {dimension_numbers = #tpu.dot_dimension_numbers<[1], [1], [0], [0], [0, 0, 1, 0], [], []>} : vector<8x8xbf16>, vector<8x8xbf16>, vector<8x8xf32> -> vector<8x8xf32>
    %cst_24 = arith.constant -1.000000e+09 : f32
    %41 = vector.broadcast %cst_24 : f32 to vector<8x8xf32>
    %42 = arith.select %10, %41, %40 : vector<8x8xi1>, vector<8x8xf32>
    %cst_25 = arith.constant dense<0xFF800000> : vector<8xf32>
    %43 = vector.multi_reduction <maximumf>, %42, %cst_25 [1] : vector<8x8xf32> to vector<8xf32>
    %44 = vector.shape_cast %43 : vector<8xf32> to vector<8x1xf32>
    %45 = vector.broadcast %44 : vector<8x1xf32> to vector<8x8xf32>
    %46 = arith.subf %42, %45 : vector<8x8xf32>
    %47 = math.exp %46 : vector<8x8xf32>
    %cst_26 = arith.constant dense<0.000000e+00> : vector<8xf32>
    %48 = vector.multi_reduction <add>, %47, %cst_26 [1] : vector<8x8xf32> to vector<8xf32>
    %49 = vector.shape_cast %48 : vector<8xf32> to vector<8x1xf32>
    %50 = vector.broadcast %49 : vector<8x1xf32> to vector<8x8xf32>
    %51 = arith.divf %47, %50 : vector<8x8xf32>
    %c0_27 = arith.constant 0 : index
    %c1 = arith.constant 1 : index
    %c0_28 = arith.constant 0 : index
    %c0_29 = arith.constant 0 : index
    %52 = vector.load %arg11[%c0_27, %c1, %c0_28, %c0_29] : memref<1x4x8x8xf32, #tpu.memory_space<vmem>>, vector<1x1x8x8xf32>
    %53 = vector.shape_cast %52 : vector<1x1x8x8xf32> to vector<8x8xf32>
    %54 = vector.shape_cast %51 : vector<8x8xf32> to vector<1x1x8x8xf32>
    tpu.vector_store %arg11[%c0_27, %c1, %c0_28, %c0_29], %54 {strides = array<i32>} : memref<1x4x8x8xf32, #tpu.memory_space<vmem>>, vector<1x1x8x8xf32>,
    %55 = arith.truncf %51 : vector<8x8xf32> to vector<8x8xbf16>
    %56 = vector.extract_strided_slice %15 {offsets = [0, 8], sizes = [8, 8], strides = [1, 1]} : vector<8x32xbf16> to vector<8x8xbf16>
    %cst_30 = arith.constant dense<0.000000e+00> : vector<8x8xf32>
    %57 = tpu.matmul %55, %56, %cst_30 {dimension_numbers = #tpu.dot_dimension_numbers<[1], [0], [0], [1], [0, 0, 1, 1], [], []>} : vector<8x8xbf16>, vector<8x8xbf16>, vector<8x8xf32> -> vector<8x8xf32>
    %58 = vector.extract_strided_slice %6 {offsets = [0, 16], sizes = [8, 8], strides = [1, 1]} : vector<8x32xbf16> to vector<8x8xbf16>
    %59 = vector.extract_strided_slice %14 {offsets = [0, 16], sizes = [8, 8], strides = [1, 1]} : vector<8x32xbf16> to vector<8x8xbf16>
    %cst_31 = arith.constant dense<0.000000e+00> : vector<8x8xf32>
    %60 = tpu.matmul %58, %59, %cst_31 {dimension_numbers = #tpu.dot_dimension_numbers<[1], [1], [0], [0], [0, 0, 1, 0], [], []>} : vector<8x8xbf16>, vector<8x8xbf16>, vector<8x8xf32> -> vector<8x8xf32>
    %cst_32 = arith.constant -1.000000e+09 : f32
    %61 = vector.broadcast %cst_32 : f32 to vector<8x8xf32>
    %62 = arith.select %10, %61, %60 : vector<8x8xi1>, vector<8x8xf32>
    %cst_33 = arith.constant dense<0xFF800000> : vector<8xf32>
    %63 = vector.multi_reduction <maximumf>, %62, %cst_33 [1] : vector<8x8xf32> to vector<8xf32>
    %64 = vector.shape_cast %63 : vector<8xf32> to vector<8x1xf32>
    %65 = vector.broadcast %64 : vector<8x1xf32> to vector<8x8xf32>
    %66 = arith.subf %62, %65 : vector<8x8xf32>
    %67 = math.exp %66 : vector<8x8xf32>
    %cst_34 = arith.constant dense<0.000000e+00> : vector<8xf32>
    %68 = vector.multi_reduction <add>, %67, %cst_34 [1] : vector<8x8xf32> to vector<8xf32>
    %69 = vector.shape_cast %68 : vector<8xf32> to vector<8x1xf32>
    %70 = vector.broadcast %69 : vector<8x1xf32> to vector<8x8xf32>
    %71 = arith.divf %67, %70 : vector<8x8xf32>
    %c0_35 = arith.constant 0 : index
    %c2 = arith.constant 2 : index
    %c0_36 = arith.constant 0 : index
    %c0_37 = arith.constant 0 : index
    %72 = vector.load %arg11[%c0_35, %c2, %c0_36, %c0_37] : memref<1x4x8x8xf32, #tpu.memory_space<vmem>>, vector<1x1x8x8xf32>
    %73 = vector.shape_cast %72 : vector<1x1x8x8xf32> to vector<8x8xf32>
    %74 = vector.shape_cast %71 : vector<8x8xf32> to vector<1x1x8x8xf32>
    tpu.vector_store %arg11[%c0_35, %c2, %c0_36, %c0_37], %74 {strides = array<i32>} : memref<1x4x8x8xf32, #tpu.memory_space<vmem>>, vector<1x1x8x8xf32>,
    %75 = arith.truncf %71 : vector<8x8xf32> to vector<8x8xbf16>
    %76 = vector.extract_strided_slice %15 {offsets = [0, 16], sizes = [8, 8], strides = [1, 1]} : vector<8x32xbf16> to vector<8x8xbf16>
    %cst_38 = arith.constant dense<0.000000e+00> : vector<8x8xf32>
    %77 = tpu.matmul %75, %76, %cst_38 {dimension_numbers = #tpu.dot_dimension_numbers<[1], [0], [0], [1], [0, 0, 1, 1], [], []>} : vector<8x8xbf16>, vector<8x8xbf16>, vector<8x8xf32> -> vector<8x8xf32>
    %78 = vector.extract_strided_slice %6 {offsets = [0, 24], sizes = [8, 8], strides = [1, 1]} : vector<8x32xbf16> to vector<8x8xbf16>
    %79 = vector.extract_strided_slice %14 {offsets = [0, 24], sizes = [8, 8], strides = [1, 1]} : vector<8x32xbf16> to vector<8x8xbf16>
    %cst_39 = arith.constant dense<0.000000e+00> : vector<8x8xf32>
    %80 = tpu.matmul %78, %79, %cst_39 {dimension_numbers = #tpu.dot_dimension_numbers<[1], [1], [0], [0], [0, 0, 1, 0], [], []>} : vector<8x8xbf16>, vector<8x8xbf16>, vector<8x8xf32> -> vector<8x8xf32>
    %cst_40 = arith.constant -1.000000e+09 : f32
    %81 = vector.broadcast %cst_40 : f32 to vector<8x8xf32>
    %82 = arith.select %10, %81, %80 : vector<8x8xi1>, vector<8x8xf32>
    %cst_41 = arith.constant dense<0xFF800000> : vector<8xf32>
    %83 = vector.multi_reduction <maximumf>, %82, %cst_41 [1] : vector<8x8xf32> to vector<8xf32>
    %84 = vector.shape_cast %83 : vector<8xf32> to vector<8x1xf32>
    %85 = vector.broadcast %84 : vector<8x1xf32> to vector<8x8xf32>
    %86 = arith.subf %82, %85 : vector<8x8xf32>
    %87 = math.exp %86 : vector<8x8xf32>
    %cst_42 = arith.constant dense<0.000000e+00> : vector<8xf32>
    %88 = vector.multi_reduction <add>, %87, %cst_42 [1] : vector<8x8xf32> to vector<8xf32>
    %89 = vector.shape_cast %88 : vector<8xf32> to vector<8x1xf32>
    %90 = vector.broadcast %89 : vector<8x1xf32> to vector<8x8xf32>
    %91 = arith.divf %87, %90 : vector<8x8xf32>
    %c0_43 = arith.constant 0 : index
    %c3 = arith.constant 3 : index
    %c0_44 = arith.constant 0 : index
    %c0_45 = arith.constant 0 : index
    %92 = vector.load %arg11[%c0_43, %c3, %c0_44, %c0_45] : memref<1x4x8x8xf32, #tpu.memory_space<vmem>>, vector<1x1x8x8xf32>
    %93 = vector.shape_cast %92 : vector<1x1x8x8xf32> to vector<8x8xf32>
    %94 = vector.shape_cast %91 : vector<8x8xf32> to vector<1x1x8x8xf32>
    tpu.vector_store %arg11[%c0_43, %c3, %c0_44, %c0_45], %94 {strides = array<i32>} : memref<1x4x8x8xf32, #tpu.memory_space<vmem>>, vector<1x1x8x8xf32>,
    %95 = arith.truncf %91 : vector<8x8xf32> to vector<8x8xbf16>
    %96 = vector.extract_strided_slice %15 {offsets = [0, 24], sizes = [8, 8], strides = [1, 1]} : vector<8x32xbf16> to vector<8x8xbf16>
    %cst_46 = arith.constant dense<0.000000e+00> : vector<8x8xf32>
    %97 = tpu.matmul %95, %96, %cst_46 {dimension_numbers = #tpu.dot_dimension_numbers<[1], [0], [0], [1], [0, 0, 1, 1], [], []>} : vector<8x8xbf16>, vector<8x8xbf16>, vector<8x8xf32> -> vector<8x8xf32>
    %98 = tpu.concatenate %37, %57, %77, %97 in 1 : vector<8x8xf32>, vector<8x8xf32>, vector<8x8xf32>, vector<8x8xf32> -> vector<8x32xf32>
    %99 = arith.truncf %98 : vector<8x32xf32> to vector<8x32xbf16>
    %100 = vector.broadcast %17 : vector<1x32xf32> to vector<8x32xf32>
    %101 = arith.addf %13, %100 : vector<8x32xf32>
    %cst_47 = arith.constant dense<0.000000e+00> : vector<8x32xf32>
    %102 = tpu.matmul %99, %16, %cst_47 {dimension_numbers = #tpu.dot_dimension_numbers<[1], [0], [0], [1], [0, 0, 1, 1], [], []>} : vector<8x32xbf16>, vector<32x32xbf16>, vector<8x32xf32> -> vector<8x32xf32>
    %103 = arith.addf %101, %102 : vector<8x32xf32>
    %c0_48 = arith.constant 0 : index
    %c0_49 = arith.constant 0 : index
    %c0_50 = arith.constant 0 : index
    %104 = vector.load %arg10[%c0_48, %c0_49, %c0_50] : memref<1x8x32xf32, #tpu.memory_space<vmem>>, vector<1x8x32xf32>
    %105 = vector.shape_cast %104 : vector<1x8x32xf32> to vector<8x32xf32>
    %106 = vector.shape_cast %103 : vector<8x32xf32> to vector<1x8x32xf32>
    tpu.vector_store %arg10[%c0_48, %c0_49, %c0_50], %106 {strides = array<i32>} : memref<1x8x32xf32, #tpu.memory_space<vmem>>, vector<1x8x32xf32>,
    return
  }
  func.func @transform_0(%arg0: i32, %arg1: i32) -> (i32, i32, i32) {
    %c0_i32 = arith.constant 0 : i32
    %c0_i32_0 = arith.constant 0 : i32
    %c0_i32_1 = arith.constant 0 : i32
    return %arg0, %c0_i32, %c0_i32_0 : i32, i32, i32
  }
  func.func @transform_1(%arg0: i32, %arg1: i32) -> (i32, i32, i32) {
    %c0_i32 = arith.constant 0 : i32
    %c0_i32_0 = arith.constant 0 : i32
    return %arg0, %arg1, %c0_i32 : i32, i32, i32
  }
  func.func @transform_2(%arg0: i32, %arg1: i32) -> (i32, i32) {
    %c0_i32 = arith.constant 0 : i32
    %c0_i32_0 = arith.constant 0 : i32
    %c0_i32_1 = arith.constant 0 : i32
    return %c0_i32, %c0_i32_0 : i32, i32
  }
  func.func @transform_3(%arg0: i32, %arg1: i32) -> (i32, i32) {
    %c0_i32 = arith.constant 0 : i32
    %c0_i32_0 = arith.constant 0 : i32
    %c0_i32_1 = arith.constant 0 : i32
    return %c0_i32, %c0_i32_0 : i32, i32
  }
  func.func @transform_4(%arg0: i32, %arg1: i32) -> (i32, i32) {
    %c0_i32 = arith.constant 0 : i32
    %c0_i32_0 = arith.constant 0 : i32
    %c0_i32_1 = arith.constant 0 : i32
    return %c0_i32, %c0_i32_0 : i32, i32
  }
  func.func @transform_5(%arg0: i32, %arg1: i32) -> (i32, i32) {
    %c0_i32 = arith.constant 0 : i32
    %c0_i32_0 = arith.constant 0 : i32
    %c0_i32_1 = arith.constant 0 : i32
    return %c0_i32, %c0_i32_0 : i32, i32
  }
  func.func @transform_6(%arg0: i32, %arg1: i32) -> (i32, i32) {
    %c0_i32 = arith.constant 0 : i32
    %c0_i32_0 = arith.constant 0 : i32
    %c0_i32_1 = arith.constant 0 : i32
    return %c0_i32, %c0_i32_0 : i32, i32
  }
  func.func @transform_7(%arg0: i32, %arg1: i32) -> (i32, i32) {
    %c0_i32 = arith.constant 0 : i32
    %c0_i32_0 = arith.constant 0 : i32
    %c0_i32_1 = arith.constant 0 : i32
    return %c0_i32, %c0_i32_0 : i32, i32
  }
  func.func @transform_8(%arg0: i32, %arg1: i32) -> (i32, i32, i32) {
    %c0_i32 = arith.constant 0 : i32
    %c0_i32_0 = arith.constant 0 : i32
    return %arg0, %arg1, %c0_i32 : i32, i32, i32
  }
  func.func @transform_9(%arg0: i32, %arg1: i32) -> (i32, i32, i32, i32) {
    %c0_i32 = arith.constant 0 : i32
    %c0_i32_0 = arith.constant 0 : i32
    %c0_i32_1 = arith.constant 0 : i32
    return %arg0, %c0_i32, %arg1, %c0_i32_0 : i32, i32, i32, i32
  }
}

module attributes {stable_mosaic.version = 11 : i64} {
  func.func @_cross_attn_kernel(%arg0: i32, %arg1: i32, %arg2: memref<1x8x32xf32, #tpu.memory_space<vmem>>, %arg3: memref<1x8x32xf32, #tpu.memory_space<vmem>>, %arg4: memref<1x1x8xf32, #tpu.memory_space<vmem>>, %arg5: memref<1x32xf32, #tpu.memory_space<vmem>>, %arg6: memref<1x32xf32, #tpu.memory_space<vmem>>, %arg7: memref<32x32xbf16, #tpu.memory_space<vmem>>, %arg8: memref<1x32xf32, #tpu.memory_space<vmem>>, %arg9: memref<32x64xbf16, #tpu.memory_space<vmem>>, %arg10: memref<1x64xf32, #tpu.memory_space<vmem>>, %arg11: memref<32x32xbf16, #tpu.memory_space<vmem>>, %arg12: memref<1x32xf32, #tpu.memory_space<vmem>>, %arg13: memref<1x8x32xf32, #tpu.memory_space<vmem>>, %arg14: memref<1x4x8x8xf32, #tpu.memory_space<vmem>>, %arg15: memref<8x32xbf16, #tpu.memory_space<vmem>>, %arg16: memref<8x32xbf16, #tpu.memory_space<vmem>>) attributes {dimension_semantics = [#tpu.dimension_semantics<parallel>, #tpu.dimension_semantics<arbitrary>], iteration_bounds = array<i64: 2, 1>, scalar_prefetch = 0 : i64, scratch_operands = 2 : i64, tpu.core_type = #tpu.core_type<tc>, window_params = [{transform_indices = @transform_0, window_bounds = array<i64: 1, 8, 32>}, {transform_indices = @transform_1, window_bounds = array<i64: 1, 8, 32>}, {transform_indices = @transform_2, window_bounds = array<i64: 1, 1, 8>}, {pipeline_mode = #tpu.pipeline_mode<synchronous>, transform_indices = @transform_3, window_bounds = array<i64: 1, 32>}, {pipeline_mode = #tpu.pipeline_mode<synchronous>, transform_indices = @transform_4, window_bounds = array<i64: 1, 32>}, {pipeline_mode = #tpu.pipeline_mode<synchronous>, transform_indices = @transform_5, window_bounds = array<i64: 32, 32>}, {pipeline_mode = #tpu.pipeline_mode<synchronous>, transform_indices = @transform_6, window_bounds = array<i64: 1, 32>}, {pipeline_mode = #tpu.pipeline_mode<synchronous>, transform_indices = @transform_7, window_bounds = array<i64: 32, 64>}, {pipeline_mode = #tpu.pipeline_mode<synchronous>, transform_indices = @transform_8, window_bounds = array<i64: 1, 64>}, {pipeline_mode = #tpu.pipeline_mode<synchronous>, transform_indices = @transform_9, window_bounds = array<i64: 32, 32>}, {pipeline_mode = #tpu.pipeline_mode<synchronous>, transform_indices = @transform_10, window_bounds = array<i64: 1, 32>}, {transform_indices = @transform_11, window_bounds = array<i64: 1, 8, 32>}, {transform_indices = @transform_12, window_bounds = array<i64: 1, 4, 8, 8>}]} {
    %c0_i32 = arith.constant 0 : i32
    %0 = arith.cmpi eq, %arg1, %c0_i32 : i32
    %1 = arith.extui %0 : i1 to i32
    %c0_i32_0 = arith.constant 0 : i32
    %2 = arith.cmpi ne, %1, %c0_i32_0 : i32
    scf.if %2 {
      %c0_66 = arith.constant 0 : index
      %c0_67 = arith.constant 0 : index
      %c0_68 = arith.constant 0 : index
      %143 = vector.load %arg3[%c0_66, %c0_67, %c0_68] : memref<1x8x32xf32, #tpu.memory_space<vmem>>, vector<1x8x32xf32>
      %144 = vector.shape_cast %143 : vector<1x8x32xf32> to vector<8x32xf32>
      %145 = arith.truncf %144 : vector<8x32xf32> to vector<8x32xbf16>
      %c0_69 = arith.constant 0 : index
      %c0_70 = arith.constant 0 : index
      %146 = vector.load %arg9[%c0_69, %c0_70] : memref<32x64xbf16, #tpu.memory_space<vmem>>, vector<32x64xbf16>
      %cst_71 = arith.constant dense<0.000000e+00> : vector<8x64xf32>
      %147 = tpu.matmul %145, %146, %cst_71 {dimension_numbers = #tpu.dot_dimension_numbers<[1], [0], [0], [1], [0, 0, 1, 1], [], []>} : vector<8x32xbf16>, vector<32x64xbf16>, vector<8x64xf32> -> vector<8x64xf32>
      %c0_72 = arith.constant 0 : index
      %c0_73 = arith.constant 0 : index
      %148 = vector.load %arg10[%c0_72, %c0_73] : memref<1x64xf32, #tpu.memory_space<vmem>>, vector<1x64xf32>
      %149 = vector.broadcast %148 : vector<1x64xf32> to vector<8x64xf32>
      %150 = arith.addf %147, %149 : vector<8x64xf32>
      %151 = vector.extract_strided_slice %150 {offsets = [0, 0], sizes = [8, 32], strides = [1, 1]} : vector<8x64xf32> to vector<8x32xf32>
      %152 = arith.truncf %151 : vector<8x32xf32> to vector<8x32xbf16>
      %c0_74 = arith.constant 0 : index
      %c0_75 = arith.constant 0 : index
      %153 = vector.load %arg15[%c0_74, %c0_75] : memref<8x32xbf16, #tpu.memory_space<vmem>>, vector<8x32xbf16>
      tpu.vector_store %arg15[%c0_74, %c0_75], %152 {strides = array<i32>} : memref<8x32xbf16, #tpu.memory_space<vmem>>, vector<8x32xbf16>,
      %154 = vector.extract_strided_slice %150 {offsets = [0, 32], sizes = [8, 32], strides = [1, 1]} : vector<8x64xf32> to vector<8x32xf32>
      %155 = arith.truncf %154 : vector<8x32xf32> to vector<8x32xbf16>
      %c0_76 = arith.constant 0 : index
      %c0_77 = arith.constant 0 : index
      %156 = vector.load %arg16[%c0_76, %c0_77] : memref<8x32xbf16, #tpu.memory_space<vmem>>, vector<8x32xbf16>
      tpu.vector_store %arg16[%c0_76, %c0_77], %155 {strides = array<i32>} : memref<8x32xbf16, #tpu.memory_space<vmem>>, vector<8x32xbf16>,
    } else {
    }
    %c0 = arith.constant 0 : index
    %c0_1 = arith.constant 0 : index
    %c0_2 = arith.constant 0 : index
    %3 = vector.load %arg2[%c0, %c0_1, %c0_2] : memref<1x8x32xf32, #tpu.memory_space<vmem>>, vector<1x8x32xf32>
    %4 = vector.shape_cast %3 : vector<1x8x32xf32> to vector<8x32xf32>
    %c0_3 = arith.constant 0 : index
    %c0_4 = arith.constant 0 : index
    %5 = vector.load %arg5[%c0_3, %c0_4] : memref<1x32xf32, #tpu.memory_space<vmem>>, vector<1x32xf32>
    %c0_5 = arith.constant 0 : index
    %c0_6 = arith.constant 0 : index
    %6 = vector.load %arg6[%c0_5, %c0_6] : memref<1x32xf32, #tpu.memory_space<vmem>>, vector<1x32xf32>
    %cst = arith.constant dense<0.000000e+00> : vector<8xf32>
    %7 = vector.multi_reduction <add>, %4, %cst [1] : vector<8x32xf32> to vector<8xf32>
    %8 = vector.shape_cast %7 : vector<8xf32> to vector<8x1xf32>
    %cst_7 = arith.constant 3.200000e+01 : f32
    %9 = vector.broadcast %cst_7 : f32 to vector<8x1xf32>
    %10 = arith.divf %8, %9 : vector<8x1xf32>
    %11 = vector.broadcast %10 : vector<8x1xf32> to vector<8x32xf32>
    %12 = arith.subf %4, %11 : vector<8x32xf32>
    %13 = arith.mulf %12, %12 : vector<8x32xf32>
    %cst_8 = arith.constant dense<0.000000e+00> : vector<8xf32>
    %14 = vector.multi_reduction <add>, %13, %cst_8 [1] : vector<8x32xf32> to vector<8xf32>
    %15 = vector.shape_cast %14 : vector<8xf32> to vector<8x1xf32>
    %cst_9 = arith.constant 3.200000e+01 : f32
    %16 = vector.broadcast %cst_9 : f32 to vector<8x1xf32>
    %17 = arith.divf %15, %16 : vector<8x1xf32>
    %18 = vector.broadcast %10 : vector<8x1xf32> to vector<8x32xf32>
    %19 = arith.subf %4, %18 : vector<8x32xf32>
    %cst_10 = arith.constant 9.99999974E-6 : f32
    %20 = vector.broadcast %cst_10 : f32 to vector<8x1xf32>
    %21 = arith.addf %17, %20 : vector<8x1xf32>
    %22 = math.rsqrt %21 : vector<8x1xf32>
    %23 = vector.broadcast %22 : vector<8x1xf32> to vector<8x32xf32>
    %24 = arith.mulf %19, %23 : vector<8x32xf32>
    %25 = vector.broadcast %5 : vector<1x32xf32> to vector<8x32xf32>
    %26 = arith.mulf %24, %25 : vector<8x32xf32>
    %27 = vector.broadcast %6 : vector<1x32xf32> to vector<8x32xf32>
    %28 = arith.addf %26, %27 : vector<8x32xf32>
    %29 = arith.truncf %28 : vector<8x32xf32> to vector<8x32xbf16>
    %c0_11 = arith.constant 0 : index
    %c0_12 = arith.constant 0 : index
    %30 = vector.load %arg7[%c0_11, %c0_12] : memref<32x32xbf16, #tpu.memory_space<vmem>>, vector<32x32xbf16>
    %cst_13 = arith.constant dense<0.000000e+00> : vector<8x32xf32>
    %31 = tpu.matmul %29, %30, %cst_13 {dimension_numbers = #tpu.dot_dimension_numbers<[1], [0], [0], [1], [0, 0, 1, 1], [], []>} : vector<8x32xbf16>, vector<32x32xbf16>, vector<8x32xf32> -> vector<8x32xf32>
    %c0_14 = arith.constant 0 : index
    %c0_15 = arith.constant 0 : index
    %32 = vector.load %arg8[%c0_14, %c0_15] : memref<1x32xf32, #tpu.memory_space<vmem>>, vector<1x32xf32>
    %33 = vector.broadcast %32 : vector<1x32xf32> to vector<8x32xf32>
    %34 = arith.addf %31, %33 : vector<8x32xf32>
    %cst_16 = arith.constant 0.353553385 : f32
    %35 = vector.broadcast %cst_16 : f32 to vector<8x32xf32>
    %36 = arith.mulf %34, %35 : vector<8x32xf32>
    %37 = arith.truncf %36 : vector<8x32xf32> to vector<8x32xbf16>
    %c0_17 = arith.constant 0 : index
    %c0_18 = arith.constant 0 : index
    %c0_19 = arith.constant 0 : index
    %38 = vector.load %arg4[%c0_17, %c0_18, %c0_19] : memref<1x1x8xf32, #tpu.memory_space<vmem>>, vector<1x1x8xf32>
    %39 = vector.shape_cast %38 : vector<1x1x8xf32> to vector<1x8xf32>
    %cst_20 = arith.constant 0.000000e+00 : f32
    %40 = vector.broadcast %cst_20 : f32 to vector<1x8xf32>
    %41 = arith.cmpf oeq, %39, %40 : vector<1x8xf32>
    %c0_21 = arith.constant 0 : index
    %c0_22 = arith.constant 0 : index
    %42 = vector.load %arg15[%c0_21, %c0_22] : memref<8x32xbf16, #tpu.memory_space<vmem>>, vector<8x32xbf16>
    %c0_23 = arith.constant 0 : index
    %c0_24 = arith.constant 0 : index
    %43 = vector.load %arg16[%c0_23, %c0_24] : memref<8x32xbf16, #tpu.memory_space<vmem>>, vector<8x32xbf16>
    %c0_25 = arith.constant 0 : index
    %c0_26 = arith.constant 0 : index
    %44 = vector.load %arg11[%c0_25, %c0_26] : memref<32x32xbf16, #tpu.memory_space<vmem>>, vector<32x32xbf16>
    %c0_27 = arith.constant 0 : index
    %c0_28 = arith.constant 0 : index
    %45 = vector.load %arg12[%c0_27, %c0_28] : memref<1x32xf32, #tpu.memory_space<vmem>>, vector<1x32xf32>
    %46 = vector.extract_strided_slice %37 {offsets = [0, 0], sizes = [8, 8], strides = [1, 1]} : vector<8x32xbf16> to vector<8x8xbf16>
    %47 = vector.extract_strided_slice %42 {offsets = [0, 0], sizes = [8, 8], strides = [1, 1]} : vector<8x32xbf16> to vector<8x8xbf16>
    %cst_29 = arith.constant dense<0.000000e+00> : vector<8x8xf32>
    %48 = tpu.matmul %46, %47, %cst_29 {dimension_numbers = #tpu.dot_dimension_numbers<[1], [1], [0], [0], [0, 0, 1, 0], [], []>} : vector<8x8xbf16>, vector<8x8xbf16>, vector<8x8xf32> -> vector<8x8xf32>
    %cst_30 = arith.constant -1.000000e+09 : f32
    %49 = vector.shape_cast %41 : vector<1x8xi1> to vector<1x8xi1>
    %50 = vector.broadcast %49 : vector<1x8xi1> to vector<8x8xi1>
    %51 = vector.broadcast %cst_30 : f32 to vector<8x8xf32>
    %52 = arith.select %50, %51, %48 : vector<8x8xi1>, vector<8x8xf32>
    %cst_31 = arith.constant dense<0xFF800000> : vector<8xf32>
    %53 = vector.multi_reduction <maximumf>, %52, %cst_31 [1] : vector<8x8xf32> to vector<8xf32>
    %54 = vector.shape_cast %53 : vector<8xf32> to vector<8x1xf32>
    %55 = vector.broadcast %54 : vector<8x1xf32> to vector<8x8xf32>
    %56 = arith.subf %52, %55 : vector<8x8xf32>
    %57 = math.exp %56 : vector<8x8xf32>
    %cst_32 = arith.constant dense<0.000000e+00> : vector<8xf32>
    %58 = vector.multi_reduction <add>, %57, %cst_32 [1] : vector<8x8xf32> to vector<8xf32>
    %59 = vector.shape_cast %58 : vector<8xf32> to vector<8x1xf32>
    %60 = vector.broadcast %59 : vector<8x1xf32> to vector<8x8xf32>
    %61 = arith.divf %57, %60 : vector<8x8xf32>
    %c0_33 = arith.constant 0 : index
    %c0_34 = arith.constant 0 : index
    %c0_35 = arith.constant 0 : index
    %c0_36 = arith.constant 0 : index
    %62 = vector.load %arg14[%c0_33, %c0_34, %c0_35, %c0_36] : memref<1x4x8x8xf32, #tpu.memory_space<vmem>>, vector<1x1x8x8xf32>
    %63 = vector.shape_cast %62 : vector<1x1x8x8xf32> to vector<8x8xf32>
    %64 = vector.shape_cast %61 : vector<8x8xf32> to vector<1x1x8x8xf32>
    tpu.vector_store %arg14[%c0_33, %c0_34, %c0_35, %c0_36], %64 {strides = array<i32>} : memref<1x4x8x8xf32, #tpu.memory_space<vmem>>, vector<1x1x8x8xf32>,
    %65 = arith.truncf %61 : vector<8x8xf32> to vector<8x8xbf16>
    %66 = vector.extract_strided_slice %43 {offsets = [0, 0], sizes = [8, 8], strides = [1, 1]} : vector<8x32xbf16> to vector<8x8xbf16>
    %cst_37 = arith.constant dense<0.000000e+00> : vector<8x8xf32>
    %67 = tpu.matmul %65, %66, %cst_37 {dimension_numbers = #tpu.dot_dimension_numbers<[1], [0], [0], [1], [0, 0, 1, 1], [], []>} : vector<8x8xbf16>, vector<8x8xbf16>, vector<8x8xf32> -> vector<8x8xf32>
    %68 = vector.extract_strided_slice %37 {offsets = [0, 8], sizes = [8, 8], strides = [1, 1]} : vector<8x32xbf16> to vector<8x8xbf16>
    %69 = vector.extract_strided_slice %42 {offsets = [0, 8], sizes = [8, 8], strides = [1, 1]} : vector<8x32xbf16> to vector<8x8xbf16>
    %cst_38 = arith.constant dense<0.000000e+00> : vector<8x8xf32>
    %70 = tpu.matmul %68, %69, %cst_38 {dimension_numbers = #tpu.dot_dimension_numbers<[1], [1], [0], [0], [0, 0, 1, 0], [], []>} : vector<8x8xbf16>, vector<8x8xbf16>, vector<8x8xf32> -> vector<8x8xf32>
    %cst_39 = arith.constant -1.000000e+09 : f32
    %71 = vector.shape_cast %41 : vector<1x8xi1> to vector<1x8xi1>
    %72 = vector.broadcast %71 : vector<1x8xi1> to vector<8x8xi1>
    %73 = vector.broadcast %cst_39 : f32 to vector<8x8xf32>
    %74 = arith.select %72, %73, %70 : vector<8x8xi1>, vector<8x8xf32>
    %cst_40 = arith.constant dense<0xFF800000> : vector<8xf32>
    %75 = vector.multi_reduction <maximumf>, %74, %cst_40 [1] : vector<8x8xf32> to vector<8xf32>
    %76 = vector.shape_cast %75 : vector<8xf32> to vector<8x1xf32>
    %77 = vector.broadcast %76 : vector<8x1xf32> to vector<8x8xf32>
    %78 = arith.subf %74, %77 : vector<8x8xf32>
    %79 = math.exp %78 : vector<8x8xf32>
    %cst_41 = arith.constant dense<0.000000e+00> : vector<8xf32>
    %80 = vector.multi_reduction <add>, %79, %cst_41 [1] : vector<8x8xf32> to vector<8xf32>
    %81 = vector.shape_cast %80 : vector<8xf32> to vector<8x1xf32>
    %82 = vector.broadcast %81 : vector<8x1xf32> to vector<8x8xf32>
    %83 = arith.divf %79, %82 : vector<8x8xf32>
    %c0_42 = arith.constant 0 : index
    %c1 = arith.constant 1 : index
    %c0_43 = arith.constant 0 : index
    %c0_44 = arith.constant 0 : index
    %84 = vector.load %arg14[%c0_42, %c1, %c0_43, %c0_44] : memref<1x4x8x8xf32, #tpu.memory_space<vmem>>, vector<1x1x8x8xf32>
    %85 = vector.shape_cast %84 : vector<1x1x8x8xf32> to vector<8x8xf32>
    %86 = vector.shape_cast %83 : vector<8x8xf32> to vector<1x1x8x8xf32>
    tpu.vector_store %arg14[%c0_42, %c1, %c0_43, %c0_44], %86 {strides = array<i32>} : memref<1x4x8x8xf32, #tpu.memory_space<vmem>>, vector<1x1x8x8xf32>,
    %87 = arith.truncf %83 : vector<8x8xf32> to vector<8x8xbf16>
    %88 = vector.extract_strided_slice %43 {offsets = [0, 8], sizes = [8, 8], strides = [1, 1]} : vector<8x32xbf16> to vector<8x8xbf16>
    %cst_45 = arith.constant dense<0.000000e+00> : vector<8x8xf32>
    %89 = tpu.matmul %87, %88, %cst_45 {dimension_numbers = #tpu.dot_dimension_numbers<[1], [0], [0], [1], [0, 0, 1, 1], [], []>} : vector<8x8xbf16>, vector<8x8xbf16>, vector<8x8xf32> -> vector<8x8xf32>
    %90 = vector.extract_strided_slice %37 {offsets = [0, 16], sizes = [8, 8], strides = [1, 1]} : vector<8x32xbf16> to vector<8x8xbf16>
    %91 = vector.extract_strided_slice %42 {offsets = [0, 16], sizes = [8, 8], strides = [1, 1]} : vector<8x32xbf16> to vector<8x8xbf16>
    %cst_46 = arith.constant dense<0.000000e+00> : vector<8x8xf32>
    %92 = tpu.matmul %90, %91, %cst_46 {dimension_numbers = #tpu.dot_dimension_numbers<[1], [1], [0], [0], [0, 0, 1, 0], [], []>} : vector<8x8xbf16>, vector<8x8xbf16>, vector<8x8xf32> -> vector<8x8xf32>
    %cst_47 = arith.constant -1.000000e+09 : f32
    %93 = vector.shape_cast %41 : vector<1x8xi1> to vector<1x8xi1>
    %94 = vector.broadcast %93 : vector<1x8xi1> to vector<8x8xi1>
    %95 = vector.broadcast %cst_47 : f32 to vector<8x8xf32>
    %96 = arith.select %94, %95, %92 : vector<8x8xi1>, vector<8x8xf32>
    %cst_48 = arith.constant dense<0xFF800000> : vector<8xf32>
    %97 = vector.multi_reduction <maximumf>, %96, %cst_48 [1] : vector<8x8xf32> to vector<8xf32>
    %98 = vector.shape_cast %97 : vector<8xf32> to vector<8x1xf32>
    %99 = vector.broadcast %98 : vector<8x1xf32> to vector<8x8xf32>
    %100 = arith.subf %96, %99 : vector<8x8xf32>
    %101 = math.exp %100 : vector<8x8xf32>
    %cst_49 = arith.constant dense<0.000000e+00> : vector<8xf32>
    %102 = vector.multi_reduction <add>, %101, %cst_49 [1] : vector<8x8xf32> to vector<8xf32>
    %103 = vector.shape_cast %102 : vector<8xf32> to vector<8x1xf32>
    %104 = vector.broadcast %103 : vector<8x1xf32> to vector<8x8xf32>
    %105 = arith.divf %101, %104 : vector<8x8xf32>
    %c0_50 = arith.constant 0 : index
    %c2 = arith.constant 2 : index
    %c0_51 = arith.constant 0 : index
    %c0_52 = arith.constant 0 : index
    %106 = vector.load %arg14[%c0_50, %c2, %c0_51, %c0_52] : memref<1x4x8x8xf32, #tpu.memory_space<vmem>>, vector<1x1x8x8xf32>
    %107 = vector.shape_cast %106 : vector<1x1x8x8xf32> to vector<8x8xf32>
    %108 = vector.shape_cast %105 : vector<8x8xf32> to vector<1x1x8x8xf32>
    tpu.vector_store %arg14[%c0_50, %c2, %c0_51, %c0_52], %108 {strides = array<i32>} : memref<1x4x8x8xf32, #tpu.memory_space<vmem>>, vector<1x1x8x8xf32>,
    %109 = arith.truncf %105 : vector<8x8xf32> to vector<8x8xbf16>
    %110 = vector.extract_strided_slice %43 {offsets = [0, 16], sizes = [8, 8], strides = [1, 1]} : vector<8x32xbf16> to vector<8x8xbf16>
    %cst_53 = arith.constant dense<0.000000e+00> : vector<8x8xf32>
    %111 = tpu.matmul %109, %110, %cst_53 {dimension_numbers = #tpu.dot_dimension_numbers<[1], [0], [0], [1], [0, 0, 1, 1], [], []>} : vector<8x8xbf16>, vector<8x8xbf16>, vector<8x8xf32> -> vector<8x8xf32>
    %112 = vector.extract_strided_slice %37 {offsets = [0, 24], sizes = [8, 8], strides = [1, 1]} : vector<8x32xbf16> to vector<8x8xbf16>
    %113 = vector.extract_strided_slice %42 {offsets = [0, 24], sizes = [8, 8], strides = [1, 1]} : vector<8x32xbf16> to vector<8x8xbf16>
    %cst_54 = arith.constant dense<0.000000e+00> : vector<8x8xf32>
    %114 = tpu.matmul %112, %113, %cst_54 {dimension_numbers = #tpu.dot_dimension_numbers<[1], [1], [0], [0], [0, 0, 1, 0], [], []>} : vector<8x8xbf16>, vector<8x8xbf16>, vector<8x8xf32> -> vector<8x8xf32>
    %cst_55 = arith.constant -1.000000e+09 : f32
    %115 = vector.shape_cast %41 : vector<1x8xi1> to vector<1x8xi1>
    %116 = vector.broadcast %115 : vector<1x8xi1> to vector<8x8xi1>
    %117 = vector.broadcast %cst_55 : f32 to vector<8x8xf32>
    %118 = arith.select %116, %117, %114 : vector<8x8xi1>, vector<8x8xf32>
    %cst_56 = arith.constant dense<0xFF800000> : vector<8xf32>
    %119 = vector.multi_reduction <maximumf>, %118, %cst_56 [1] : vector<8x8xf32> to vector<8xf32>
    %120 = vector.shape_cast %119 : vector<8xf32> to vector<8x1xf32>
    %121 = vector.broadcast %120 : vector<8x1xf32> to vector<8x8xf32>
    %122 = arith.subf %118, %121 : vector<8x8xf32>
    %123 = math.exp %122 : vector<8x8xf32>
    %cst_57 = arith.constant dense<0.000000e+00> : vector<8xf32>
    %124 = vector.multi_reduction <add>, %123, %cst_57 [1] : vector<8x8xf32> to vector<8xf32>
    %125 = vector.shape_cast %124 : vector<8xf32> to vector<8x1xf32>
    %126 = vector.broadcast %125 : vector<8x1xf32> to vector<8x8xf32>
    %127 = arith.divf %123, %126 : vector<8x8xf32>
    %c0_58 = arith.constant 0 : index
    %c3 = arith.constant 3 : index
    %c0_59 = arith.constant 0 : index
    %c0_60 = arith.constant 0 : index
    %128 = vector.load %arg14[%c0_58, %c3, %c0_59, %c0_60] : memref<1x4x8x8xf32, #tpu.memory_space<vmem>>, vector<1x1x8x8xf32>
    %129 = vector.shape_cast %128 : vector<1x1x8x8xf32> to vector<8x8xf32>
    %130 = vector.shape_cast %127 : vector<8x8xf32> to vector<1x1x8x8xf32>
    tpu.vector_store %arg14[%c0_58, %c3, %c0_59, %c0_60], %130 {strides = array<i32>} : memref<1x4x8x8xf32, #tpu.memory_space<vmem>>, vector<1x1x8x8xf32>,
    %131 = arith.truncf %127 : vector<8x8xf32> to vector<8x8xbf16>
    %132 = vector.extract_strided_slice %43 {offsets = [0, 24], sizes = [8, 8], strides = [1, 1]} : vector<8x32xbf16> to vector<8x8xbf16>
    %cst_61 = arith.constant dense<0.000000e+00> : vector<8x8xf32>
    %133 = tpu.matmul %131, %132, %cst_61 {dimension_numbers = #tpu.dot_dimension_numbers<[1], [0], [0], [1], [0, 0, 1, 1], [], []>} : vector<8x8xbf16>, vector<8x8xbf16>, vector<8x8xf32> -> vector<8x8xf32>
    %134 = tpu.concatenate %67, %89, %111, %133 in 1 : vector<8x8xf32>, vector<8x8xf32>, vector<8x8xf32>, vector<8x8xf32> -> vector<8x32xf32>
    %135 = arith.truncf %134 : vector<8x32xf32> to vector<8x32xbf16>
    %136 = vector.broadcast %45 : vector<1x32xf32> to vector<8x32xf32>
    %137 = arith.addf %4, %136 : vector<8x32xf32>
    %cst_62 = arith.constant dense<0.000000e+00> : vector<8x32xf32>
    %138 = tpu.matmul %135, %44, %cst_62 {dimension_numbers = #tpu.dot_dimension_numbers<[1], [0], [0], [1], [0, 0, 1, 1], [], []>} : vector<8x32xbf16>, vector<32x32xbf16>, vector<8x32xf32> -> vector<8x32xf32>
    %139 = arith.addf %137, %138 : vector<8x32xf32>
    %c0_63 = arith.constant 0 : index
    %c0_64 = arith.constant 0 : index
    %c0_65 = arith.constant 0 : index
    %140 = vector.load %arg13[%c0_63, %c0_64, %c0_65] : memref<1x8x32xf32, #tpu.memory_space<vmem>>, vector<1x8x32xf32>
    %141 = vector.shape_cast %140 : vector<1x8x32xf32> to vector<8x32xf32>
    %142 = vector.shape_cast %139 : vector<8x32xf32> to vector<1x8x32xf32>
    tpu.vector_store %arg13[%c0_63, %c0_64, %c0_65], %142 {strides = array<i32>} : memref<1x8x32xf32, #tpu.memory_space<vmem>>, vector<1x8x32xf32>,
    return
  }
  func.func @transform_0(%arg0: i32, %arg1: i32) -> (i32, i32, i32) {
    %c0_i32 = arith.constant 0 : i32
    %c0_i32_0 = arith.constant 0 : i32
    return %arg0, %arg1, %c0_i32 : i32, i32, i32
  }
  func.func @transform_1(%arg0: i32, %arg1: i32) -> (i32, i32, i32) {
    %c0_i32 = arith.constant 0 : i32
    %c0_i32_0 = arith.constant 0 : i32
    %c0_i32_1 = arith.constant 0 : i32
    return %arg0, %c0_i32, %c0_i32_0 : i32, i32, i32
  }
  func.func @transform_2(%arg0: i32, %arg1: i32) -> (i32, i32, i32) {
    %c0_i32 = arith.constant 0 : i32
    %c0_i32_0 = arith.constant 0 : i32
    %c0_i32_1 = arith.constant 0 : i32
    return %arg0, %c0_i32, %c0_i32_0 : i32, i32, i32
  }
  func.func @transform_3(%arg0: i32, %arg1: i32) -> (i32, i32) {
    %c0_i32 = arith.constant 0 : i32
    %c0_i32_0 = arith.constant 0 : i32
    %c0_i32_1 = arith.constant 0 : i32
    return %c0_i32, %c0_i32_0 : i32, i32
  }
  func.func @transform_4(%arg0: i32, %arg1: i32) -> (i32, i32) {
    %c0_i32 = arith.constant 0 : i32
    %c0_i32_0 = arith.constant 0 : i32
    %c0_i32_1 = arith.constant 0 : i32
    return %c0_i32, %c0_i32_0 : i32, i32
  }
  func.func @transform_5(%arg0: i32, %arg1: i32) -> (i32, i32) {
    %c0_i32 = arith.constant 0 : i32
    %c0_i32_0 = arith.constant 0 : i32
    %c0_i32_1 = arith.constant 0 : i32
    return %c0_i32, %c0_i32_0 : i32, i32
  }
  func.func @transform_6(%arg0: i32, %arg1: i32) -> (i32, i32) {
    %c0_i32 = arith.constant 0 : i32
    %c0_i32_0 = arith.constant 0 : i32
    %c0_i32_1 = arith.constant 0 : i32
    return %c0_i32, %c0_i32_0 : i32, i32
  }
  func.func @transform_7(%arg0: i32, %arg1: i32) -> (i32, i32) {
    %c0_i32 = arith.constant 0 : i32
    %c0_i32_0 = arith.constant 0 : i32
    %c0_i32_1 = arith.constant 0 : i32
    return %c0_i32, %c0_i32_0 : i32, i32
  }
  func.func @transform_8(%arg0: i32, %arg1: i32) -> (i32, i32) {
    %c0_i32 = arith.constant 0 : i32
    %c0_i32_0 = arith.constant 0 : i32
    %c0_i32_1 = arith.constant 0 : i32
    return %c0_i32, %c0_i32_0 : i32, i32
  }
  func.func @transform_9(%arg0: i32, %arg1: i32) -> (i32, i32) {
    %c0_i32 = arith.constant 0 : i32
    %c0_i32_0 = arith.constant 0 : i32
    %c0_i32_1 = arith.constant 0 : i32
    return %c0_i32, %c0_i32_0 : i32, i32
  }
  func.func @transform_10(%arg0: i32, %arg1: i32) -> (i32, i32) {
    %c0_i32 = arith.constant 0 : i32
    %c0_i32_0 = arith.constant 0 : i32
    %c0_i32_1 = arith.constant 0 : i32
    return %c0_i32, %c0_i32_0 : i32, i32
  }
  func.func @transform_11(%arg0: i32, %arg1: i32) -> (i32, i32, i32) {
    %c0_i32 = arith.constant 0 : i32
    %c0_i32_0 = arith.constant 0 : i32
    return %arg0, %arg1, %c0_i32 : i32, i32, i32
  }
  func.func @transform_12(%arg0: i32, %arg1: i32) -> (i32, i32, i32, i32) {
    %c0_i32 = arith.constant 0 : i32
    %c0_i32_0 = arith.constant 0 : i32
    %c0_i32_1 = arith.constant 0 : i32
    return %arg0, %c0_i32, %arg1, %c0_i32_0 : i32, i32, i32, i32
  }
}

</mosaic_0001>

<llo_original>
// kernel: decoder_layer.5
$region0: #{decoder_layer.5}
  #allocation0 [shape = 'u32[]', space=smem, size = 0x4, offset = 0x4, fixed_abs, tag = 'smem constant byte address 0x4 - core index']
  #allocation1 [shape = 'u32[144,128]{1,0:T(1,128)}', space=vmem, size = 0x12000, scoped, tag = 'internal scratch']
  #allocation2 [shape = 'bf16[16,32]{1,0:T(16,128)(2,1)}', space=vmem, size = 0x1000, scoped, tag = 'scratch operand']
  #allocation3 [shape = 'f32[16,32]{1,0:T(8,128)}', space=vmem, size = 0x2000, scoped, tag = 'scratch operand']
  %s0 = inlined_call_operand.vmem [shape: f32[16,32], index: 0, kind: input, shape index: {}]
  %s1 = inlined_call_operand.vmem [shape: f32[1,32], index: 1, kind: input, shape index: {}]
  %s2 = inlined_call_operand.vmem [shape: f32[1,32], index: 2, kind: input, shape index: {}]
  %s3 = inlined_call_operand.vmem [shape: bf16[32,128], index: 3, kind: input, shape index: {}]
  %s4 = inlined_call_operand.vmem [shape: f32[1,128], index: 4, kind: input, shape index: {}]
  %s5 = inlined_call_operand.vmem [shape: bf16[128,32], index: 5, kind: input, shape index: {}]
  %s6 = inlined_call_operand.vmem [shape: f32[1,32], index: 6, kind: input, shape index: {}]
  %s7 = inlined_call_operand.hbm [shape: f32[16,32], index: 7, kind: output, shape index: {}]
  %s8 = sld [smem:[#allocation0]]
  $region46: #{decoder_layer.5} parent=0
    _
  %s10 = ssub.s32 1, %s8
  %s11 = scalar_select 0, %s10, %s8
  $region1: #{decoder_layer.5} parent=0
    #allocation4 [shape = 'u8[8192]{0}', space=vmem, size = 0x2000, scoped, tag = 'output window, operand 0, single buffered']
    #allocation5 [shape = 's32[1]{0}', space=sflag, size = 0x4, scoped, tag = 'scoped memory for decoder_layer.5']
    %12 = vsyncpa [#allocation5], 0
    // Predicated region
    $region2: #{decoder_layer.5} parent=1 // pred_check
      _
    $region3: #{decoder_layer.5} parent=1 // pred_check_branch
      %14 = sbr.rel (0) target = $region5
    $region4: #{decoder_layer.5} parent=1 // pred_region
      _
    $region5: #{decoder_layer.5} parent=1 // pred_fallthru
      _
    // Predicated region
    $region6: #{decoder_layer.5} parent=1 // pred_check
      _
    $region7: #{decoder_layer.5} parent=1 // pred_check_branch
      %16 = sbr.rel (0) target = $region9
    $region8: #{decoder_layer.5} parent=1 // pred_region
      _
    $region9: #{decoder_layer.5} parent=1 // pred_fallthru
      _
    // Predicated region
    $region10: #{decoder_layer.5} parent=1 // pred_check
      _
    $region11: #{decoder_layer.5} parent=1 // pred_check_branch
      %18 = sbr.rel (0) target = $region13
    $region12: #{decoder_layer.5} parent=1 // pred_region
      _
    $region13: #{decoder_layer.5} parent=1 // pred_fallthru
      _
    // Predicated region
    $region14: #{decoder_layer.5} parent=1 // pred_check
      _
    $region15: #{decoder_layer.5} parent=1 // pred_check_branch
      %20 = sbr.rel (0) target = $region17
    $region16: #{decoder_layer.5} parent=1 // pred_region
      _
    $region17: #{decoder_layer.5} parent=1 // pred_fallthru
      _
    // Predicated region
    $region18: #{decoder_layer.5} parent=1 // pred_check
      _
    $region19: #{decoder_layer.5} parent=1 // pred_check_branch
      %22 = sbr.rel (0) target = $region21
    $region20: #{decoder_layer.5} parent=1 // pred_region
      _
    $region21: #{decoder_layer.5} parent=1 // pred_fallthru
      _
    // Predicated region
    $region22: #{decoder_layer.5} parent=1 // pred_check
      _
    $region23: #{decoder_layer.5} parent=1 // pred_check_branch
      %24 = sbr.rel (0) target = $region25
    $region24: #{decoder_layer.5} parent=1 // pred_region
      _
    $region25: #{decoder_layer.5} parent=1 // pred_fallthru
      _
    // Predicated region
    $region26: #{decoder_layer.5} parent=1 // pred_check
      _
    $region27: #{decoder_layer.5} parent=1 // pred_check_branch
      %26 = sbr.rel (0) target = $region29
    $region28: #{decoder_layer.5} parent=1 // pred_region
      _
    $region29: #{decoder_layer.5} parent=1 // pred_fallthru
      _
    %p28 = scmp.eq.s32.totalorder 0, 0
    // Predicated region
    $region30: #{decoder_layer.5} parent=1 // pred_check
      %p29 = pneg %p28
    $region31: #{decoder_layer.5} parent=1 // pred_check_branch
      %31 = sbr.rel (%p29) target = $region33
    $region32: #{decoder_layer.5} parent=1 // pred_region
      %v32 = vld [vmem:[%s0] sm:$0xff]
      %v33 = vld [vmem:[%s0 + $0x8] sm:$0xff]
      %v34 = vld [vmem:[%s1] sm:$0x1]
      %v35 = vld [vmem:[%s2] sm:$0x1]
      %vm36 = vcmask 261120
      %v37 = vsel %vm36, %v32, 0.0
      %38 = vadd.xlane.f32.xlu0 %v37
      %v39 = vpop.xlane.xlu0 %38
      %v40 = vsel %vm36, %v33, 0.0
      %41 = vadd.xlane.f32.xlu0 %v40
      %v42 = vpop.xlane.xlu0 %41
      %v43 = vrcp.pop 32.0
      %v44 = vmul.f32 %v39, %v43
      %v45 = vmul.f32 %v42, %v43
      %v46 = vsub.f32 %v32, %v44
      %v47 = vsub.f32 %v33, %v45
      %v48 = vmul.f32 %v46, %v46
      %v49 = vmul.f32 %v47, %v47
      %v50 = vsel %vm36, %v48, 0.0
      %51 = vadd.xlane.f32.xlu0 %v50
      %v52 = vpop.xlane.xlu0 %51
      %v53 = vsel %vm36, %v49, 0.0
      %54 = vadd.xlane.f32.xlu0 %v53
      %v55 = vpop.xlane.xlu0 %54
      %v56 = vmul.f32 %v52, %v43
      %v57 = vmul.f32 %v55, %v43
      %v58 = vadd.f32 %v56, 1e-05
      %v59 = vadd.f32 %v57, 1e-05
      %v60 = vrsqrt.pop %v58
      %v61 = vrsqrt.pop %v59
      %v62 = vmul.f32 %v46, %v60
      %v63 = vmul.f32 %v47, %v61
      %v65 = vlaneseq
      %v66 = vshrl.u32 %v65, 7
      %v67 = vsub.s32 0, %v66
      %v68 = vrot.slane %v34, %v67
      %v70 = vmul.f32 %v62, %v68
      %v71 = vmul.f32 %v63, %v68
      %v73 = vlaneseq
      %v74 = vshrl.u32 %v73, 7
      %v75 = vsub.s32 0, %v74
      %v76 = vrot.slane %v35, %v75
      %v78 = vadd.f32 %v70, %v76
      %v79 = vadd.f32 %v71, %v76
      %v80 = vpack.c.bf16 %v79, %v78
      %81 = vst.msk [vmem:[#allocation2] sm:$0xff] %vm36, %v80
      %82 = vst.msk [vmem:[#allocation3] sm:$0xff] %vm36, 0.0
      %83 = vst.msk [vmem:[#allocation3 + $0x8] sm:$0xff] %vm36, 0.0
    $region33: #{decoder_layer.5} parent=1 // pred_fallthru
      _
    %v84 = vld [vmem:[#allocation2] sm:$0xff]
    %v85 = vld [vmem:[%s3] sm:$0xf]
    %v86 = vld [vmem:[%s3 + $0x4] sm:$0xf]
    %v87 = vld [vmem:[%s3 + $0x8] sm:$0xf]
    %v88 = vld [vmem:[%s3 + $0xc] sm:$0xf]
    %v89 = vld [vmem:[%s4] sm:$0x1]
    %v91 = vlaneseq
    %v92 = vshrl.u32 %v91, 7
    %v93 = vsub.s32 0, %v92
    %v94 = vrot.slane %v89, %v93
    %v100 = vunpack.c.l.b16 %v85
    %v101 = vunpack.c.l.b16 %v86
    %v102 = vunpack.c.l.b16 %v87
    %v103 = vunpack.c.l.b16 %v88
    %v104 = vpack.c.b16 %v101, %v100
    %v105 = vpack.c.b16 %v103, %v102
    %vm108 = vcmask 261120
    %v110 = vsel %vm108, %v84, 0
    %112 = vmatprep.subr.bf16.mxu0 0
    %113 = vmatpush1.bf16.msra.mxu0 %v104
    %114 = vmatprep.subr.bf16.mxu0 0
    %115 = vmatpush1.bf16.msra.mxu0 %v105
    %116 = vmatprep.subr.bf16.mxu0 0
    %117 = vmatpush1.bf16.msra.mxu0 0
    %118 = vmatprep.subr.bf16.mxu0 0
    %119 = vmatpush1.bf16.msra.mxu0 0
    %120 = vmatprep.subr.bf16.mxu0 0
    %121 = vmatpush1.bf16.msra.mxu0 0
    %122 = vmatprep.subr.bf16.mxu0 0
    %123 = vmatpush1.bf16.msra.mxu0 0
    %124 = vmatprep.subr.bf16.mxu0 0
    %125 = vmatpush1.bf16.msra.mxu0 0
    %126 = vmatprep.subr.bf16.mxu0 0
    %127 = vmatpush1.bf16.msra.mxu0 0
    %128 = vmatprep.subr.bf16.mxu0 0
    %129 = vmatpush1.bf16.msra.mxu0 0
    %130 = vmatprep.subr.bf16.mxu0 0
    %131 = vmatpush1.bf16.msra.mxu0 0
    %132 = vmatprep.subr.bf16.mxu0 0
    %133 = vmatpush1.bf16.msra.mxu0 0
    %134 = vmatprep.subr.bf16.mxu0 0
    %135 = vmatpush1.bf16.msra.mxu0 0
    %136 = vmatprep.subr.bf16.mxu0 0
    %137 = vmatpush1.bf16.msra.mxu0 0
    %138 = vmatprep.subr.bf16.mxu0 0
    %139 = vmatpush1.bf16.msra.mxu0 0
    %140 = vmatprep.subr.bf16.mxu0 0
    %141 = vmatpush1.bf16.msra.mxu0 0
    %142 = vmatprep.subr.bf16.mxu0 0
    %143 = vmatpush1.bf16.msra.mxu0 0
    %144 = vmatprep.mubr.bf16.mxu0 0
    %145 = vmatmul.mubr.bf16.gmra.mrb[0].mxu0 %v110
    %v146 = vpop.f32.mrb[0].mxu0
    %v147 = vadd.f32 %v94, %v146
    %v148 = vpop.f32.mrb[0].mxu0
    %v149 = vpop.f32.mrb[0].mxu0
    %v150 = vadd.f32 %v94, %v149
    %v151 = vpop.f32.mrb[0].mxu0
    %152 = vdwg.mxu0
    %v153 = vmax.f32 %v147, 0.0
    %v154 = vmax.f32 %v150, 0.0
    %v155 = vld [vmem:[#allocation3] sm:$0xff]
    %v156 = vld [vmem:[#allocation3 + $0x8] sm:$0xff]
    %v157 = vpack.c.bf16 %v154, %v153
    %v158 = vld [vmem:[%s5] sm:$0xf]
    %v159 = vld [vmem:[%s5 + $0x4] sm:$0xf]
    %v160 = vld [vmem:[%s5 + $0x8] sm:$0xf]
    %v161 = vld [vmem:[%s5 + $0xc] sm:$0xf]
    %v162 = vld [vmem:[%s5 + $0x10] sm:$0xf]
    %v163 = vld [vmem:[%s5 + $0x14] sm:$0xf]
    %v164 = vld [vmem:[%s5 + $0x18] sm:$0xf]
    %v165 = vld [vmem:[%s5 + $0x1c] sm:$0xf]
    %v166 = vld [vmem:[%s5 + $0x20] sm:$0xf]
    %v167 = vld [vmem:[%s5 + $0x24] sm:$0xf]
    %v168 = vld [vmem:[%s5 + $0x28] sm:$0xf]
    %v169 = vld [vmem:[%s5 + $0x2c] sm:$0xf]
    %v170 = vld [vmem:[%s5 + $0x30] sm:$0xf]
    %v171 = vld [vmem:[%s5 + $0x34] sm:$0xf]
    %v172 = vld [vmem:[%s5 + $0x38] sm:$0xf]
    %v173 = vld [vmem:[%s5 + $0x3c] sm:$0xf]
    %v190 = vunpack.c.l.b16 %v158
    %v191 = vunpack.c.l.b16 %v159
    %v192 = vunpack.c.l.b16 %v160
    %v193 = vunpack.c.l.b16 %v161
    %v194 = vunpack.c.l.b16 %v162
    %v195 = vunpack.c.l.b16 %v163
    %v196 = vunpack.c.l.b16 %v164
    %v197 = vunpack.c.l.b16 %v165
    %v198 = vunpack.c.l.b16 %v166
    %v199 = vunpack.c.l.b16 %v167
    %v200 = vunpack.c.l.b16 %v168
    %v201 = vunpack.c.l.b16 %v169
    %v202 = vunpack.c.l.b16 %v170
    %v203 = vunpack.c.l.b16 %v171
    %v204 = vunpack.c.l.b16 %v172
    %v205 = vunpack.c.l.b16 %v173
    %v206 = vpack.c.b16 %v191, %v190
    %v207 = vpack.c.b16 %v193, %v192
    %v208 = vpack.c.b16 %v195, %v194
    %v209 = vpack.c.b16 %v197, %v196
    %v210 = vpack.c.b16 %v199, %v198
    %v211 = vpack.c.b16 %v201, %v200
    %v212 = vpack.c.b16 %v203, %v202
    %v213 = vpack.c.b16 %v205, %v204
    %222 = vmatprep.subr.bf16.mxu0 0
    %223 = vmatpush1.bf16.msra.mxu0 %v206
    %224 = vmatprep.subr.bf16.mxu0 0
    %225 = vmatpush1.bf16.msra.mxu0 %v207
    %226 = vmatprep.subr.bf16.mxu0 0
    %227 = vmatpush1.bf16.msra.mxu0 %v208
    %228 = vmatprep.subr.bf16.mxu0 0
    %229 = vmatpush1.bf16.msra.mxu0 %v209
    %230 = vmatprep.subr.bf16.mxu0 0
    %231 = vmatpush1.bf16.msra.mxu0 %v210
    %232 = vmatprep.subr.bf16.mxu0 0
    %233 = vmatpush1.bf16.msra.mxu0 %v211
    %234 = vmatprep.subr.bf16.mxu0 0
    %235 = vmatpush1.bf16.msra.mxu0 %v212
    %236 = vmatprep.subr.bf16.mxu0 0
    %237 = vmatpush1.bf16.msra.mxu0 %v213
    %238 = vmatprep.subr.bf16.mxu0 0
    %239 = vmatpush1.bf16.msra.mxu0 0
    %240 = vmatprep.subr.bf16.mxu0 0
    %241 = vmatpush1.bf16.msra.mxu0 0
    %242 = vmatprep.subr.bf16.mxu0 0
    %243 = vmatpush1.bf16.msra.mxu0 0
    %244 = vmatprep.subr.bf16.mxu0 0
    %245 = vmatpush1.bf16.msra.mxu0 0
    %246 = vmatprep.subr.bf16.mxu0 0
    %247 = vmatpush1.bf16.msra.mxu0 0
    %248 = vmatprep.subr.bf16.mxu0 0
    %249 = vmatpush1.bf16.msra.mxu0 0
    %250 = vmatprep.subr.bf16.mxu0 0
    %251 = vmatpush1.bf16.msra.mxu0 0
    %252 = vmatprep.subr.bf16.mxu0 0
    %253 = vmatpush1.bf16.msra.mxu0 0
    %254 = vmatprep.mubr.bf16.mxu0 0
    %255 = vmatmul.mubr.bf16.gmra.mrb[0].mxu0 %v157
    %v256 = vpop.f32.mrb[0].mxu0
    %v257 = vadd.f32 0.0, %v256
    %v258 = vpop.f32.mrb[0].mxu0
    %v259 = vpop.f32.mrb[0].mxu0
    %v260 = vadd.f32 0.0, %v259
    %v261 = vpop.f32.mrb[0].mxu0
    %262 = vdwg.mxu0
    %v263 = vadd.f32 %v155, %v257
    %v264 = vadd.f32 %v156, %v260
    %265 = vst.msk [vmem:[#allocation3] sm:$0xff] %vm108, %v263
    %266 = vst.msk [vmem:[#allocation3 + $0x8] sm:$0xff] %vm108, %v264
    // Predicated region
    $region34: #{decoder_layer.5} parent=1 // pred_check
      %p267 = pneg %p28
    $region35: #{decoder_layer.5} parent=1 // pred_check_branch
      %269 = sbr.rel (%p267) target = $region37
    $region36: #{decoder_layer.5} parent=1 // pred_region
      %v270 = vld [vmem:[%s0] sm:$0xff]
      %v271 = vld [vmem:[%s0 + $0x8] sm:$0xff]
      %v272 = vld [vmem:[#allocation3] sm:$0xff]
      %v273 = vld [vmem:[#allocation3 + $0x8] sm:$0xff]
      %v274 = vadd.f32 %v270, %v272
      %v275 = vadd.f32 %v271, %v273
      %v276 = vld [vmem:[%s6] sm:$0x1]
      %v278 = vlaneseq
      %v279 = vshrl.u32 %v278, 7
      %v280 = vsub.s32 0, %v279
      %v281 = vrot.slane %v276, %v280
      %v283 = vadd.f32 %v274, %v281
      %v284 = vadd.f32 %v275, %v281
      %285 = vst.msk [vmem:[#allocation4] sm:$0xff] %vm108, %v283
      %286 = vst.msk [vmem:[#allocation4 + $0x8] sm:$0xff] %vm108, %v284
    $region37: #{decoder_layer.5} parent=1 // pred_fallthru
      _
    // Predicated region
    $region38: #{decoder_layer.5} parent=1 // pred_check
      _
    $region39: #{decoder_layer.5} parent=1 // pred_check_branch
      %288 = sbr.rel (0) target = $region41
    $region40: #{decoder_layer.5} parent=1 // pred_region
      %s290 = ssub.s32 256, 256
      %291 = vsyncadd [#allocation5], %s290
      %s292 = sshll.u32 [#allocation4], 4
      %s293 = int_to_ptr.vmem [resolvable:$true] %s292
      %298 = dma.vmem_to_hbm [thread:$0]  %s293, 256, %s7, [#allocation5], 128, 128, 8
    $region41: #{decoder_layer.5} parent=1 // pred_fallthru
      _
    // Predicated region
    $region42: #{decoder_layer.5} parent=1 // pred_check
      _
    $region43: #{decoder_layer.5} parent=1 // pred_check_branch
      %300 = sbr.rel (0) target = $region45
    $region44: #{decoder_layer.5} parent=1 // pred_region
      %301 = dma.done [#allocation5], 256
    $region45: #{decoder_layer.5} parent=1 // pred_fallthru
      _
    %302 = vsyncpa [#allocation5], 1

// kernel: decoder_layer.3
$region0: #{decoder_layer.3}
  #allocation0 [shape = 'u32[]', space=smem, size = 0x4, offset = 0x4, fixed_abs, tag = 'smem constant byte address 0x4 - core index']
  #allocation1 [shape = 'u32[144,128]{1,0:T(1,128)}', space=vmem, size = 0x12000, scoped, tag = 'internal scratch']
  #allocation2 [shape = 'bf16[8,32]{1,0:T(8,128)(2,1)}', space=vmem, size = 0x800, scoped, tag = 'scratch operand']
  #allocation3 [shape = 'bf16[8,32]{1,0:T(8,128)(2,1)}', space=vmem, size = 0x800, scoped, tag = 'scratch operand']
  #allocation4 [shape = 'bf16[8,32]{1,0:T(8,128)(2,1)}', space=vmem, size = 0x800, scoped, tag = 'scratch operand']
  %s0 = inlined_call_operand.vmem [shape: f32[2,8,32], index: 0, kind: input, shape index: {}]
  %s1 = inlined_call_operand.vmem [shape: f32[2,8,8], index: 1, kind: input, shape index: {}]
  %s2 = inlined_call_operand.vmem [shape: f32[1,32], index: 2, kind: input, shape index: {}]
  %s3 = inlined_call_operand.vmem [shape: f32[1,32], index: 3, kind: input, shape index: {}]
  %s4 = inlined_call_operand.vmem [shape: bf16[32,96], index: 4, kind: input, shape index: {}]
  %s5 = inlined_call_operand.vmem [shape: f32[1,96], index: 5, kind: input, shape index: {}]
  %s6 = inlined_call_operand.vmem [shape: bf16[32,32], index: 6, kind: input, shape index: {}]
  %s7 = inlined_call_operand.vmem [shape: f32[1,32], index: 7, kind: input, shape index: {}]
  %s8 = inlined_call_operand.vmem [shape: f32[2,8,32], index: 8, kind: output, shape index: {0}]
  %s9 = inlined_call_operand.hbm [shape: f32[2,4,8,8], index: 9, kind: output, shape index: {1}]
  %10 = xla_tuple %s8, %s9
  %s11 = sld [smem:[#allocation0]]
  $region77: #{decoder_layer.3} parent=0
    _
  %s13 = ssub.s32 1, %s11
  %s14 = scalar_select 0, %s13, %s11
  $region1: #{decoder_layer.3} parent=0
    #allocation5 [shape = 'u8[32768]{0}', space=vmem, size = 0x8000, scoped, tag = 'output window, operand 1']
    #allocation6 [shape = 's32[2]{0}', space=sflag, size = 0x8, scoped, tag = 'scoped memory for decoder_layer.3']
    %15 = vsyncpa [#allocation6], 0
    %s16 = scalar_lea.sflag [#allocation6], 1
    %17 = vsyncpa %s16, 0
    loop: start=0, step=1, limit=4
    $region2: #{decoder_layer.3} parent=1 // loop_pre_header
      _
    $region3: #{decoder_layer.3} parent=1 // loop_header
      %s19 = sphi 0, %s23
      %p20 = scmp.ge.s32.totalorder %s19, 4
      %s26 = sphi 0, %s38
      %s27 = sphi 0, %s34
      %s28 = sphi 0, %s26
      %s29 = sphi 0, %s27
      %s30 = sphi 0, %s28
      %s31 = sphi 0, %s29
      %s41 = sphi 0, %s43
      %s44 = sphi 0, %s41
      %s45 = sphi 0, %s44
      %s61 = sphi 0, %s45
      %s69 = sphi 0, %s71
      %s72 = sphi 0, %s69
      %s73 = sphi 0, %s72
      %s89 = sphi 0, %s73
      %s93 = sphi 0, %s93
      %s95 = sphi 0, %s93
      %s96 = sphi 0, %s95
      %s110 = sphi 0, %s96
      %s114 = sphi 0, %s114
      %s116 = sphi 0, %s114
      %s117 = sphi 0, %s116
      %s131 = sphi 0, %s117
      %s135 = sphi 0, %s135
      %s137 = sphi 0, %s135
      %s138 = sphi 0, %s137
      %s152 = sphi 0, %s138
      %s156 = sphi 0, %s156
      %s158 = sphi 0, %s156
      %s159 = sphi 0, %s158
      %s173 = sphi 0, %s159
      %s177 = sphi 0, %s177
      %s179 = sphi 0, %s177
      %s180 = sphi 0, %s179
      %s194 = sphi 0, %s180
      %s198 = sphi 0, %s198
      %s200 = sphi 0, %s198
      %s201 = sphi 0, %s200
      %s215 = sphi 0, %s201
      %s223 = sphi 0, %s225
      %s226 = sphi 0, %s223
      %s227 = sphi 0, %s226
      %s243 = sphi 0, %s227
      %s251 = sphi 0, %s253
      %s254 = sphi 0, %s251
      %s255 = sphi 0, %s254
      %s271 = sphi 0, %s255
    $region4: #{decoder_layer.3} parent=1 // loop_header_branch
      %22 = sbr.rel (%p20) target = $region8
    $region5: #{decoder_layer.3} parent=1 // loop_body
      %s24 = ssub.s32 %s19, 1
      %s25 = ssub.s32 %s19, 2
      %s32 = sadd.s32 1, %s27
      %p33 = scmp.ge.s32.totalorder %s32, 1
      %s34 = scalar_select %p33, 0, %s32
      %s35 = sadd.s32 1, %s26
      %s36 = scalar_select %p33, %s35, %s26
      %p37 = scmp.ge.s32.totalorder %s36, 2
      %s38 = scalar_select %p37, 0, %s36
      %s39 = ssub.s32 %s26, %s38
      %p40 = scmp.eq.s32.totalorder %s39, 0
      %s42 = sadd.s32 %s41, 1
      %s43 = scalar_select %p40, %s41, %s42
      %p46 = pneg %p40
      %p47 = scmp.eq.s32.totalorder %s19, 1
      %p48 = por %p46, %p47
      %p49 = scmp.ne.s32.totalorder %s41, %s44
      %p50 = scmp.eq.s32.totalorder %s19, 0
      %p51 = por %p49, %p50
      %p52 = scmp.ne.s32.totalorder %s41, %s44
      %p53 = scmp.eq.s32.totalorder %s24, 1
      %p54 = por %p52, %p53
      %p55 = scmp.ne.s32.totalorder %s44, %s45
      %p56 = scmp.eq.s32.totalorder %s24, 0
      %p57 = por %p55, %p56
      %p58 = scmp.ne.s32.totalorder %s44, %s45
      %p59 = scmp.eq.s32.totalorder %s25, 1
      %p60 = por %p58, %p59
      %p62 = scmp.ne.s32.totalorder %s45, %s61
      %p63 = scmp.eq.s32.totalorder %s25, 0
      %p64 = por %p62, %p63
      %s65 = ssub.s32 %s26, %s38
      %s66 = ssub.s32 %s27, %s34
      %s67 = sor.u32 %s65, %s66
      %p68 = scmp.eq.s32.totalorder %s67, 0
      %s70 = sadd.s32 %s69, 1
      %s71 = scalar_select %p68, %s69, %s70
      %p74 = pneg %p68
      %p75 = scmp.eq.s32.totalorder %s19, 1
      %p76 = por %p74, %p75
      %p77 = scmp.ne.s32.totalorder %s69, %s72
      %p78 = scmp.eq.s32.totalorder %s19, 0
      %p79 = por %p77, %p78
      %p80 = scmp.ne.s32.totalorder %s69, %s72
      %p81 = scmp.eq.s32.totalorder %s24, 1
      %p82 = por %p80, %p81
      %p83 = scmp.ne.s32.totalorder %s72, %s73
      %p84 = scmp.eq.s32.totalorder %s24, 0
      %p85 = por %p83, %p84
      %p86 = scmp.ne.s32.totalorder %s72, %s73
      %p87 = scmp.eq.s32.totalorder %s25, 1
      %p88 = por %p86, %p87
      %p90 = scmp.ne.s32.totalorder %s73, %s89
      %p91 = scmp.eq.s32.totalorder %s25, 0
      %p92 = por %p90, %p91
      %s94 = sadd.s32 %s93, 1
      %p97 = scmp.eq.s32.totalorder %s19, 1
      %p98 = scmp.ne.s32.totalorder %s93, %s95
      %p99 = scmp.eq.s32.totalorder %s19, 0
      %p100 = por %p98, %p99
      %p101 = scmp.ne.s32.totalorder %s93, %s95
      %p102 = scmp.eq.s32.totalorder %s24, 1
      %p103 = por %p101, %p102
      %p104 = scmp.ne.s32.totalorder %s95, %s96
      %p105 = scmp.eq.s32.totalorder %s24, 0
      %p106 = por %p104, %p105
      %p107 = scmp.ne.s32.totalorder %s95, %s96
      %p108 = scmp.eq.s32.totalorder %s25, 1
      %p109 = por %p107, %p108
      %p111 = scmp.ne.s32.totalorder %s96, %s110
      %p112 = scmp.eq.s32.totalorder %s25, 0
      %p113 = por %p111, %p112
      %s115 = sadd.s32 %s114, 1
      %p118 = scmp.eq.s32.totalorder %s19, 1
      %p119 = scmp.ne.s32.totalorder %s114, %s116
      %p120 = scmp.eq.s32.totalorder %s19, 0
      %p121 = por %p119, %p120
      %p122 = scmp.ne.s32.totalorder %s114, %s116
      %p123 = scmp.eq.s32.totalorder %s24, 1
      %p124 = por %p122, %p123
      %p125 = scmp.ne.s32.totalorder %s116, %s117
      %p126 = scmp.eq.s32.totalorder %s24, 0
      %p127 = por %p125, %p126
      %p128 = scmp.ne.s32.totalorder %s116, %s117
      %p129 = scmp.eq.s32.totalorder %s25, 1
      %p130 = por %p128, %p129
      %p132 = scmp.ne.s32.totalorder %s117, %s131
      %p133 = scmp.eq.s32.totalorder %s25, 0
      %p134 = por %p132, %p133
      %s136 = sadd.s32 %s135, 1
      %p139 = scmp.eq.s32.totalorder %s19, 1
      %p140 = scmp.ne.s32.totalorder %s135, %s137
      %p141 = scmp.eq.s32.totalorder %s19, 0
      %p142 = por %p140, %p141
      %p143 = scmp.ne.s32.totalorder %s135, %s137
      %p144 = scmp.eq.s32.totalorder %s24, 1
      %p145 = por %p143, %p144
      %p146 = scmp.ne.s32.totalorder %s137, %s138
      %p147 = scmp.eq.s32.totalorder %s24, 0
      %p148 = por %p146, %p147
      %p149 = scmp.ne.s32.totalorder %s137, %s138
      %p150 = scmp.eq.s32.totalorder %s25, 1
      %p151 = por %p149, %p150
      %p153 = scmp.ne.s32.totalorder %s138, %s152
      %p154 = scmp.eq.s32.totalorder %s25, 0
      %p155 = por %p153, %p154
      %s157 = sadd.s32 %s156, 1
      %p160 = scmp.eq.s32.totalorder %s19, 1
      %p161 = scmp.ne.s32.totalorder %s156, %s158
      %p162 = scmp.eq.s32.totalorder %s19, 0
      %p163 = por %p161, %p162
      %p164 = scmp.ne.s32.totalorder %s156, %s158
      %p165 = scmp.eq.s32.totalorder %s24, 1
      %p166 = por %p164, %p165
      %p167 = scmp.ne.s32.totalorder %s158, %s159
      %p168 = scmp.eq.s32.totalorder %s24, 0
      %p169 = por %p167, %p168
      %p170 = scmp.ne.s32.totalorder %s158, %s159
      %p171 = scmp.eq.s32.totalorder %s25, 1
      %p172 = por %p170, %p171
      %p174 = scmp.ne.s32.totalorder %s159, %s173
      %p175 = scmp.eq.s32.totalorder %s25, 0
      %p176 = por %p174, %p175
      %s178 = sadd.s32 %s177, 1
      %p181 = scmp.eq.s32.totalorder %s19, 1
      %p182 = scmp.ne.s32.totalorder %s177, %s179
      %p183 = scmp.eq.s32.totalorder %s19, 0
      %p184 = por %p182, %p183
      %p185 = scmp.ne.s32.totalorder %s177, %s179
      %p186 = scmp.eq.s32.totalorder %s24, 1
      %p187 = por %p185, %p186
      %p188 = scmp.ne.s32.totalorder %s179, %s180
      %p189 = scmp.eq.s32.totalorder %s24, 0
      %p190 = por %p188, %p189
      %p191 = scmp.ne.s32.totalorder %s179, %s180
      %p192 = scmp.eq.s32.totalorder %s25, 1
      %p193 = por %p191, %p192
      %p195 = scmp.ne.s32.totalorder %s180, %s194
      %p196 = scmp.eq.s32.totalorder %s25, 0
      %p197 = por %p195, %p196
      %s199 = sadd.s32 %s198, 1
      %p202 = scmp.eq.s32.totalorder %s19, 1
      %p203 = scmp.ne.s32.totalorder %s198, %s200
      %p204 = scmp.eq.s32.totalorder %s19, 0
      %p205 = por %p203, %p204
      %p206 = scmp.ne.s32.totalorder %s198, %s200
      %p207 = scmp.eq.s32.totalorder %s24, 1
      %p208 = por %p206, %p207
      %p209 = scmp.ne.s32.totalorder %s200, %s201
      %p210 = scmp.eq.s32.totalorder %s24, 0
      %p211 = por %p209, %p210
      %p212 = scmp.ne.s32.totalorder %s200, %s201
      %p213 = scmp.eq.s32.totalorder %s25, 1
      %p214 = por %p212, %p213
      %p216 = scmp.ne.s32.totalorder %s201, %s215
      %p217 = scmp.eq.s32.totalorder %s25, 0
      %p218 = por %p216, %p217
      %s219 = ssub.s32 %s26, %s38
      %s220 = ssub.s32 %s27, %s34
      %s221 = sor.u32 %s219, %s220
      %p222 = scmp.eq.s32.totalorder %s221, 0
      %s224 = sadd.s32 %s223, 1
      %s225 = scalar_select %p222, %s223, %s224
      %p228 = pneg %p222
      %p229 = scmp.eq.s32.totalorder %s19, 1
      %p230 = por %p228, %p229
      %p231 = scmp.ne.s32.totalorder %s223, %s226
      %p232 = scmp.eq.s32.totalorder %s19, 0
      %p233 = por %p231, %p232
      %p234 = scmp.ne.s32.totalorder %s223, %s226
      %p235 = scmp.eq.s32.totalorder %s24, 1
      %p236 = por %p234, %p235
      %p237 = scmp.ne.s32.totalorder %s226, %s227
      %p238 = scmp.eq.s32.totalorder %s24, 0
      %p239 = por %p237, %p238
      %p240 = scmp.ne.s32.totalorder %s226, %s227
      %p241 = scmp.eq.s32.totalorder %s25, 1
      %p242 = por %p240, %p241
      %p244 = scmp.ne.s32.totalorder %s227, %s243
      %p245 = scmp.eq.s32.totalorder %s25, 0
      %p246 = por %p244, %p245
      %s247 = ssub.s32 %s26, %s38
      %s248 = ssub.s32 %s27, %s34
      %s249 = sor.u32 %s247, %s248
      %p250 = scmp.eq.s32.totalorder %s249, 0
      %s252 = sadd.s32 %s251, 1
      %s253 = scalar_select %p250, %s251, %s252
      %p256 = pneg %p250
      %p257 = scmp.eq.s32.totalorder %s19, 1
      %p258 = por %p256, %p257
      %p259 = scmp.ne.s32.totalorder %s251, %s254
      %p260 = scmp.eq.s32.totalorder %s19, 0
      %p261 = por %p259, %p260
      %p262 = scmp.ne.s32.totalorder %s251, %s254
      %p263 = scmp.eq.s32.totalorder %s24, 1
      %p264 = por %p262, %p263
      %p265 = scmp.ne.s32.totalorder %s254, %s255
      %p266 = scmp.eq.s32.totalorder %s24, 0
      %p267 = por %p265, %p266
      %p268 = scmp.ne.s32.totalorder %s254, %s255
      %p269 = scmp.eq.s32.totalorder %s25, 1
      %p270 = por %p268, %p269
      %p272 = scmp.ne.s32.totalorder %s255, %s271
      %p273 = scmp.eq.s32.totalorder %s25, 0
      %p274 = por %p272, %p273
      %p275 = scmp.le.s32.totalorder 1, %s19
      %p276 = scmp.lt.s32.totalorder %s19, 3
      %p277 = pnand %p275, %p276
      %p278 = pneg %p277
      // Predicated region
      $region9: #{decoder_layer.3} parent=5 // pred_check
        _
      $region10: #{decoder_layer.3} parent=5 // pred_check_branch
        %280 = sbr.rel (%p277) target = $region12
      $region11: #{decoder_layer.3} parent=5 // pred_region
        %s281 = ssub.s32 %s19, 1
        // Predicated region
        $region13: #{decoder_layer.3} parent=11 // pred_check
          %p282 = pneg %p106
        $region14: #{decoder_layer.3} parent=11 // pred_check_branch
          %284 = sbr.rel (%p282) target = $region16
        $region15: #{decoder_layer.3} parent=11 // pred_region
          _
        $region16: #{decoder_layer.3} parent=11 // pred_fallthru
          _
        // Predicated region
        $region17: #{decoder_layer.3} parent=11 // pred_check
          %p285 = pneg %p127
        $region18: #{decoder_layer.3} parent=11 // pred_check_branch
          %287 = sbr.rel (%p285) target = $region20
        $region19: #{decoder_layer.3} parent=11 // pred_region
          _
        $region20: #{decoder_layer.3} parent=11 // pred_fallthru
          _
        // Predicated region
        $region21: #{decoder_layer.3} parent=11 // pred_check
          %p288 = pneg %p148
        $region22: #{decoder_layer.3} parent=11 // pred_check_branch
          %290 = sbr.rel (%p288) target = $region24
        $region23: #{decoder_layer.3} parent=11 // pred_region
          _
        $region24: #{decoder_layer.3} parent=11 // pred_fallthru
          _
        // Predicated region
        $region25: #{decoder_layer.3} parent=11 // pred_check
          %p291 = pneg %p169
        $region26: #{decoder_layer.3} parent=11 // pred_check_branch
          %293 = sbr.rel (%p291) target = $region28
        $region27: #{decoder_layer.3} parent=11 // pred_region
          _
        $region28: #{decoder_layer.3} parent=11 // pred_fallthru
          _
        // Predicated region
        $region29: #{decoder_layer.3} parent=11 // pred_check
          %p294 = pneg %p190
        $region30: #{decoder_layer.3} parent=11 // pred_check_branch
          %296 = sbr.rel (%p294) target = $region32
        $region31: #{decoder_layer.3} parent=11 // pred_region
          _
        $region32: #{decoder_layer.3} parent=11 // pred_fallthru
          _
        // Predicated region
        $region33: #{decoder_layer.3} parent=11 // pred_check
          %p297 = pneg %p211
        $region34: #{decoder_layer.3} parent=11 // pred_check_branch
          %299 = sbr.rel (%p297) target = $region36
        $region35: #{decoder_layer.3} parent=11 // pred_region
          _
        $region36: #{decoder_layer.3} parent=11 // pred_fallthru
          _
      $region12: #{decoder_layer.3} parent=5 // pred_fallthru
        _
      %p300 = scmp.lt.s32.totalorder %s19, 2
      // Predicated region
      $region37: #{decoder_layer.3} parent=5 // pred_check
        %p301 = pneg %p300
      $region38: #{decoder_layer.3} parent=5 // pred_check_branch
        %303 = sbr.rel (%p301) target = $region40
      $region39: #{decoder_layer.3} parent=5 // pred_region
        // Predicated region
        $region41: #{decoder_layer.3} parent=39 // pred_check
          %p304 = pneg %p51
        $region42: #{decoder_layer.3} parent=39 // pred_check_branch
          %306 = sbr.rel (%p304) target = $region44
        $region43: #{decoder_layer.3} parent=39 // pred_region
          %p307 = scmp.lt.s32.totalorder %s26, 1
          %s308 = scalar_select %p307, %s26, 1
          %s309 = smul.addr %s308, 8
          %s310 = scalar_lea.vmem %s0, %s309
        $region44: #{decoder_layer.3} parent=39 // pred_fallthru
          _
        // Predicated region
        $region45: #{decoder_layer.3} parent=39 // pred_check
          %p311 = pneg %p79
        $region46: #{decoder_layer.3} parent=39 // pred_check_branch
          %313 = sbr.rel (%p311) target = $region48
        $region47: #{decoder_layer.3} parent=39 // pred_region
          %p314 = scmp.lt.s32.totalorder %s26, 1
          %s315 = scalar_select %p314, %s26, 1
          %p316 = scmp.lt.s32.totalorder %s27, 0
          %s317 = scalar_select %p316, %s27, 0
          %s318 = sadd.s32 %s317, %s315
          %s319 = smul.addr %s318, 8
          %s320 = scalar_lea.vmem %s1, %s319
        $region48: #{decoder_layer.3} parent=39 // pred_fallthru
          _
      $region40: #{decoder_layer.3} parent=5 // pred_fallthru
        _
      %p321 = scmp.le.s32.totalorder 1, %s19
      %p322 = scmp.lt.s32.totalorder %s19, 3
      %p323 = pnand %p321, %p322
      %p324 = pneg %p323
      // Predicated region
      $region49: #{decoder_layer.3} parent=5 // pred_check
        _
      $region50: #{decoder_layer.3} parent=5 // pred_check_branch
        %326 = sbr.rel (%p323) target = $region52
      $region51: #{decoder_layer.3} parent=5 // pred_region
        %s327 = ssub.s32 %s19, 1
        %p328 = scmp.lt.s32.totalorder %s28, 1
        %s329 = scalar_select %p328, %s28, 1
        %s330 = smul.addr %s329, 8
        %s331 = scalar_lea.vmem %s0, %s330
        %p332 = pneg %p57
        %p333 = pneg %p54
        %p334 = scmp.lt.s32.totalorder %s28, 1
        %s335 = scalar_select %p334, %s28, 1
        %p336 = scmp.lt.s32.totalorder %s29, 0
        %s337 = scalar_select %p336, %s29, 0
        %s338 = sadd.s32 %s337, %s335
        %s339 = smul.addr %s338, 8
        %s340 = scalar_lea.vmem %s1, %s339
        %p341 = pneg %p85
        %p342 = pneg %p82
        %p343 = pneg %p106
        %p344 = pneg %p103
        %p345 = pneg %p127
        %p346 = pneg %p124
        %p347 = pneg %p148
        %p348 = pneg %p145
        %p349 = pneg %p169
        %p350 = pneg %p166
        %p351 = pneg %p190
        %p352 = pneg %p187
        %p353 = pneg %p211
        %p354 = pneg %p208
        %p355 = pneg %p239
        %p356 = pneg %p236
        %p357 = scmp.lt.s32.totalorder %s28, 1
        %s358 = scalar_select %p357, %s28, 1
        %p359 = scmp.lt.s32.totalorder %s29, 0
        %s360 = scalar_select %p359, %s29, 0
        %s361 = sadd.s32 %s360, %s358
        %s362 = smul.addr %s361, 8
        %s363 = scalar_lea.vmem %s8, %s362
        %p364 = pneg %p267
        %p365 = pneg %p264
        %s366 = sand.u32 %s254, 1
        %s367 = scalar_lea.sflag [#allocation6], %s366
        %s368 = sand.u32 %s254, 1
        %s369 = smul.addr %s368, 32
        %s370 = scalar_lea.vmem [#allocation5], %s369
        %p371 = scmp.lt.s32.totalorder %s28, 1
        %s372 = scalar_select %p371, %s28, 1
        %s373 = smul.addr %s372, 8
        %s374 = scalar_lea.vmem %s0, %s373
        %p375 = scmp.lt.s32.totalorder %s28, 1
        %s376 = scalar_select %p375, %s28, 1
        %p377 = scmp.lt.s32.totalorder %s29, 0
        %s378 = scalar_select %p377, %s29, 0
        %s379 = sadd.s32 %s378, %s376
        %s380 = smul.addr %s379, 8
        %s381 = scalar_lea.vmem %s1, %s380
        %p382 = scmp.lt.s32.totalorder %s28, 1
        %s383 = scalar_select %p382, %s28, 1
        %p384 = scmp.lt.s32.totalorder %s29, 0
        %s385 = scalar_select %p384, %s29, 0
        %s386 = sadd.s32 %s385, %s383
        %s387 = smul.addr %s386, 8
        %s388 = scalar_lea.vmem %s8, %s387
        %p390 = scmp.eq.s32.totalorder %s29, 0
        // Predicated region
        $region53: #{decoder_layer.3} parent=51 // pred_check
          %p391 = pneg %p390
        $region54: #{decoder_layer.3} parent=51 // pred_check_branch
          %393 = sbr.rel (%p391) target = $region56
        $region55: #{decoder_layer.3} parent=51 // pred_region
          %v394 = vld [vmem:[%s374] sm:$0xff]
          %v395 = vld [vmem:[%s2] sm:$0x1]
          %v396 = vld [vmem:[%s3] sm:$0x1]
          %vm397 = vcmask 261120
          %v398 = vsel %vm397, %v394, 0.0
          %399 = vadd.xlane.f32.xlu0 %v398
          %v400 = vpop.xlane.xlu0 %399
          %v401 = vrcp.pop 32.0
          %v402 = vmul.f32 %v400, %v401
          %v403 = vsub.f32 %v394, %v402
          %v404 = vmul.f32 %v403, %v403
          %v405 = vsel %vm397, %v404, 0.0
          %406 = vadd.xlane.f32.xlu0 %v405
          %v407 = vpop.xlane.xlu0 %406
          %v408 = vmul.f32 %v407, %v401
          %v409 = vadd.f32 %v408, 1e-05
          %v410 = vrsqrt.pop %v409
          %v411 = vmul.f32 %v403, %v410
          %v413 = vlaneseq
          %v414 = vshrl.u32 %v413, 7
          %v415 = vsub.s32 0, %v414
          %v416 = vrot.slane %v395, %v415
          %v418 = vmul.f32 %v411, %v416
          %v420 = vlaneseq
          %v421 = vshrl.u32 %v420, 7
          %v422 = vsub.s32 0, %v421
          %v423 = vrot.slane %v396, %v422
          %v425 = vadd.f32 %v418, %v423
          %v426 = vpack.c.bf16 %v425, %v425
          %v427 = vld [vmem:[%s4] sm:$0xf]
          %v428 = vld [vmem:[%s4 + $0x4] sm:$0xf]
          %v429 = vld [vmem:[%s4 + $0x8] sm:$0xf]
          %v430 = vld [vmem:[%s4 + $0xc] sm:$0xf]
          %v431 = vld [vmem:[%s5] sm:$0x1]
          %v433 = vlaneseq
          %v434 = vshrl.u32 %v433, 7
          %v435 = vsub.s32 0, %v434
          %v436 = vrot.slane %v431, %v435
          %v442 = vunpack.c.l.b16 %v427
          %v443 = vunpack.c.l.b16 %v428
          %v444 = vunpack.c.l.b16 %v429
          %v445 = vunpack.c.l.b16 %v430
          %v446 = vpack.c.b16 %v443, %v442
          %v447 = vpack.c.b16 %v445, %v444
          %v451 = vsel %vm397, %v426, 0
          %453 = vmatprep.subr.bf16.mxu0 0
          %454 = vmatpush1.bf16.msra.mxu0 %v446
          %455 = vmatprep.subr.bf16.mxu0 0
          %456 = vmatpush1.bf16.msra.mxu0 %v447
          %457 = vmatprep.subr.bf16.mxu0 0
          %458 = vmatpush1.bf16.msra.mxu0 0
          %459 = vmatprep.subr.bf16.mxu0 0
          %460 = vmatpush1.bf16.msra.mxu0 0
          %461 = vmatprep.subr.bf16.mxu0 0
          %462 = vmatpush1.bf16.msra.mxu0 0
          %463 = vmatprep.subr.bf16.mxu0 0
          %464 = vmatpush1.bf16.msra.mxu0 0
          %465 = vmatprep.subr.bf16.mxu0 0
          %466 = vmatpush1.bf16.msra.mxu0 0
          %467 = vmatprep.subr.bf16.mxu0 0
          %468 = vmatpush1.bf16.msra.mxu0 0
          %469 = vmatprep.subr.bf16.mxu0 0
          %470 = vmatpush1.bf16.msra.mxu0 0
          %471 = vmatprep.subr.bf16.mxu0 0
          %472 = vmatpush1.bf16.msra.mxu0 0
          %473 = vmatprep.subr.bf16.mxu0 0
          %474 = vmatpush1.bf16.msra.mxu0 0
          %475 = vmatprep.subr.bf16.mxu0 0
          %476 = vmatpush1.bf16.msra.mxu0 0
          %477 = vmatprep.subr.bf16.mxu0 0
          %478 = vmatpush1.bf16.msra.mxu0 0
          %479 = vmatprep.subr.bf16.mxu0 0
          %480 = vmatpush1.bf16.msra.mxu0 0
          %481 = vmatprep.subr.bf16.mxu0 0
          %482 = vmatpush1.bf16.msra.mxu0 0
          %483 = vmatprep.subr.bf16.mxu0 0
          %484 = vmatpush1.bf16.msra.mxu0 0
          %485 = vmatprep.mubr.bf16.mxu0 0
          %486 = vmatmul.mubr.bf16.gmra.mrb[0].mxu0 %v451
          %v487 = vpop.f32.mrb[0].mxu0
          %v488 = vadd.f32 %v436, %v487
          %v489 = vpop.f32.mrb[0].mxu0
          %v490 = vpop.f32.mrb[0].mxu0
          %v491 = vpop.f32.mrb[0].mxu0
          %492 = vdwg.mxu0
          %v493 = vmul.f32 %v488, 0.35355338
          %v494 = vpack.c.bf16 %v493, %v493
          %vm495 = vcmask 257024
          %496 = vst.msk [vmem:[#allocation2] sm:$0xf] %vm495, %v494
          %v497 = vpack.c.bf16 %v488, %v488
          %v499 = vunpack.c.l.b16 %v497
          %v500 = vpack.c.b16 %v499, %v499
          %501 = vrot.lane.b32.xlu0 %v500, 96
          %v502 = vpop.permute.xlu0 %501
          %504 = vst.msk [vmem:[#allocation3] sm:$0xf] %vm495, %v502
          %505 = vrot.lane.b32.xlu0 %v500, 64
          %v506 = vpop.permute.xlu0 %505
          %508 = vst.msk [vmem:[#allocation4] sm:$0xf] %vm495, %v506
        $region56: #{decoder_layer.3} parent=51 // pred_fallthru
          _
        %s509 = smul.u32 %s29, 8
        %s510 = sshra.s32 %s509, 3
        %s511 = sand.u32 %s509, 7
        %s512 = smul.addr %s510, 4
        %s513 = scalar_lea.vmem [#allocation2], %s512
        %v514 = vld [vmem:[%s513] sm:$0xf]
        %v515 = vld [vmem:[%s381] sm:$0xff]
        %vm516 = vcmp.eq.f32.partialorder %v515, 0.0
        %s517 = scalar_lea.vmem %s374, %s509
        %v518 = vld [vmem:[%s517] sm:$0xff]
        %v519 = vld [vmem:[#allocation3] sm:$0xf]
        %v520 = vld [vmem:[#allocation4] sm:$0xf]
        %v521 = vld [vmem:[%s6] sm:$0xf]
        %v522 = vld [vmem:[%s6 + $0x4] sm:$0xf]
        %v523 = vld [vmem:[%s6 + $0x8] sm:$0xf]
        %v524 = vld [vmem:[%s6 + $0xc] sm:$0xf]
        %v525 = vld [vmem:[%s7] sm:$0x1]
        %vm526 = vcmask 64512
        %v528 = vsel %vm526, %v514, 0
        %v531 = vsel %vm526, %v519, 0
        %533 = vmatprep.subr.bf16.mxu0 0
        %534 = vmatpush1.bf16.xpose.msra.mxu0 %v531
        %535 = vmatprep.subr.bf16.mxu0 0
        %536 = vmatpush1.bf16.xpose.msra.mxu0 0
        %537 = vmatprep.subr.bf16.mxu0 0
        %538 = vmatpush1.bf16.xpose.msra.mxu0 0
        %539 = vmatprep.subr.bf16.mxu0 0
        %540 = vmatpush1.bf16.xpose.msra.mxu0 0
        %541 = vmatprep.subr.bf16.mxu0 0
        %542 = vmatpush1.bf16.xpose.msra.mxu0 0
        %543 = vmatprep.subr.bf16.mxu0 0
        %544 = vmatpush1.bf16.xpose.msra.mxu0 0
        %545 = vmatprep.subr.bf16.mxu0 0
        %546 = vmatpush1.bf16.xpose.msra.mxu0 0
        %547 = vmatprep.subr.bf16.mxu0 0
        %548 = vmatpush1.bf16.xpose.msra.mxu0 0
        %549 = vmatprep.subr.bf16.mxu0 0
        %550 = vmatpush1.bf16.xpose.msra.mxu0 0
        %551 = vmatprep.subr.bf16.mxu0 0
        %552 = vmatpush1.bf16.xpose.msra.mxu0 0
        %553 = vmatprep.subr.bf16.mxu0 0
        %554 = vmatpush1.bf16.xpose.msra.mxu0 0
        %555 = vmatprep.subr.bf16.mxu0 0
        %556 = vmatpush1.bf16.xpose.msra.mxu0 0
        %557 = vmatprep.subr.bf16.mxu0 0
        %558 = vmatpush1.bf16.xpose.msra.mxu0 0
        %559 = vmatprep.subr.bf16.mxu0 0
        %560 = vmatpush1.bf16.xpose.msra.mxu0 0
        %561 = vmatprep.subr.bf16.mxu0 0
        %562 = vmatpush1.bf16.xpose.msra.mxu0 0
        %563 = vmatprep.subr.bf16.mxu0 0
        %564 = vmatpush1.bf16.xpose.msra.mxu0 0
        %565 = vmatprep.mubr.bf16.mxu0 0
        %566 = vmatmul.mubr.bf16.gmra.mrb[0].mxu0 %v528
        %v567 = vpop.f32.mrb[0].mxu0
        %v568 = vadd.f32 0.0, %v567
        %v569 = vpop.f32.mrb[0].mxu0
        %v570 = vpop.f32.mrb[0].mxu0
        %v571 = vpop.f32.mrb[0].mxu0
        %572 = vdwg.mxu0
        %v573 = vsel %vm516, -1e+09, %v568
        %v574 = vsel %vm526, %v573, -inf
        %575 = vmax.xlane.f32.xlu0 %v574
        %v576 = vpop.xlane.xlu0 %575
        %v577 = vsub.f32 %v573, %v576
        %v578 = vmul.f32 %v577, 1.442695
        %v579 = vpow.pop %v578
        %v580 = vsel %vm526, %v579, 0.0
        %581 = vadd.xlane.f32.xlu0 %v580
        %v582 = vpop.xlane.xlu0 %581
        %v583 = vrcp.pop %v582
        %v584 = vmul.f32 %v579, %v583
        %585 = vst.msk [vmem:[%s370] sm:$0xff] %vm526, %v584
        %v586 = vpack.c.bf16 %v584, %v584
        %v588 = vsel %vm526, %v586, 0
        %vm590 = vcmask 1043456
        %v592 = vsel %vm590, %v520, 0
        %594 = vmatprep.subr.bf16.mxu0 0
        %595 = vmatpush1.bf16.msra.mxu0 %v592
        %596 = vmatprep.subr.bf16.mxu0 0
        %597 = vmatpush1.bf16.msra.mxu0 0
        %598 = vmatprep.subr.bf16.mxu0 0
        %599 = vmatpush1.bf16.msra.mxu0 0
        %600 = vmatprep.subr.bf16.mxu0 0
        %601 = vmatpush1.bf16.msra.mxu0 0
        %602 = vmatprep.subr.bf16.mxu0 0
        %603 = vmatpush1.bf16.msra.mxu0 0
        %604 = vmatprep.subr.bf16.mxu0 0
        %605 = vmatpush1.bf16.msra.mxu0 0
        %606 = vmatprep.subr.bf16.mxu0 0
        %607 = vmatpush1.bf16.msra.mxu0 0
        %608 = vmatprep.subr.bf16.mxu0 0
        %609 = vmatpush1.bf16.msra.mxu0 0
        %610 = vmatprep.subr.bf16.mxu0 0
        %611 = vmatpush1.bf16.msra.mxu0 0
        %612 = vmatprep.subr.bf16.mxu0 0
        %613 = vmatpush1.bf16.msra.mxu0 0
        %614 = vmatprep.subr.bf16.mxu0 0
        %615 = vmatpush1.bf16.msra.mxu0 0
        %616 = vmatprep.subr.bf16.mxu0 0
        %617 = vmatpush1.bf16.msra.mxu0 0
        %618 = vmatprep.subr.bf16.mxu0 0
        %619 = vmatpush1.bf16.msra.mxu0 0
        %620 = vmatprep.subr.bf16.mxu0 0
        %621 = vmatpush1.bf16.msra.mxu0 0
        %622 = vmatprep.subr.bf16.mxu0 0
        %623 = vmatpush1.bf16.msra.mxu0 0
        %624 = vmatprep.subr.bf16.mxu0 0
        %625 = vmatpush1.bf16.msra.mxu0 0
        %626 = vmatprep.mubr.bf16.mxu0 0
        %627 = vmatmul.mubr.bf16.gmra.mrb[0].mxu0 %v588
        %v628 = vpop.f32.mrb[0].mxu0
        %v629 = vadd.f32 0.0, %v628
        %v630 = vpop.f32.mrb[0].mxu0
        %v631 = vpop.f32.mrb[0].mxu0
        %v632 = vpop.f32.mrb[0].mxu0
        %633 = vdwg.mxu0
        %v635 = vunpack.c.l.b16 %v514
        %v636 = vpack.c.b16 %v635, %v635
        %637 = vrot.lane.b32.xlu0 %v636, 120
        %v638 = vpop.permute.xlu0 %637
        %v640 = vunpack.c.l.b16 %v519
        %v641 = vpack.c.b16 %v640, %v640
        %642 = vrot.lane.b32.xlu0 %v641, 120
        %v643 = vpop.permute.xlu0 %642
        %v645 = vsel %vm526, %v638, 0
        %v648 = vsel %vm526, %v643, 0
        %650 = vmatprep.subr.bf16.mxu0 0
        %651 = vmatpush1.bf16.xpose.msra.mxu0 %v648
        %652 = vmatprep.subr.bf16.mxu0 0
        %653 = vmatpush1.bf16.xpose.msra.mxu0 0
        %654 = vmatprep.subr.bf16.mxu0 0
        %655 = vmatpush1.bf16.xpose.msra.mxu0 0
        %656 = vmatprep.subr.bf16.mxu0 0
        %657 = vmatpush1.bf16.xpose.msra.mxu0 0
        %658 = vmatprep.subr.bf16.mxu0 0
        %659 = vmatpush1.bf16.xpose.msra.mxu0 0
        %660 = vmatprep.subr.bf16.mxu0 0
        %661 = vmatpush1.bf16.xpose.msra.mxu0 0
        %662 = vmatprep.subr.bf16.mxu0 0
        %663 = vmatpush1.bf16.xpose.msra.mxu0 0
        %664 = vmatprep.subr.bf16.mxu0 0
        %665 = vmatpush1.bf16.xpose.msra.mxu0 0
        %666 = vmatprep.subr.bf16.mxu0 0
        %667 = vmatpush1.bf16.xpose.msra.mxu0 0
        %668 = vmatprep.subr.bf16.mxu0 0
        %669 = vmatpush1.bf16.xpose.msra.mxu0 0
        %670 = vmatprep.subr.bf16.mxu0 0
        %671 = vmatpush1.bf16.xpose.msra.mxu0 0
        %672 = vmatprep.subr.bf16.mxu0 0
        %673 = vmatpush1.bf16.xpose.msra.mxu0 0
        %674 = vmatprep.subr.bf16.mxu0 0
        %675 = vmatpush1.bf16.xpose.msra.mxu0 0
        %676 = vmatprep.subr.bf16.mxu0 0
        %677 = vmatpush1.bf16.xpose.msra.mxu0 0
        %678 = vmatprep.subr.bf16.mxu0 0
        %679 = vmatpush1.bf16.xpose.msra.mxu0 0
        %680 = vmatprep.subr.bf16.mxu0 0
        %681 = vmatpush1.bf16.xpose.msra.mxu0 0
        %682 = vmatprep.mubr.bf16.mxu0 0
        %683 = vmatmul.mubr.bf16.gmra.mrb[0].mxu0 %v645
        %v684 = vpop.f32.mrb[0].mxu0
        %v685 = vadd.f32 0.0, %v684
        %v686 = vpop.f32.mrb[0].mxu0
        %v687 = vpop.f32.mrb[0].mxu0
        %v688 = vpop.f32.mrb[0].mxu0
        %689 = vdwg.mxu0
        %v690 = vsel %vm516, -1e+09, %v685
        %v691 = vsel %vm526, %v690, -inf
        %692 = vmax.xlane.f32.xlu0 %v691
        %v693 = vpop.xlane.xlu0 %692
        %v694 = vsub.f32 %v690, %v693
        %v695 = vmul.f32 %v694, 1.442695
        %v696 = vpow.pop %v695
        %v697 = vsel %vm526, %v696, 0.0
        %698 = vadd.xlane.f32.xlu0 %v697
        %v699 = vpop.xlane.xlu0 %698
        %v700 = vrcp.pop %v699
        %v701 = vmul.f32 %v696, %v700
        %s702 = scalar_lea.vmem %s370, 8 [#allocation5]
        %703 = vst.msk [vmem:[%s702] sm:$0xff] %vm526, %v701
        %v704 = vpack.c.bf16 %v701, %v701
        %v706 = vunpack.c.l.b16 %v520
        %v707 = vpack.c.b16 %v706, %v706
        %708 = vrot.lane.b32.xlu0 %v707, 120
        %v709 = vpop.permute.xlu0 %708
        %v711 = vsel %vm526, %v704, 0
        %v714 = vsel %vm590, %v709, 0
        %716 = vmatprep.subr.bf16.mxu0 0
        %717 = vmatpush1.bf16.msra.mxu0 %v714
        %718 = vmatprep.subr.bf16.mxu0 0
        %719 = vmatpush1.bf16.msra.mxu0 0
        %720 = vmatprep.subr.bf16.mxu0 0
        %721 = vmatpush1.bf16.msra.mxu0 0
        %722 = vmatprep.subr.bf16.mxu0 0
        %723 = vmatpush1.bf16.msra.mxu0 0
        %724 = vmatprep.subr.bf16.mxu0 0
        %725 = vmatpush1.bf16.msra.mxu0 0
        %726 = vmatprep.subr.bf16.mxu0 0
        %727 = vmatpush1.bf16.msra.mxu0 0
        %728 = vmatprep.subr.bf16.mxu0 0
        %729 = vmatpush1.bf16.msra.mxu0 0
        %730 = vmatprep.subr.bf16.mxu0 0
        %731 = vmatpush1.bf16.msra.mxu0 0
        %732 = vmatprep.subr.bf16.mxu0 0
        %733 = vmatpush1.bf16.msra.mxu0 0
        %734 = vmatprep.subr.bf16.mxu0 0
        %735 = vmatpush1.bf16.msra.mxu0 0
        %736 = vmatprep.subr.bf16.mxu0 0
        %737 = vmatpush1.bf16.msra.mxu0 0
        %738 = vmatprep.subr.bf16.mxu0 0
        %739 = vmatpush1.bf16.msra.mxu0 0
        %740 = vmatprep.subr.bf16.mxu0 0
        %741 = vmatpush1.bf16.msra.mxu0 0
        %742 = vmatprep.subr.bf16.mxu0 0
        %743 = vmatpush1.bf16.msra.mxu0 0
        %744 = vmatprep.subr.bf16.mxu0 0
        %745 = vmatpush1.bf16.msra.mxu0 0
        %746 = vmatprep.subr.bf16.mxu0 0
        %747 = vmatpush1.bf16.msra.mxu0 0
        %748 = vmatprep.mubr.bf16.mxu0 0
        %749 = vmatmul.mubr.bf16.gmra.mrb[0].mxu0 %v711
        %v750 = vpop.f32.mrb[0].mxu0
        %v751 = vadd.f32 0.0, %v750
        %v752 = vpop.f32.mrb[0].mxu0
        %v753 = vpop.f32.mrb[0].mxu0
        %v754 = vpop.f32.mrb[0].mxu0
        %755 = vdwg.mxu0
        %756 = vrot.lane.b32.xlu0 %v636, 112
        %v757 = vpop.permute.xlu0 %756
        %758 = vrot.lane.b32.xlu0 %v641, 112
        %v759 = vpop.permute.xlu0 %758
        %v761 = vsel %vm526, %v757, 0
        %v764 = vsel %vm526, %v759, 0
        %766 = vmatprep.subr.bf16.mxu0 0
        %767 = vmatpush1.bf16.xpose.msra.mxu0 %v764
        %768 = vmatprep.subr.bf16.mxu0 0
        %769 = vmatpush1.bf16.xpose.msra.mxu0 0
        %770 = vmatprep.subr.bf16.mxu0 0
        %771 = vmatpush1.bf16.xpose.msra.mxu0 0
        %772 = vmatprep.subr.bf16.mxu0 0
        %773 = vmatpush1.bf16.xpose.msra.mxu0 0
        %774 = vmatprep.subr.bf16.mxu0 0
        %775 = vmatpush1.bf16.xpose.msra.mxu0 0
        %776 = vmatprep.subr.bf16.mxu0 0
        %777 = vmatpush1.bf16.xpose.msra.mxu0 0
        %778 = vmatprep.subr.bf16.mxu0 0
        %779 = vmatpush1.bf16.xpose.msra.mxu0 0
        %780 = vmatprep.subr.bf16.mxu0 0
        %781 = vmatpush1.bf16.xpose.msra.mxu0 0
        %782 = vmatprep.subr.bf16.mxu0 0
        %783 = vmatpush1.bf16.xpose.msra.mxu0 0
        %784 = vmatprep.subr.bf16.mxu0 0
        %785 = vmatpush1.bf16.xpose.msra.mxu0 0
        %786 = vmatprep.subr.bf16.mxu0 0
        %787 = vmatpush1.bf16.xpose.msra.mxu0 0
        %788 = vmatprep.subr.bf16.mxu0 0
        %789 = vmatpush1.bf16.xpose.msra.mxu0 0
        %790 = vmatprep.subr.bf16.mxu0 0
        %791 = vmatpush1.bf16.xpose.msra.mxu0 0
        %792 = vmatprep.subr.bf16.mxu0 0
        %793 = vmatpush1.bf16.xpose.msra.mxu0 0
        %794 = vmatprep.subr.bf16.mxu0 0
        %795 = vmatpush1.bf16.xpose.msra.mxu0 0
        %796 = vmatprep.subr.bf16.mxu0 0
        %797 = vmatpush1.bf16.xpose.msra.mxu0 0
        %798 = vmatprep.mubr.bf16.mxu0 0
        %799 = vmatmul.mubr.bf16.gmra.mrb[0].mxu0 %v761
        %v800 = vpop.f32.mrb[0].mxu0
        %v801 = vadd.f32 0.0, %v800
        %v802 = vpop.f32.mrb[0].mxu0
        %v803 = vpop.f32.mrb[0].mxu0
        %v804 = vpop.f32.mrb[0].mxu0
        %805 = vdwg.mxu0
        %v806 = vsel %vm516, -1e+09, %v801
        %v807 = vsel %vm526, %v806, -inf
        %808 = vmax.xlane.f32.xlu0 %v807
        %v809 = vpop.xlane.xlu0 %808
        %v810 = vsub.f32 %v806, %v809
        %v811 = vmul.f32 %v810, 1.442695
        %v812 = vpow.pop %v811
        %v813 = vsel %vm526, %v812, 0.0
        %814 = vadd.xlane.f32.xlu0 %v813
        %v815 = vpop.xlane.xlu0 %814
        %v816 = vrcp.pop %v815
        %v817 = vmul.f32 %v812, %v816
        %s818 = scalar_lea.vmem %s370, 16 [#allocation5]
        %819 = vst.msk [vmem:[%s818] sm:$0xff] %vm526, %v817
        %v820 = vpack.c.bf16 %v817, %v817
        %821 = vrot.lane.b32.xlu0 %v707, 112
        %v822 = vpop.permute.xlu0 %821
        %v824 = vsel %vm526, %v820, 0
        %v827 = vsel %vm590, %v822, 0
        %829 = vmatprep.subr.bf16.mxu0 0
        %830 = vmatpush1.bf16.msra.mxu0 %v827
        %831 = vmatprep.subr.bf16.mxu0 0
        %832 = vmatpush1.bf16.msra.mxu0 0
        %833 = vmatprep.subr.bf16.mxu0 0
        %834 = vmatpush1.bf16.msra.mxu0 0
        %835 = vmatprep.subr.bf16.mxu0 0
        %836 = vmatpush1.bf16.msra.mxu0 0
        %837 = vmatprep.subr.bf16.mxu0 0
        %838 = vmatpush1.bf16.msra.mxu0 0
        %839 = vmatprep.subr.bf16.mxu0 0
        %840 = vmatpush1.bf16.msra.mxu0 0
        %841 = vmatprep.subr.bf16.mxu0 0
        %842 = vmatpush1.bf16.msra.mxu0 0
        %843 = vmatprep.subr.bf16.mxu0 0
        %844 = vmatpush1.bf16.msra.mxu0 0
        %845 = vmatprep.subr.bf16.mxu0 0
        %846 = vmatpush1.bf16.msra.mxu0 0
        %847 = vmatprep.subr.bf16.mxu0 0
        %848 = vmatpush1.bf16.msra.mxu0 0
        %849 = vmatprep.subr.bf16.mxu0 0
        %850 = vmatpush1.bf16.msra.mxu0 0
        %851 = vmatprep.subr.bf16.mxu0 0
        %852 = vmatpush1.bf16.msra.mxu0 0
        %853 = vmatprep.subr.bf16.mxu0 0
        %854 = vmatpush1.bf16.msra.mxu0 0
        %855 = vmatprep.subr.bf16.mxu0 0
        %856 = vmatpush1.bf16.msra.mxu0 0
        %857 = vmatprep.subr.bf16.mxu0 0
        %858 = vmatpush1.bf16.msra.mxu0 0
        %859 = vmatprep.subr.bf16.mxu0 0
        %860 = vmatpush1.bf16.msra.mxu0 0
        %861 = vmatprep.mubr.bf16.mxu0 0
        %862 = vmatmul.mubr.bf16.gmra.mrb[0].mxu0 %v824
        %v863 = vpop.f32.mrb[0].mxu0
        %v864 = vadd.f32 0.0, %v863
        %v865 = vpop.f32.mrb[0].mxu0
        %v866 = vpop.f32.mrb[0].mxu0
        %v867 = vpop.f32.mrb[0].mxu0
        %868 = vdwg.mxu0
        %869 = vrot.lane.b32.xlu0 %v636, 104
        %v870 = vpop.permute.xlu0 %869
        %871 = vrot.lane.b32.xlu0 %v641, 104
        %v872 = vpop.permute.xlu0 %871
        %v874 = vsel %vm526, %v870, 0
        %v877 = vsel %vm526, %v872, 0
        %879 = vmatprep.subr.bf16.mxu0 0
        %880 = vmatpush1.bf16.xpose.msra.mxu0 %v877
        %881 = vmatprep.subr.bf16.mxu0 0
        %882 = vmatpush1.bf16.xpose.msra.mxu0 0
        %883 = vmatprep.subr.bf16.mxu0 0
        %884 = vmatpush1.bf16.xpose.msra.mxu0 0
        %885 = vmatprep.subr.bf16.mxu0 0
        %886 = vmatpush1.bf16.xpose.msra.mxu0 0
        %887 = vmatprep.subr.bf16.mxu0 0
        %888 = vmatpush1.bf16.xpose.msra.mxu0 0
        %889 = vmatprep.subr.bf16.mxu0 0
        %890 = vmatpush1.bf16.xpose.msra.mxu0 0
        %891 = vmatprep.subr.bf16.mxu0 0
        %892 = vmatpush1.bf16.xpose.msra.mxu0 0
        %893 = vmatprep.subr.bf16.mxu0 0
        %894 = vmatpush1.bf16.xpose.msra.mxu0 0
        %895 = vmatprep.subr.bf16.mxu0 0
        %896 = vmatpush1.bf16.xpose.msra.mxu0 0
        %897 = vmatprep.subr.bf16.mxu0 0
        %898 = vmatpush1.bf16.xpose.msra.mxu0 0
        %899 = vmatprep.subr.bf16.mxu0 0
        %900 = vmatpush1.bf16.xpose.msra.mxu0 0
        %901 = vmatprep.subr.bf16.mxu0 0
        %902 = vmatpush1.bf16.xpose.msra.mxu0 0
        %903 = vmatprep.subr.bf16.mxu0 0
        %904 = vmatpush1.bf16.xpose.msra.mxu0 0
        %905 = vmatprep.subr.bf16.mxu0 0
        %906 = vmatpush1.bf16.xpose.msra.mxu0 0
        %907 = vmatprep.subr.bf16.mxu0 0
        %908 = vmatpush1.bf16.xpose.msra.mxu0 0
        %909 = vmatprep.subr.bf16.mxu0 0
        %910 = vmatpush1.bf16.xpose.msra.mxu0 0
        %911 = vmatprep.mubr.bf16.mxu0 0
        %912 = vmatmul.mubr.bf16.gmra.mrb[0].mxu0 %v874
        %v913 = vpop.f32.mrb[0].mxu0
        %v914 = vadd.f32 0.0, %v913
        %v915 = vpop.f32.mrb[0].mxu0
        %v916 = vpop.f32.mrb[0].mxu0
        %v917 = vpop.f32.mrb[0].mxu0
        %918 = vdwg.mxu0
        %v919 = vsel %vm516, -1e+09, %v914
        %v920 = vsel %vm526, %v919, -inf
        %921 = vmax.xlane.f32.xlu0 %v920
        %v922 = vpop.xlane.xlu0 %921
        %v923 = vsub.f32 %v919, %v922
        %v924 = vmul.f32 %v923, 1.442695
        %v925 = vpow.pop %v924
        %v926 = vsel %vm526, %v925, 0.0
        %927 = vadd.xlane.f32.xlu0 %v926
        %v928 = vpop.xlane.xlu0 %927
        %v929 = vrcp.pop %v928
        %v930 = vmul.f32 %v925, %v929
        %s931 = scalar_lea.vmem %s370, 24 [#allocation5]
        %932 = vst.msk [vmem:[%s931] sm:$0xff] %vm526, %v930
        %v933 = vpack.c.bf16 %v930, %v930
        %934 = vrot.lane.b32.xlu0 %v707, 104
        %v935 = vpop.permute.xlu0 %934
        %v937 = vsel %vm526, %v933, 0
        %v940 = vsel %vm590, %v935, 0
        %942 = vmatprep.subr.bf16.mxu0 0
        %943 = vmatpush1.bf16.msra.mxu0 %v940
        %944 = vmatprep.subr.bf16.mxu0 0
        %945 = vmatpush1.bf16.msra.mxu0 0
        %946 = vmatprep.subr.bf16.mxu0 0
        %947 = vmatpush1.bf16.msra.mxu0 0
        %948 = vmatprep.subr.bf16.mxu0 0
        %949 = vmatpush1.bf16.msra.mxu0 0
        %950 = vmatprep.subr.bf16.mxu0 0
        %951 = vmatpush1.bf16.msra.mxu0 0
        %952 = vmatprep.subr.bf16.mxu0 0
        %953 = vmatpush1.bf16.msra.mxu0 0
        %954 = vmatprep.subr.bf16.mxu0 0
        %955 = vmatpush1.bf16.msra.mxu0 0
        %956 = vmatprep.subr.bf16.mxu0 0
        %957 = vmatpush1.bf16.msra.mxu0 0
        %958 = vmatprep.subr.bf16.mxu0 0
        %959 = vmatpush1.bf16.msra.mxu0 0
        %960 = vmatprep.subr.bf16.mxu0 0
        %961 = vmatpush1.bf16.msra.mxu0 0
        %962 = vmatprep.subr.bf16.mxu0 0
        %963 = vmatpush1.bf16.msra.mxu0 0
        %964 = vmatprep.subr.bf16.mxu0 0
        %965 = vmatpush1.bf16.msra.mxu0 0
        %966 = vmatprep.subr.bf16.mxu0 0
        %967 = vmatpush1.bf16.msra.mxu0 0
        %968 = vmatprep.subr.bf16.mxu0 0
        %969 = vmatpush1.bf16.msra.mxu0 0
        %970 = vmatprep.subr.bf16.mxu0 0
        %971 = vmatpush1.bf16.msra.mxu0 0
        %972 = vmatprep.subr.bf16.mxu0 0
        %973 = vmatpush1.bf16.msra.mxu0 0
        %974 = vmatprep.mubr.bf16.mxu0 0
        %975 = vmatmul.mubr.bf16.gmra.mrb[0].mxu0 %v937
        %v976 = vpop.f32.mrb[0].mxu0
        %v977 = vadd.f32 0.0, %v976
        %v978 = vpop.f32.mrb[0].mxu0
        %v979 = vpop.f32.mrb[0].mxu0
        %v980 = vpop.f32.mrb[0].mxu0
        %981 = vdwg.mxu0
        %983 = vrot.lane.b32.xlu0 %v751, 8
        %v984 = vpop.permute.xlu0 %983
        %987 = vrot.lane.b32.xlu0 %v864, 16
        %v988 = vpop.permute.xlu0 %987
        %991 = vrot.lane.b32.xlu0 %v977, 24
        %v992 = vpop.permute.xlu0 %991
        %v994 = vsel %vm526, %v629, %v984
        %vm995 = vcmask 130048
        %v996 = vsel %vm995, %v994, %v988
        %vm997 = vcmask 195584
        %v998 = vsel %vm997, %v996, %v992
        %v999 = vpack.c.bf16 %v998, %v998
        %v1001 = vlaneseq
        %v1002 = vshrl.u32 %v1001, 7
        %v1003 = vsub.s32 0, %v1002
        %v1004 = vrot.slane %v525, %v1003
        %v1006 = vadd.f32 %v518, %v1004
        %v1011 = vunpack.c.l.b16 %v521
        %v1012 = vunpack.c.l.b16 %v522
        %v1013 = vunpack.c.l.b16 %v523
        %v1014 = vunpack.c.l.b16 %v524
        %v1015 = vpack.c.b16 %v1012, %v1011
        %v1016 = vpack.c.b16 %v1014, %v1013
        %vm1019 = vcmask 261120
        %v1021 = vsel %vm1019, %v999, 0
        %1023 = vmatprep.subr.bf16.mxu0 0
        %1024 = vmatpush1.bf16.msra.mxu0 %v1015
        %1025 = vmatprep.subr.bf16.mxu0 0
        %1026 = vmatpush1.bf16.msra.mxu0 %v1016
        %1027 = vmatprep.subr.bf16.mxu0 0
        %1028 = vmatpush1.bf16.msra.mxu0 0
        %1029 = vmatprep.subr.bf16.mxu0 0
        %1030 = vmatpush1.bf16.msra.mxu0 0
        %1031 = vmatprep.subr.bf16.mxu0 0
        %1032 = vmatpush1.bf16.msra.mxu0 0
        %1033 = vmatprep.subr.bf16.mxu0 0
        %1034 = vmatpush1.bf16.msra.mxu0 0
        %1035 = vmatprep.subr.bf16.mxu0 0
        %1036 = vmatpush1.bf16.msra.mxu0 0
        %1037 = vmatprep.subr.bf16.mxu0 0
        %1038 = vmatpush1.bf16.msra.mxu0 0
        %1039 = vmatprep.subr.bf16.mxu0 0
        %1040 = vmatpush1.bf16.msra.mxu0 0
        %1041 = vmatprep.subr.bf16.mxu0 0
        %1042 = vmatpush1.bf16.msra.mxu0 0
        %1043 = vmatprep.subr.bf16.mxu0 0
        %1044 = vmatpush1.bf16.msra.mxu0 0
        %1045 = vmatprep.subr.bf16.mxu0 0
        %1046 = vmatpush1.bf16.msra.mxu0 0
        %1047 = vmatprep.subr.bf16.mxu0 0
        %1048 = vmatpush1.bf16.msra.mxu0 0
        %1049 = vmatprep.subr.bf16.mxu0 0
        %1050 = vmatpush1.bf16.msra.mxu0 0
        %1051 = vmatprep.subr.bf16.mxu0 0
        %1052 = vmatpush1.bf16.msra.mxu0 0
        %1053 = vmatprep.subr.bf16.mxu0 0
        %1054 = vmatpush1.bf16.msra.mxu0 0
        %1055 = vmatprep.mubr.bf16.mxu0 0
        %1056 = vmatmul.mubr.bf16.gmra.mrb[0].mxu0 %v1021
        %v1057 = vpop.f32.mrb[0].mxu0
        %v1058 = vadd.f32 0.0, %v1057
        %v1059 = vpop.f32.mrb[0].mxu0
        %v1060 = vpop.f32.mrb[0].mxu0
        %v1061 = vpop.f32.mrb[0].mxu0
        %1062 = vdwg.mxu0
        %v1063 = vadd.f32 %v1006, %v1058
        %1064 = vst.msk [vmem:[%s388] sm:$0xff] %vm1019, %v1063
        %p1065 = scmp.lt.s32.totalorder %s28, 1
        %s1066 = scalar_select %p1065, %s28, 1
        %p1067 = scmp.lt.s32.totalorder %s29, 0
        %s1068 = scalar_select %p1067, %s29, 0
        %s1069 = sadd.s32 %s1068, %s1066
        %s1070 = smul.addr %s1069, 8
        %s1071 = scalar_lea.vmem %s8, %s1070
        %s1072 = sand.u32 %s254, 1
        %s1073 = scalar_lea.sflag [#allocation6], %s1072
        %s1074 = sand.u32 %s254, 1
        %s1075 = smul.addr %s1074, 32
        %s1076 = scalar_lea.vmem [#allocation5], %s1075
        // Predicated region
        $region57: #{decoder_layer.3} parent=51 // pred_check
          %p1077 = pneg %p236
        $region58: #{decoder_layer.3} parent=51 // pred_check_branch
          %1079 = sbr.rel (%p1077) target = $region60
        $region59: #{decoder_layer.3} parent=51 // pred_region
          _
        $region60: #{decoder_layer.3} parent=51 // pred_fallthru
          _
        // Predicated region
        $region61: #{decoder_layer.3} parent=51 // pred_check
          %p1080 = pneg %p264
        $region62: #{decoder_layer.3} parent=51 // pred_check_branch
          %1082 = sbr.rel (%p1080) target = $region64
        $region63: #{decoder_layer.3} parent=51 // pred_region
          %s1084 = ssub.s32 512, 512
          %1085 = vsyncadd %s1073, %s1084
          %s1086 = smul.addr %s28, 4
          %s1087 = sadd.s32 %s29, %s1086
          %s1088 = smul.addr %s1087, 128
          %s1089 = scalar_lea.hbm %s9, %s1088
          %s1090 = sshll.u32 %s1076, 4
          %s1091 = int_to_ptr.vmem [resolvable:$true] %s1090
          %1096 = dma.vmem_to_hbm [thread:$0]  %s1091, 512, %s1089, %s1073, 128, 128, 8
        $region64: #{decoder_layer.3} parent=51 // pred_fallthru
          _
      $region52: #{decoder_layer.3} parent=5 // pred_fallthru
        _
      %p1097 = scmp.le.s32.totalorder 2, %s19
      // Predicated region
      $region65: #{decoder_layer.3} parent=5 // pred_check
        %p1098 = pneg %p1097
      $region66: #{decoder_layer.3} parent=5 // pred_check_branch
        %1100 = sbr.rel (%p1098) target = $region68
      $region67: #{decoder_layer.3} parent=5 // pred_region
        %s1101 = ssub.s32 %s19, 2
        // Predicated region
        $region69: #{decoder_layer.3} parent=67 // pred_check
          %p1102 = pneg %p242
        $region70: #{decoder_layer.3} parent=67 // pred_check_branch
          %1104 = sbr.rel (%p1102) target = $region72
        $region71: #{decoder_layer.3} parent=67 // pred_region
          %p1105 = scmp.lt.s32.totalorder %s30, 1
          %s1106 = scalar_select %p1105, %s30, 1
          %p1107 = scmp.lt.s32.totalorder %s31, 0
          %s1108 = scalar_select %p1107, %s31, 0
          %s1109 = sadd.s32 %s1108, %s1106
          %s1110 = smul.addr %s1109, 8
          %s1111 = scalar_lea.vmem %s8, %s1110
        $region72: #{decoder_layer.3} parent=67 // pred_fallthru
          _
        // Predicated region
        $region73: #{decoder_layer.3} parent=67 // pred_check
          %p1112 = pneg %p270
        $region74: #{decoder_layer.3} parent=67 // pred_check_branch
          %1114 = sbr.rel (%p1112) target = $region76
        $region75: #{decoder_layer.3} parent=67 // pred_region
          %s1115 = sand.u32 %s255, 1
          %s1116 = scalar_lea.sflag [#allocation6], %s1115
          %s1117 = sand.u32 %s255, 1
          %s1118 = smul.addr %s1117, 32
          %s1119 = scalar_lea.vmem [#allocation5], %s1118
          %1120 = dma.done %s1116, 512
        $region76: #{decoder_layer.3} parent=67 // pred_fallthru
          _
      $region68: #{decoder_layer.3} parent=5 // pred_fallthru
        _
    $region6: #{decoder_layer.3} parent=1 // loop_footer
      %s23 = sadd.s32 1, %s19
    $region7: #{decoder_layer.3} parent=1 // loop_footer_branch
      %18 = sbr.rel target = $region3
    $region8: #{decoder_layer.3} parent=1 // loop_exit
      _
    %1121 = vsyncpa [#allocation6], 1
    %s1122 = scalar_lea.sflag [#allocation6], 1
    %1123 = vsyncpa %s1122, 1

// kernel: decoder_layer.4
$region0: #{decoder_layer.4}
  #allocation0 [shape = 'u32[]', space=smem, size = 0x4, offset = 0x4, fixed_abs, tag = 'smem constant byte address 0x4 - core index']
  #allocation1 [shape = 'u32[144,128]{1,0:T(1,128)}', space=vmem, size = 0x12000, scoped, tag = 'internal scratch']
  #allocation2 [shape = 'bf16[8,32]{1,0:T(8,128)(2,1)}', space=vmem, size = 0x800, scoped, tag = 'scratch operand']
  #allocation3 [shape = 'bf16[8,32]{1,0:T(8,128)(2,1)}', space=vmem, size = 0x800, scoped, tag = 'scratch operand']
  %s0 = inlined_call_operand.vmem [shape: f32[2,8,32], index: 0, kind: input, shape index: {}]
  %s1 = inlined_call_operand.vmem [shape: f32[2,8,32], index: 1, kind: input, shape index: {}]
  %s2 = inlined_call_operand.vmem [shape: f32[2,1,8], index: 2, kind: input, shape index: {}]
  %s3 = inlined_call_operand.vmem [shape: f32[1,32], index: 3, kind: input, shape index: {}]
  %s4 = inlined_call_operand.vmem [shape: f32[1,32], index: 4, kind: input, shape index: {}]
  %s5 = inlined_call_operand.vmem [shape: bf16[32,32], index: 5, kind: input, shape index: {}]
  %s6 = inlined_call_operand.vmem [shape: f32[1,32], index: 6, kind: input, shape index: {}]
  %s7 = inlined_call_operand.vmem [shape: bf16[32,64], index: 7, kind: input, shape index: {}]
  %s8 = inlined_call_operand.vmem [shape: f32[1,64], index: 8, kind: input, shape index: {}]
  %s9 = inlined_call_operand.vmem [shape: bf16[32,32], index: 9, kind: input, shape index: {}]
  %s10 = inlined_call_operand.vmem [shape: f32[1,32], index: 10, kind: input, shape index: {}]
  %s11 = inlined_call_operand.vmem [shape: f32[2,8,32], index: 11, kind: output, shape index: {0}]
  %s12 = inlined_call_operand.hbm [shape: f32[2,4,8,8], index: 12, kind: output, shape index: {1}]
  %13 = xla_tuple %s11, %s12
  %s14 = sld [smem:[#allocation0]]
  $region89: #{decoder_layer.4} parent=0
    _
  %s16 = ssub.s32 1, %s14
  %s17 = scalar_select 0, %s16, %s14
  $region1: #{decoder_layer.4} parent=0
    #allocation4 [shape = 'u8[32768]{0}', space=vmem, size = 0x8000, scoped, tag = 'output window, operand 1']
    #allocation5 [shape = 's32[2]{0}', space=sflag, size = 0x8, scoped, tag = 'scoped memory for decoder_layer.4']
    %18 = vsyncpa [#allocation5], 0
    %s19 = scalar_lea.sflag [#allocation5], 1
    %20 = vsyncpa %s19, 0
    loop: start=0, step=1, limit=4
    $region2: #{decoder_layer.4} parent=1 // loop_pre_header
      _
    $region3: #{decoder_layer.4} parent=1 // loop_header
      %s22 = sphi 0, %s26
      %p23 = scmp.ge.s32.totalorder %s22, 4
      %s29 = sphi 0, %s41
      %s30 = sphi 0, %s37
      %s31 = sphi 0, %s29
      %s32 = sphi 0, %s30
      %s33 = sphi 0, %s31
      %s34 = sphi 0, %s32
      %s46 = sphi 0, %s48
      %s49 = sphi 0, %s46
      %s50 = sphi 0, %s49
      %s66 = sphi 0, %s50
      %s72 = sphi 0, %s74
      %s75 = sphi 0, %s72
      %s76 = sphi 0, %s75
      %s92 = sphi 0, %s76
      %s98 = sphi 0, %s100
      %s101 = sphi 0, %s98
      %s102 = sphi 0, %s101
      %s118 = sphi 0, %s102
      %s122 = sphi 0, %s122
      %s124 = sphi 0, %s122
      %s125 = sphi 0, %s124
      %s139 = sphi 0, %s125
      %s143 = sphi 0, %s143
      %s145 = sphi 0, %s143
      %s146 = sphi 0, %s145
      %s160 = sphi 0, %s146
      %s164 = sphi 0, %s164
      %s166 = sphi 0, %s164
      %s167 = sphi 0, %s166
      %s181 = sphi 0, %s167
      %s185 = sphi 0, %s185
      %s187 = sphi 0, %s185
      %s188 = sphi 0, %s187
      %s202 = sphi 0, %s188
      %s206 = sphi 0, %s206
      %s208 = sphi 0, %s206
      %s209 = sphi 0, %s208
      %s223 = sphi 0, %s209
      %s227 = sphi 0, %s227
      %s229 = sphi 0, %s227
      %s230 = sphi 0, %s229
      %s244 = sphi 0, %s230
      %s248 = sphi 0, %s248
      %s250 = sphi 0, %s248
      %s251 = sphi 0, %s250
      %s265 = sphi 0, %s251
      %s269 = sphi 0, %s269
      %s271 = sphi 0, %s269
      %s272 = sphi 0, %s271
      %s286 = sphi 0, %s272
      %s294 = sphi 0, %s296
      %s297 = sphi 0, %s294
      %s298 = sphi 0, %s297
      %s314 = sphi 0, %s298
      %s322 = sphi 0, %s324
      %s325 = sphi 0, %s322
      %s326 = sphi 0, %s325
      %s342 = sphi 0, %s326
    $region4: #{decoder_layer.4} parent=1 // loop_header_branch
      %25 = sbr.rel (%p23) target = $region8
    $region5: #{decoder_layer.4} parent=1 // loop_body
      %s27 = ssub.s32 %s22, 1
      %s28 = ssub.s32 %s22, 2
      %s35 = sadd.s32 1, %s30
      %p36 = scmp.ge.s32.totalorder %s35, 1
      %s37 = scalar_select %p36, 0, %s35
      %s38 = sadd.s32 1, %s29
      %s39 = scalar_select %p36, %s38, %s29
      %p40 = scmp.ge.s32.totalorder %s39, 2
      %s41 = scalar_select %p40, 0, %s39
      %s42 = ssub.s32 %s29, %s41
      %s43 = ssub.s32 %s30, %s37
      %s44 = sor.u32 %s42, %s43
      %p45 = scmp.eq.s32.totalorder %s44, 0
      %s47 = sadd.s32 %s46, 1
      %s48 = scalar_select %p45, %s46, %s47
      %p51 = pneg %p45
      %p52 = scmp.eq.s32.totalorder %s22, 1
      %p53 = por %p51, %p52
      %p54 = scmp.ne.s32.totalorder %s46, %s49
      %p55 = scmp.eq.s32.totalorder %s22, 0
      %p56 = por %p54, %p55
      %p57 = scmp.ne.s32.totalorder %s46, %s49
      %p58 = scmp.eq.s32.totalorder %s27, 1
      %p59 = por %p57, %p58
      %p60 = scmp.ne.s32.totalorder %s49, %s50
      %p61 = scmp.eq.s32.totalorder %s27, 0
      %p62 = por %p60, %p61
      %p63 = scmp.ne.s32.totalorder %s49, %s50
      %p64 = scmp.eq.s32.totalorder %s28, 1
      %p65 = por %p63, %p64
      %p67 = scmp.ne.s32.totalorder %s50, %s66
      %p68 = scmp.eq.s32.totalorder %s28, 0
      %p69 = por %p67, %p68
      %s70 = ssub.s32 %s29, %s41
      %p71 = scmp.eq.s32.totalorder %s70, 0
      %s73 = sadd.s32 %s72, 1
      %s74 = scalar_select %p71, %s72, %s73
      %p77 = pneg %p71
      %p78 = scmp.eq.s32.totalorder %s22, 1
      %p79 = por %p77, %p78
      %p80 = scmp.ne.s32.totalorder %s72, %s75
      %p81 = scmp.eq.s32.totalorder %s22, 0
      %p82 = por %p80, %p81
      %p83 = scmp.ne.s32.totalorder %s72, %s75
      %p84 = scmp.eq.s32.totalorder %s27, 1
      %p85 = por %p83, %p84
      %p86 = scmp.ne.s32.totalorder %s75, %s76
      %p87 = scmp.eq.s32.totalorder %s27, 0
      %p88 = por %p86, %p87
      %p89 = scmp.ne.s32.totalorder %s75, %s76
      %p90 = scmp.eq.s32.totalorder %s28, 1
      %p91 = por %p89, %p90
      %p93 = scmp.ne.s32.totalorder %s76, %s92
      %p94 = scmp.eq.s32.totalorder %s28, 0
      %p95 = por %p93, %p94
      %s96 = ssub.s32 %s29, %s41
      %p97 = scmp.eq.s32.totalorder %s96, 0
      %s99 = sadd.s32 %s98, 1
      %s100 = scalar_select %p97, %s98, %s99
      %p103 = pneg %p97
      %p104 = scmp.eq.s32.totalorder %s22, 1
      %p105 = por %p103, %p104
      %p106 = scmp.ne.s32.totalorder %s98, %s101
      %p107 = scmp.eq.s32.totalorder %s22, 0
      %p108 = por %p106, %p107
      %p109 = scmp.ne.s32.totalorder %s98, %s101
      %p110 = scmp.eq.s32.totalorder %s27, 1
      %p111 = por %p109, %p110
      %p112 = scmp.ne.s32.totalorder %s101, %s102
      %p113 = scmp.eq.s32.totalorder %s27, 0
      %p114 = por %p112, %p113
      %p115 = scmp.ne.s32.totalorder %s101, %s102
      %p116 = scmp.eq.s32.totalorder %s28, 1
      %p117 = por %p115, %p116
      %p119 = scmp.ne.s32.totalorder %s102, %s118
      %p120 = scmp.eq.s32.totalorder %s28, 0
      %p121 = por %p119, %p120
      %s123 = sadd.s32 %s122, 1
      %p126 = scmp.eq.s32.totalorder %s22, 1
      %p127 = scmp.ne.s32.totalorder %s122, %s124
      %p128 = scmp.eq.s32.totalorder %s22, 0
      %p129 = por %p127, %p128
      %p130 = scmp.ne.s32.totalorder %s122, %s124
      %p131 = scmp.eq.s32.totalorder %s27, 1
      %p132 = por %p130, %p131
      %p133 = scmp.ne.s32.totalorder %s124, %s125
      %p134 = scmp.eq.s32.totalorder %s27, 0
      %p135 = por %p133, %p134
      %p136 = scmp.ne.s32.totalorder %s124, %s125
      %p137 = scmp.eq.s32.totalorder %s28, 1
      %p138 = por %p136, %p137
      %p140 = scmp.ne.s32.totalorder %s125, %s139
      %p141 = scmp.eq.s32.totalorder %s28, 0
      %p142 = por %p140, %p141
      %s144 = sadd.s32 %s143, 1
      %p147 = scmp.eq.s32.totalorder %s22, 1
      %p148 = scmp.ne.s32.totalorder %s143, %s145
      %p149 = scmp.eq.s32.totalorder %s22, 0
      %p150 = por %p148, %p149
      %p151 = scmp.ne.s32.totalorder %s143, %s145
      %p152 = scmp.eq.s32.totalorder %s27, 1
      %p153 = por %p151, %p152
      %p154 = scmp.ne.s32.totalorder %s145, %s146
      %p155 = scmp.eq.s32.totalorder %s27, 0
      %p156 = por %p154, %p155
      %p157 = scmp.ne.s32.totalorder %s145, %s146
      %p158 = scmp.eq.s32.totalorder %s28, 1
      %p159 = por %p157, %p158
      %p161 = scmp.ne.s32.totalorder %s146, %s160
      %p162 = scmp.eq.s32.totalorder %s28, 0
      %p163 = por %p161, %p162
      %s165 = sadd.s32 %s164, 1
      %p168 = scmp.eq.s32.totalorder %s22, 1
      %p169 = scmp.ne.s32.totalorder %s164, %s166
      %p170 = scmp.eq.s32.totalorder %s22, 0
      %p171 = por %p169, %p170
      %p172 = scmp.ne.s32.totalorder %s164, %s166
      %p173 = scmp.eq.s32.totalorder %s27, 1
      %p174 = por %p172, %p173
      %p175 = scmp.ne.s32.totalorder %s166, %s167
      %p176 = scmp.eq.s32.totalorder %s27, 0
      %p177 = por %p175, %p176
      %p178 = scmp.ne.s32.totalorder %s166, %s167
      %p179 = scmp.eq.s32.totalorder %s28, 1
      %p180 = por %p178, %p179
      %p182 = scmp.ne.s32.totalorder %s167, %s181
      %p183 = scmp.eq.s32.totalorder %s28, 0
      %p184 = por %p182, %p183
      %s186 = sadd.s32 %s185, 1
      %p189 = scmp.eq.s32.totalorder %s22, 1
      %p190 = scmp.ne.s32.totalorder %s185, %s187
      %p191 = scmp.eq.s32.totalorder %s22, 0
      %p192 = por %p190, %p191
      %p193 = scmp.ne.s32.totalorder %s185, %s187
      %p194 = scmp.eq.s32.totalorder %s27, 1
      %p195 = por %p193, %p194
      %p196 = scmp.ne.s32.totalorder %s187, %s188
      %p197 = scmp.eq.s32.totalorder %s27, 0
      %p198 = por %p196, %p197
      %p199 = scmp.ne.s32.totalorder %s187, %s188
      %p200 = scmp.eq.s32.totalorder %s28, 1
      %p201 = por %p199, %p200
      %p203 = scmp.ne.s32.totalorder %s188, %s202
      %p204 = scmp.eq.s32.totalorder %s28, 0
      %p205 = por %p203, %p204
      %s207 = sadd.s32 %s206, 1
      %p210 = scmp.eq.s32.totalorder %s22, 1
      %p211 = scmp.ne.s32.totalorder %s206, %s208
      %p212 = scmp.eq.s32.totalorder %s22, 0
      %p213 = por %p211, %p212
      %p214 = scmp.ne.s32.totalorder %s206, %s208
      %p215 = scmp.eq.s32.totalorder %s27, 1
      %p216 = por %p214, %p215
      %p217 = scmp.ne.s32.totalorder %s208, %s209
      %p218 = scmp.eq.s32.totalorder %s27, 0
      %p219 = por %p217, %p218
      %p220 = scmp.ne.s32.totalorder %s208, %s209
      %p221 = scmp.eq.s32.totalorder %s28, 1
      %p222 = por %p220, %p221
      %p224 = scmp.ne.s32.totalorder %s209, %s223
      %p225 = scmp.eq.s32.totalorder %s28, 0
      %p226 = por %p224, %p225
      %s228 = sadd.s32 %s227, 1
      %p231 = scmp.eq.s32.totalorder %s22, 1
      %p232 = scmp.ne.s32.totalorder %s227, %s229
      %p233 = scmp.eq.s32.totalorder %s22, 0
      %p234 = por %p232, %p233
      %p235 = scmp.ne.s32.totalorder %s227, %s229
      %p236 = scmp.eq.s32.totalorder %s27, 1
      %p237 = por %p235, %p236
      %p238 = scmp.ne.s32.totalorder %s229, %s230
      %p239 = scmp.eq.s32.totalorder %s27, 0
      %p240 = por %p238, %p239
      %p241 = scmp.ne.s32.totalorder %s229, %s230
      %p242 = scmp.eq.s32.totalorder %s28, 1
      %p243 = por %p241, %p242
      %p245 = scmp.ne.s32.totalorder %s230, %s244
      %p246 = scmp.eq.s32.totalorder %s28, 0
      %p247 = por %p245, %p246
      %s249 = sadd.s32 %s248, 1
      %p252 = scmp.eq.s32.totalorder %s22, 1
      %p253 = scmp.ne.s32.totalorder %s248, %s250
      %p254 = scmp.eq.s32.totalorder %s22, 0
      %p255 = por %p253, %p254
      %p256 = scmp.ne.s32.totalorder %s248, %s250
      %p257 = scmp.eq.s32.totalorder %s27, 1
      %p258 = por %p256, %p257
      %p259 = scmp.ne.s32.totalorder %s250, %s251
      %p260 = scmp.eq.s32.totalorder %s27, 0
      %p261 = por %p259, %p260
      %p262 = scmp.ne.s32.totalorder %s250, %s251
      %p263 = scmp.eq.s32.totalorder %s28, 1
      %p264 = por %p262, %p263
      %p266 = scmp.ne.s32.totalorder %s251, %s265
      %p267 = scmp.eq.s32.totalorder %s28, 0
      %p268 = por %p266, %p267
      %s270 = sadd.s32 %s269, 1
      %p273 = scmp.eq.s32.totalorder %s22, 1
      %p274 = scmp.ne.s32.totalorder %s269, %s271
      %p275 = scmp.eq.s32.totalorder %s22, 0
      %p276 = por %p274, %p275
      %p277 = scmp.ne.s32.totalorder %s269, %s271
      %p278 = scmp.eq.s32.totalorder %s27, 1
      %p279 = por %p277, %p278
      %p280 = scmp.ne.s32.totalorder %s271, %s272
      %p281 = scmp.eq.s32.totalorder %s27, 0
      %p282 = por %p280, %p281
      %p283 = scmp.ne.s32.totalorder %s271, %s272
      %p284 = scmp.eq.s32.totalorder %s28, 1
      %p285 = por %p283, %p284
      %p287 = scmp.ne.s32.totalorder %s272, %s286
      %p288 = scmp.eq.s32.totalorder %s28, 0
      %p289 = por %p287, %p288
      %s290 = ssub.s32 %s29, %s41
      %s291 = ssub.s32 %s30, %s37
      %s292 = sor.u32 %s290, %s291
      %p293 = scmp.eq.s32.totalorder %s292, 0
      %s295 = sadd.s32 %s294, 1
      %s296 = scalar_select %p293, %s294, %s295
      %p299 = pneg %p293
      %p300 = scmp.eq.s32.totalorder %s22, 1
      %p301 = por %p299, %p300
      %p302 = scmp.ne.s32.totalorder %s294, %s297
      %p303 = scmp.eq.s32.totalorder %s22, 0
      %p304 = por %p302, %p303
      %p305 = scmp.ne.s32.totalorder %s294, %s297
      %p306 = scmp.eq.s32.totalorder %s27, 1
      %p307 = por %p305, %p306
      %p308 = scmp.ne.s32.totalorder %s297, %s298
      %p309 = scmp.eq.s32.totalorder %s27, 0
      %p310 = por %p308, %p309
      %p311 = scmp.ne.s32.totalorder %s297, %s298
      %p312 = scmp.eq.s32.totalorder %s28, 1
      %p313 = por %p311, %p312
      %p315 = scmp.ne.s32.totalorder %s298, %s314
      %p316 = scmp.eq.s32.totalorder %s28, 0
      %p317 = por %p315, %p316
      %s318 = ssub.s32 %s29, %s41
      %s319 = ssub.s32 %s30, %s37
      %s320 = sor.u32 %s318, %s319
      %p321 = scmp.eq.s32.totalorder %s320, 0
      %s323 = sadd.s32 %s322, 1
      %s324 = scalar_select %p321, %s322, %s323
      %p327 = pneg %p321
      %p328 = scmp.eq.s32.totalorder %s22, 1
      %p329 = por %p327, %p328
      %p330 = scmp.ne.s32.totalorder %s322, %s325
      %p331 = scmp.eq.s32.totalorder %s22, 0
      %p332 = por %p330, %p331
      %p333 = scmp.ne.s32.totalorder %s322, %s325
      %p334 = scmp.eq.s32.totalorder %s27, 1
      %p335 = por %p333, %p334
      %p336 = scmp.ne.s32.totalorder %s325, %s326
      %p337 = scmp.eq.s32.totalorder %s27, 0
      %p338 = por %p336, %p337
      %p339 = scmp.ne.s32.totalorder %s325, %s326
      %p340 = scmp.eq.s32.totalorder %s28, 1
      %p341 = por %p339, %p340
      %p343 = scmp.ne.s32.totalorder %s326, %s342
      %p344 = scmp.eq.s32.totalorder %s28, 0
      %p345 = por %p343, %p344
      %p346 = scmp.le.s32.totalorder 1, %s22
      %p347 = scmp.lt.s32.totalorder %s22, 3
      %p348 = pnand %p346, %p347
      %p349 = pneg %p348
      // Predicated region
      $region9: #{decoder_layer.4} parent=5 // pred_check
        _
      $region10: #{decoder_layer.4} parent=5 // pred_check_branch
        %351 = sbr.rel (%p348) target = $region12
      $region11: #{decoder_layer.4} parent=5 // pred_region
        %s352 = ssub.s32 %s22, 1
        // Predicated region
        $region13: #{decoder_layer.4} parent=11 // pred_check
          %p353 = pneg %p135
        $region14: #{decoder_layer.4} parent=11 // pred_check_branch
          %355 = sbr.rel (%p353) target = $region16
        $region15: #{decoder_layer.4} parent=11 // pred_region
          _
        $region16: #{decoder_layer.4} parent=11 // pred_fallthru
          _
        // Predicated region
        $region17: #{decoder_layer.4} parent=11 // pred_check
          %p356 = pneg %p156
        $region18: #{decoder_layer.4} parent=11 // pred_check_branch
          %358 = sbr.rel (%p356) target = $region20
        $region19: #{decoder_layer.4} parent=11 // pred_region
          _
        $region20: #{decoder_layer.4} parent=11 // pred_fallthru
          _
        // Predicated region
        $region21: #{decoder_layer.4} parent=11 // pred_check
          %p359 = pneg %p177
        $region22: #{decoder_layer.4} parent=11 // pred_check_branch
          %361 = sbr.rel (%p359) target = $region24
        $region23: #{decoder_layer.4} parent=11 // pred_region
          _
        $region24: #{decoder_layer.4} parent=11 // pred_fallthru
          _
        // Predicated region
        $region25: #{decoder_layer.4} parent=11 // pred_check
          %p362 = pneg %p198
        $region26: #{decoder_layer.4} parent=11 // pred_check_branch
          %364 = sbr.rel (%p362) target = $region28
        $region27: #{decoder_layer.4} parent=11 // pred_region
          _
        $region28: #{decoder_layer.4} parent=11 // pred_fallthru
          _
        // Predicated region
        $region29: #{decoder_layer.4} parent=11 // pred_check
          %p365 = pneg %p219
        $region30: #{decoder_layer.4} parent=11 // pred_check_branch
          %367 = sbr.rel (%p365) target = $region32
        $region31: #{decoder_layer.4} parent=11 // pred_region
          _
        $region32: #{decoder_layer.4} parent=11 // pred_fallthru
          _
        // Predicated region
        $region33: #{decoder_layer.4} parent=11 // pred_check
          %p368 = pneg %p240
        $region34: #{decoder_layer.4} parent=11 // pred_check_branch
          %370 = sbr.rel (%p368) target = $region36
        $region35: #{decoder_layer.4} parent=11 // pred_region
          _
        $region36: #{decoder_layer.4} parent=11 // pred_fallthru
          _
        // Predicated region
        $region37: #{decoder_layer.4} parent=11 // pred_check
          %p371 = pneg %p261
        $region38: #{decoder_layer.4} parent=11 // pred_check_branch
          %373 = sbr.rel (%p371) target = $region40
        $region39: #{decoder_layer.4} parent=11 // pred_region
          _
        $region40: #{decoder_layer.4} parent=11 // pred_fallthru
          _
        // Predicated region
        $region41: #{decoder_layer.4} parent=11 // pred_check
          %p374 = pneg %p282
        $region42: #{decoder_layer.4} parent=11 // pred_check_branch
          %376 = sbr.rel (%p374) target = $region44
        $region43: #{decoder_layer.4} parent=11 // pred_region
          _
        $region44: #{decoder_layer.4} parent=11 // pred_fallthru
          _
      $region12: #{decoder_layer.4} parent=5 // pred_fallthru
        _
      %p377 = scmp.lt.s32.totalorder %s22, 2
      // Predicated region
      $region45: #{decoder_layer.4} parent=5 // pred_check
        %p378 = pneg %p377
      $region46: #{decoder_layer.4} parent=5 // pred_check_branch
        %380 = sbr.rel (%p378) target = $region48
      $region47: #{decoder_layer.4} parent=5 // pred_region
        // Predicated region
        $region49: #{decoder_layer.4} parent=47 // pred_check
          %p381 = pneg %p56
        $region50: #{decoder_layer.4} parent=47 // pred_check_branch
          %383 = sbr.rel (%p381) target = $region52
        $region51: #{decoder_layer.4} parent=47 // pred_region
          %p384 = scmp.lt.s32.totalorder %s29, 1
          %s385 = scalar_select %p384, %s29, 1
          %p386 = scmp.lt.s32.totalorder %s30, 0
          %s387 = scalar_select %p386, %s30, 0
          %s388 = sadd.s32 %s387, %s385
          %s389 = smul.addr %s388, 8
          %s390 = scalar_lea.vmem %s0, %s389
        $region52: #{decoder_layer.4} parent=47 // pred_fallthru
          _
        // Predicated region
        $region53: #{decoder_layer.4} parent=47 // pred_check
          %p391 = pneg %p82
        $region54: #{decoder_layer.4} parent=47 // pred_check_branch
          %393 = sbr.rel (%p391) target = $region56
        $region55: #{decoder_layer.4} parent=47 // pred_region
          %p394 = scmp.lt.s32.totalorder %s29, 1
          %s395 = scalar_select %p394, %s29, 1
          %s396 = smul.addr %s395, 8
          %s397 = scalar_lea.vmem %s1, %s396
        $region56: #{decoder_layer.4} parent=47 // pred_fallthru
          _
        // Predicated region
        $region57: #{decoder_layer.4} parent=47 // pred_check
          %p398 = pneg %p108
        $region58: #{decoder_layer.4} parent=47 // pred_check_branch
          %400 = sbr.rel (%p398) target = $region60
        $region59: #{decoder_layer.4} parent=47 // pred_region
          %p401 = scmp.lt.s32.totalorder %s29, 1
          %s402 = scalar_select %p401, %s29, 1
          %s403 = scalar_lea.vmem %s2, %s402
        $region60: #{decoder_layer.4} parent=47 // pred_fallthru
          _
      $region48: #{decoder_layer.4} parent=5 // pred_fallthru
        _
      %p404 = scmp.le.s32.totalorder 1, %s22
      %p405 = scmp.lt.s32.totalorder %s22, 3
      %p406 = pnand %p404, %p405
      %p407 = pneg %p406
      // Predicated region
      $region61: #{decoder_layer.4} parent=5 // pred_check
        _
      $region62: #{decoder_layer.4} parent=5 // pred_check_branch
        %409 = sbr.rel (%p406) target = $region64
      $region63: #{decoder_layer.4} parent=5 // pred_region
        %s410 = ssub.s32 %s22, 1
        %p411 = scmp.lt.s32.totalorder %s31, 1
        %s412 = scalar_select %p411, %s31, 1
        %p413 = scmp.lt.s32.totalorder %s32, 0
        %s414 = scalar_select %p413, %s32, 0
        %s415 = sadd.s32 %s414, %s412
        %s416 = smul.addr %s415, 8
        %s417 = scalar_lea.vmem %s0, %s416
        %p418 = pneg %p62
        %p419 = pneg %p59
        %p420 = scmp.lt.s32.totalorder %s31, 1
        %s421 = scalar_select %p420, %s31, 1
        %s422 = smul.addr %s421, 8
        %s423 = scalar_lea.vmem %s1, %s422
        %p424 = pneg %p88
        %p425 = pneg %p85
        %p426 = scmp.lt.s32.totalorder %s31, 1
        %s427 = scalar_select %p426, %s31, 1
        %s428 = scalar_lea.vmem %s2, %s427
        %p429 = pneg %p114
        %p430 = pneg %p111
        %p431 = pneg %p135
        %p432 = pneg %p132
        %p433 = pneg %p156
        %p434 = pneg %p153
        %p435 = pneg %p177
        %p436 = pneg %p174
        %p437 = pneg %p198
        %p438 = pneg %p195
        %p439 = pneg %p219
        %p440 = pneg %p216
        %p441 = pneg %p240
        %p442 = pneg %p237
        %p443 = pneg %p261
        %p444 = pneg %p258
        %p445 = pneg %p282
        %p446 = pneg %p279
        %p447 = pneg %p310
        %p448 = pneg %p307
        %p449 = scmp.lt.s32.totalorder %s31, 1
        %s450 = scalar_select %p449, %s31, 1
        %p451 = scmp.lt.s32.totalorder %s32, 0
        %s452 = scalar_select %p451, %s32, 0
        %s453 = sadd.s32 %s452, %s450
        %s454 = smul.addr %s453, 8
        %s455 = scalar_lea.vmem %s11, %s454
        %p456 = pneg %p338
        %p457 = pneg %p335
        %s458 = sand.u32 %s325, 1
        %s459 = scalar_lea.sflag [#allocation5], %s458
        %s460 = sand.u32 %s325, 1
        %s461 = smul.addr %s460, 32
        %s462 = scalar_lea.vmem [#allocation4], %s461
        %p463 = scmp.lt.s32.totalorder %s31, 1
        %s464 = scalar_select %p463, %s31, 1
        %p465 = scmp.lt.s32.totalorder %s32, 0
        %s466 = scalar_select %p465, %s32, 0
        %s467 = sadd.s32 %s466, %s464
        %s468 = smul.addr %s467, 8
        %s469 = scalar_lea.vmem %s0, %s468
        %p470 = scmp.lt.s32.totalorder %s31, 1
        %s471 = scalar_select %p470, %s31, 1
        %s472 = smul.addr %s471, 8
        %s473 = scalar_lea.vmem %s1, %s472
        %p474 = scmp.lt.s32.totalorder %s31, 1
        %s475 = scalar_select %p474, %s31, 1
        %s476 = scalar_lea.vmem %s2, %s475
        %p477 = scmp.lt.s32.totalorder %s31, 1
        %s478 = scalar_select %p477, %s31, 1
        %p479 = scmp.lt.s32.totalorder %s32, 0
        %s480 = scalar_select %p479, %s32, 0
        %s481 = sadd.s32 %s480, %s478
        %s482 = smul.addr %s481, 8
        %s483 = scalar_lea.vmem %s11, %s482
        %p485 = scmp.eq.s32.totalorder %s32, 0
        // Predicated region
        $region65: #{decoder_layer.4} parent=63 // pred_check
          %p486 = pneg %p485
        $region66: #{decoder_layer.4} parent=63 // pred_check_branch
          %488 = sbr.rel (%p486) target = $region68
        $region67: #{decoder_layer.4} parent=63 // pred_region
          %v489 = vld [vmem:[%s473] sm:$0xff]
          %v490 = vpack.c.bf16 %v489, %v489
          %v491 = vld [vmem:[%s7] sm:$0xf]
          %v492 = vld [vmem:[%s7 + $0x4] sm:$0xf]
          %v493 = vld [vmem:[%s7 + $0x8] sm:$0xf]
          %v494 = vld [vmem:[%s7 + $0xc] sm:$0xf]
          %v495 = vld [vmem:[%s8] sm:$0x1]
          %v497 = vlaneseq
          %v498 = vshrl.u32 %v497, 7
          %v499 = vsub.s32 0, %v498
          %v500 = vrot.slane %v495, %v499
          %v506 = vunpack.c.l.b16 %v491
          %v507 = vunpack.c.l.b16 %v492
          %v508 = vunpack.c.l.b16 %v493
          %v509 = vunpack.c.l.b16 %v494
          %v510 = vpack.c.b16 %v507, %v506
          %v511 = vpack.c.b16 %v509, %v508
          %vm514 = vcmask 261120
          %v516 = vsel %vm514, %v490, 0
          %518 = vmatprep.subr.bf16.mxu0 0
          %519 = vmatpush1.bf16.msra.mxu0 %v510
          %520 = vmatprep.subr.bf16.mxu0 0
          %521 = vmatpush1.bf16.msra.mxu0 %v511
          %522 = vmatprep.subr.bf16.mxu0 0
          %523 = vmatpush1.bf16.msra.mxu0 0
          %524 = vmatprep.subr.bf16.mxu0 0
          %525 = vmatpush1.bf16.msra.mxu0 0
          %526 = vmatprep.subr.bf16.mxu0 0
          %527 = vmatpush1.bf16.msra.mxu0 0
          %528 = vmatprep.subr.bf16.mxu0 0
          %529 = vmatpush1.bf16.msra.mxu0 0
          %530 = vmatprep.subr.bf16.mxu0 0
          %531 = vmatpush1.bf16.msra.mxu0 0
          %532 = vmatprep.subr.bf16.mxu0 0
          %533 = vmatpush1.bf16.msra.mxu0 0
          %534 = vmatprep.subr.bf16.mxu0 0
          %535 = vmatpush1.bf16.msra.mxu0 0
          %536 = vmatprep.subr.bf16.mxu0 0
          %537 = vmatpush1.bf16.msra.mxu0 0
          %538 = vmatprep.subr.bf16.mxu0 0
          %539 = vmatpush1.bf16.msra.mxu0 0
          %540 = vmatprep.subr.bf16.mxu0 0
          %541 = vmatpush1.bf16.msra.mxu0 0
          %542 = vmatprep.subr.bf16.mxu0 0
          %543 = vmatpush1.bf16.msra.mxu0 0
          %544 = vmatprep.subr.bf16.mxu0 0
          %545 = vmatpush1.bf16.msra.mxu0 0
          %546 = vmatprep.subr.bf16.mxu0 0
          %547 = vmatpush1.bf16.msra.mxu0 0
          %548 = vmatprep.subr.bf16.mxu0 0
          %549 = vmatpush1.bf16.msra.mxu0 0
          %550 = vmatprep.mubr.bf16.mxu0 0
          %551 = vmatmul.mubr.bf16.gmra.mrb[0].mxu0 %v516
          %v552 = vpop.f32.mrb[0].mxu0
          %v553 = vadd.f32 %v500, %v552
          %v554 = vpop.f32.mrb[0].mxu0
          %v555 = vpop.f32.mrb[0].mxu0
          %v556 = vpop.f32.mrb[0].mxu0
          %557 = vdwg.mxu0
          %v558 = vpack.c.bf16 %v553, %v553
          %vm559 = vcmask 257024
          %560 = vst.msk [vmem:[#allocation2] sm:$0xf] %vm559, %v558
          %v562 = vunpack.c.l.b16 %v558
          %v563 = vpack.c.b16 %v562, %v562
          %564 = vrot.lane.b32.xlu0 %v563, 96
          %v565 = vpop.permute.xlu0 %564
          %567 = vst.msk [vmem:[#allocation3] sm:$0xf] %vm559, %v565
        $region68: #{decoder_layer.4} parent=63 // pred_fallthru
          _
        %v568 = vld [vmem:[%s469] sm:$0xff]
        %v569 = vld [vmem:[%s3] sm:$0x1]
        %v570 = vld [vmem:[%s4] sm:$0x1]
        %vm571 = vcmask 261120
        %v572 = vsel %vm571, %v568, 0.0
        %573 = vadd.xlane.f32.xlu0 %v572
        %v574 = vpop.xlane.xlu0 %573
        %v575 = vrcp.pop 32.0
        %v576 = vmul.f32 %v574, %v575
        %v577 = vsub.f32 %v568, %v576
        %v578 = vmul.f32 %v577, %v577
        %v579 = vsel %vm571, %v578, 0.0
        %580 = vadd.xlane.f32.xlu0 %v579
        %v581 = vpop.xlane.xlu0 %580
        %v582 = vmul.f32 %v581, %v575
        %v583 = vadd.f32 %v582, 1e-05
        %v584 = vrsqrt.pop %v583
        %v585 = vmul.f32 %v577, %v584
        %v587 = vlaneseq
        %v588 = vshrl.u32 %v587, 7
        %v589 = vsub.s32 0, %v588
        %v590 = vrot.slane %v569, %v589
        %v592 = vmul.f32 %v585, %v590
        %v594 = vlaneseq
        %v595 = vshrl.u32 %v594, 7
        %v596 = vsub.s32 0, %v595
        %v597 = vrot.slane %v570, %v596
        %v599 = vadd.f32 %v592, %v597
        %v600 = vpack.c.bf16 %v599, %v599
        %v601 = vld [vmem:[%s5] sm:$0xf]
        %v602 = vld [vmem:[%s5 + $0x4] sm:$0xf]
        %v603 = vld [vmem:[%s5 + $0x8] sm:$0xf]
        %v604 = vld [vmem:[%s5 + $0xc] sm:$0xf]
        %v605 = vld [vmem:[%s6] sm:$0x1]
        %v607 = vlaneseq
        %v608 = vshrl.u32 %v607, 7
        %v609 = vsub.s32 0, %v608
        %v610 = vrot.slane %v605, %v609
        %v616 = vunpack.c.l.b16 %v601
        %v617 = vunpack.c.l.b16 %v602
        %v618 = vunpack.c.l.b16 %v603
        %v619 = vunpack.c.l.b16 %v604
        %v620 = vpack.c.b16 %v617, %v616
        %v621 = vpack.c.b16 %v619, %v618
        %v625 = vsel %vm571, %v600, 0
        %627 = vmatprep.subr.bf16.mxu0 0
        %628 = vmatpush1.bf16.msra.mxu0 %v620
        %629 = vmatprep.subr.bf16.mxu0 0
        %630 = vmatpush1.bf16.msra.mxu0 %v621
        %631 = vmatprep.subr.bf16.mxu0 0
        %632 = vmatpush1.bf16.msra.mxu0 0
        %633 = vmatprep.subr.bf16.mxu0 0
        %634 = vmatpush1.bf16.msra.mxu0 0
        %635 = vmatprep.subr.bf16.mxu0 0
        %636 = vmatpush1.bf16.msra.mxu0 0
        %637 = vmatprep.subr.bf16.mxu0 0
        %638 = vmatpush1.bf16.msra.mxu0 0
        %639 = vmatprep.subr.bf16.mxu0 0
        %640 = vmatpush1.bf16.msra.mxu0 0
        %641 = vmatprep.subr.bf16.mxu0 0
        %642 = vmatpush1.bf16.msra.mxu0 0
        %643 = vmatprep.subr.bf16.mxu0 0
        %644 = vmatpush1.bf16.msra.mxu0 0
        %645 = vmatprep.subr.bf16.mxu0 0
        %646 = vmatpush1.bf16.msra.mxu0 0
        %647 = vmatprep.subr.bf16.mxu0 0
        %648 = vmatpush1.bf16.msra.mxu0 0
        %649 = vmatprep.subr.bf16.mxu0 0
        %650 = vmatpush1.bf16.msra.mxu0 0
        %651 = vmatprep.subr.bf16.mxu0 0
        %652 = vmatpush1.bf16.msra.mxu0 0
        %653 = vmatprep.subr.bf16.mxu0 0
        %654 = vmatpush1.bf16.msra.mxu0 0
        %655 = vmatprep.subr.bf16.mxu0 0
        %656 = vmatpush1.bf16.msra.mxu0 0
        %657 = vmatprep.subr.bf16.mxu0 0
        %658 = vmatpush1.bf16.msra.mxu0 0
        %659 = vmatprep.mubr.bf16.mxu0 0
        %660 = vmatmul.mubr.bf16.gmra.mrb[0].mxu0 %v625
        %v661 = vpop.f32.mrb[0].mxu0
        %v662 = vadd.f32 %v610, %v661
        %v663 = vpop.f32.mrb[0].mxu0
        %v664 = vpop.f32.mrb[0].mxu0
        %v665 = vpop.f32.mrb[0].mxu0
        %666 = vdwg.mxu0
        %v667 = vmul.f32 %v662, 0.35355338
        %v668 = vpack.c.bf16 %v667, %v667
        %v669 = vld [vmem:[%s476] sm:$0x1]
        %vm670 = vcmp.eq.f32.partialorder %v669, 0.0
        %v671 = vld [vmem:[#allocation2] sm:$0xf]
        %v672 = vld [vmem:[#allocation3] sm:$0xf]
        %v673 = vld [vmem:[%s9] sm:$0xf]
        %v674 = vld [vmem:[%s9 + $0x4] sm:$0xf]
        %v675 = vld [vmem:[%s9 + $0x8] sm:$0xf]
        %v676 = vld [vmem:[%s9 + $0xc] sm:$0xf]
        %v677 = vld [vmem:[%s10] sm:$0x1]
        %vm678 = vcmask 64512
        %v680 = vsel %vm678, %v668, 0
        %v683 = vsel %vm678, %v671, 0
        %685 = vmatprep.subr.bf16.mxu0 0
        %686 = vmatpush1.bf16.xpose.msra.mxu0 %v683
        %687 = vmatprep.subr.bf16.mxu0 0
        %688 = vmatpush1.bf16.xpose.msra.mxu0 0
        %689 = vmatprep.subr.bf16.mxu0 0
        %690 = vmatpush1.bf16.xpose.msra.mxu0 0
        %691 = vmatprep.subr.bf16.mxu0 0
        %692 = vmatpush1.bf16.xpose.msra.mxu0 0
        %693 = vmatprep.subr.bf16.mxu0 0
        %694 = vmatpush1.bf16.xpose.msra.mxu0 0
        %695 = vmatprep.subr.bf16.mxu0 0
        %696 = vmatpush1.bf16.xpose.msra.mxu0 0
        %697 = vmatprep.subr.bf16.mxu0 0
        %698 = vmatpush1.bf16.xpose.msra.mxu0 0
        %699 = vmatprep.subr.bf16.mxu0 0
        %700 = vmatpush1.bf16.xpose.msra.mxu0 0
        %701 = vmatprep.subr.bf16.mxu0 0
        %702 = vmatpush1.bf16.xpose.msra.mxu0 0
        %703 = vmatprep.subr.bf16.mxu0 0
        %704 = vmatpush1.bf16.xpose.msra.mxu0 0
        %705 = vmatprep.subr.bf16.mxu0 0
        %706 = vmatpush1.bf16.xpose.msra.mxu0 0
        %707 = vmatprep.subr.bf16.mxu0 0
        %708 = vmatpush1.bf16.xpose.msra.mxu0 0
        %709 = vmatprep.subr.bf16.mxu0 0
        %710 = vmatpush1.bf16.xpose.msra.mxu0 0
        %711 = vmatprep.subr.bf16.mxu0 0
        %712 = vmatpush1.bf16.xpose.msra.mxu0 0
        %713 = vmatprep.subr.bf16.mxu0 0
        %714 = vmatpush1.bf16.xpose.msra.mxu0 0
        %715 = vmatprep.subr.bf16.mxu0 0
        %716 = vmatpush1.bf16.xpose.msra.mxu0 0
        %717 = vmatprep.mubr.bf16.mxu0 0
        %718 = vmatmul.mubr.bf16.gmra.mrb[0].mxu0 %v680
        %v719 = vpop.f32.mrb[0].mxu0
        %v720 = vadd.f32 0.0, %v719
        %v721 = vpop.f32.mrb[0].mxu0
        %v722 = vpop.f32.mrb[0].mxu0
        %v723 = vpop.f32.mrb[0].mxu0
        %724 = vdwg.mxu0
        %v725 = vsel %vm670, 1, 0
        %v726 = vlaneseq
        %v727 = vshrl.u32 %v726, 7
        %v728 = vsub.s32 0, %v727
        %v729 = vrot.slane %v725, %v728
        %vm730 = vcmp.eq.s32.totalorder %v729, 1
        %v731 = vsel %vm730, -1e+09, %v720
        %v732 = vsel %vm678, %v731, -inf
        %733 = vmax.xlane.f32.xlu0 %v732
        %v734 = vpop.xlane.xlu0 %733
        %v735 = vsub.f32 %v731, %v734
        %v736 = vmul.f32 %v735, 1.442695
        %v737 = vpow.pop %v736
        %v738 = vsel %vm678, %v737, 0.0
        %739 = vadd.xlane.f32.xlu0 %v738
        %v740 = vpop.xlane.xlu0 %739
        %v741 = vrcp.pop %v740
        %v742 = vmul.f32 %v737, %v741
        %743 = vst.msk [vmem:[%s462] sm:$0xff] %vm678, %v742
        %v744 = vpack.c.bf16 %v742, %v742
        %v746 = vsel %vm678, %v744, 0
        %vm748 = vcmask 1043456
        %v750 = vsel %vm748, %v672, 0
        %752 = vmatprep.subr.bf16.mxu0 0
        %753 = vmatpush1.bf16.msra.mxu0 %v750
        %754 = vmatprep.subr.bf16.mxu0 0
        %755 = vmatpush1.bf16.msra.mxu0 0
        %756 = vmatprep.subr.bf16.mxu0 0
        %757 = vmatpush1.bf16.msra.mxu0 0
        %758 = vmatprep.subr.bf16.mxu0 0
        %759 = vmatpush1.bf16.msra.mxu0 0
        %760 = vmatprep.subr.bf16.mxu0 0
        %761 = vmatpush1.bf16.msra.mxu0 0
        %762 = vmatprep.subr.bf16.mxu0 0
        %763 = vmatpush1.bf16.msra.mxu0 0
        %764 = vmatprep.subr.bf16.mxu0 0
        %765 = vmatpush1.bf16.msra.mxu0 0
        %766 = vmatprep.subr.bf16.mxu0 0
        %767 = vmatpush1.bf16.msra.mxu0 0
        %768 = vmatprep.subr.bf16.mxu0 0
        %769 = vmatpush1.bf16.msra.mxu0 0
        %770 = vmatprep.subr.bf16.mxu0 0
        %771 = vmatpush1.bf16.msra.mxu0 0
        %772 = vmatprep.subr.bf16.mxu0 0
        %773 = vmatpush1.bf16.msra.mxu0 0
        %774 = vmatprep.subr.bf16.mxu0 0
        %775 = vmatpush1.bf16.msra.mxu0 0
        %776 = vmatprep.subr.bf16.mxu0 0
        %777 = vmatpush1.bf16.msra.mxu0 0
        %778 = vmatprep.subr.bf16.mxu0 0
        %779 = vmatpush1.bf16.msra.mxu0 0
        %780 = vmatprep.subr.bf16.mxu0 0
        %781 = vmatpush1.bf16.msra.mxu0 0
        %782 = vmatprep.subr.bf16.mxu0 0
        %783 = vmatpush1.bf16.msra.mxu0 0
        %784 = vmatprep.mubr.bf16.mxu0 0
        %785 = vmatmul.mubr.bf16.gmra.mrb[0].mxu0 %v746
        %v786 = vpop.f32.mrb[0].mxu0
        %v787 = vadd.f32 0.0, %v786
        %v788 = vpop.f32.mrb[0].mxu0
        %v789 = vpop.f32.mrb[0].mxu0
        %v790 = vpop.f32.mrb[0].mxu0
        %791 = vdwg.mxu0
        %793 = vrot.lane.b32.xlu0 %v668, 120
        %v794 = vpop.permute.xlu0 %793
        %v796 = vunpack.c.l.b16 %v671
        %v797 = vpack.c.b16 %v796, %v796
        %798 = vrot.lane.b32.xlu0 %v797, 120
        %v799 = vpop.permute.xlu0 %798
        %v801 = vsel %vm678, %v794, 0
        %v804 = vsel %vm678, %v799, 0
        %806 = vmatprep.subr.bf16.mxu0 0
        %807 = vmatpush1.bf16.xpose.msra.mxu0 %v804
        %808 = vmatprep.subr.bf16.mxu0 0
        %809 = vmatpush1.bf16.xpose.msra.mxu0 0
        %810 = vmatprep.subr.bf16.mxu0 0
        %811 = vmatpush1.bf16.xpose.msra.mxu0 0
        %812 = vmatprep.subr.bf16.mxu0 0
        %813 = vmatpush1.bf16.xpose.msra.mxu0 0
        %814 = vmatprep.subr.bf16.mxu0 0
        %815 = vmatpush1.bf16.xpose.msra.mxu0 0
        %816 = vmatprep.subr.bf16.mxu0 0
        %817 = vmatpush1.bf16.xpose.msra.mxu0 0
        %818 = vmatprep.subr.bf16.mxu0 0
        %819 = vmatpush1.bf16.xpose.msra.mxu0 0
        %820 = vmatprep.subr.bf16.mxu0 0
        %821 = vmatpush1.bf16.xpose.msra.mxu0 0
        %822 = vmatprep.subr.bf16.mxu0 0
        %823 = vmatpush1.bf16.xpose.msra.mxu0 0
        %824 = vmatprep.subr.bf16.mxu0 0
        %825 = vmatpush1.bf16.xpose.msra.mxu0 0
        %826 = vmatprep.subr.bf16.mxu0 0
        %827 = vmatpush1.bf16.xpose.msra.mxu0 0
        %828 = vmatprep.subr.bf16.mxu0 0
        %829 = vmatpush1.bf16.xpose.msra.mxu0 0
        %830 = vmatprep.subr.bf16.mxu0 0
        %831 = vmatpush1.bf16.xpose.msra.mxu0 0
        %832 = vmatprep.subr.bf16.mxu0 0
        %833 = vmatpush1.bf16.xpose.msra.mxu0 0
        %834 = vmatprep.subr.bf16.mxu0 0
        %835 = vmatpush1.bf16.xpose.msra.mxu0 0
        %836 = vmatprep.subr.bf16.mxu0 0
        %837 = vmatpush1.bf16.xpose.msra.mxu0 0
        %838 = vmatprep.mubr.bf16.mxu0 0
        %839 = vmatmul.mubr.bf16.gmra.mrb[0].mxu0 %v801
        %v840 = vpop.f32.mrb[0].mxu0
        %v841 = vadd.f32 0.0, %v840
        %v842 = vpop.f32.mrb[0].mxu0
        %v843 = vpop.f32.mrb[0].mxu0
        %v844 = vpop.f32.mrb[0].mxu0
        %845 = vdwg.mxu0
        %v846 = vsel %vm730, -1e+09, %v841
        %v847 = vsel %vm678, %v846, -inf
        %848 = vmax.xlane.f32.xlu0 %v847
        %v849 = vpop.xlane.xlu0 %848
        %v850 = vsub.f32 %v846, %v849
        %v851 = vmul.f32 %v850, 1.442695
        %v852 = vpow.pop %v851
        %v853 = vsel %vm678, %v852, 0.0
        %854 = vadd.xlane.f32.xlu0 %v853
        %v855 = vpop.xlane.xlu0 %854
        %v856 = vrcp.pop %v855
        %v857 = vmul.f32 %v852, %v856
        %s858 = scalar_lea.vmem %s462, 8 [#allocation4]
        %859 = vst.msk [vmem:[%s858] sm:$0xff] %vm678, %v857
        %v860 = vpack.c.bf16 %v857, %v857
        %v862 = vunpack.c.l.b16 %v672
        %v863 = vpack.c.b16 %v862, %v862
        %864 = vrot.lane.b32.xlu0 %v863, 120
        %v865 = vpop.permute.xlu0 %864
        %v867 = vsel %vm678, %v860, 0
        %v870 = vsel %vm748, %v865, 0
        %872 = vmatprep.subr.bf16.mxu0 0
        %873 = vmatpush1.bf16.msra.mxu0 %v870
        %874 = vmatprep.subr.bf16.mxu0 0
        %875 = vmatpush1.bf16.msra.mxu0 0
        %876 = vmatprep.subr.bf16.mxu0 0
        %877 = vmatpush1.bf16.msra.mxu0 0
        %878 = vmatprep.subr.bf16.mxu0 0
        %879 = vmatpush1.bf16.msra.mxu0 0
        %880 = vmatprep.subr.bf16.mxu0 0
        %881 = vmatpush1.bf16.msra.mxu0 0
        %882 = vmatprep.subr.bf16.mxu0 0
        %883 = vmatpush1.bf16.msra.mxu0 0
        %884 = vmatprep.subr.bf16.mxu0 0
        %885 = vmatpush1.bf16.msra.mxu0 0
        %886 = vmatprep.subr.bf16.mxu0 0
        %887 = vmatpush1.bf16.msra.mxu0 0
        %888 = vmatprep.subr.bf16.mxu0 0
        %889 = vmatpush1.bf16.msra.mxu0 0
        %890 = vmatprep.subr.bf16.mxu0 0
        %891 = vmatpush1.bf16.msra.mxu0 0
        %892 = vmatprep.subr.bf16.mxu0 0
        %893 = vmatpush1.bf16.msra.mxu0 0
        %894 = vmatprep.subr.bf16.mxu0 0
        %895 = vmatpush1.bf16.msra.mxu0 0
        %896 = vmatprep.subr.bf16.mxu0 0
        %897 = vmatpush1.bf16.msra.mxu0 0
        %898 = vmatprep.subr.bf16.mxu0 0
        %899 = vmatpush1.bf16.msra.mxu0 0
        %900 = vmatprep.subr.bf16.mxu0 0
        %901 = vmatpush1.bf16.msra.mxu0 0
        %902 = vmatprep.subr.bf16.mxu0 0
        %903 = vmatpush1.bf16.msra.mxu0 0
        %904 = vmatprep.mubr.bf16.mxu0 0
        %905 = vmatmul.mubr.bf16.gmra.mrb[0].mxu0 %v867
        %v906 = vpop.f32.mrb[0].mxu0
        %v907 = vadd.f32 0.0, %v906
        %v908 = vpop.f32.mrb[0].mxu0
        %v909 = vpop.f32.mrb[0].mxu0
        %v910 = vpop.f32.mrb[0].mxu0
        %911 = vdwg.mxu0
        %912 = vrot.lane.b32.xlu0 %v668, 112
        %v913 = vpop.permute.xlu0 %912
        %914 = vrot.lane.b32.xlu0 %v797, 112
        %v915 = vpop.permute.xlu0 %914
        %v917 = vsel %vm678, %v913, 0
        %v920 = vsel %vm678, %v915, 0
        %922 = vmatprep.subr.bf16.mxu0 0
        %923 = vmatpush1.bf16.xpose.msra.mxu0 %v920
        %924 = vmatprep.subr.bf16.mxu0 0
        %925 = vmatpush1.bf16.xpose.msra.mxu0 0
        %926 = vmatprep.subr.bf16.mxu0 0
        %927 = vmatpush1.bf16.xpose.msra.mxu0 0
        %928 = vmatprep.subr.bf16.mxu0 0
        %929 = vmatpush1.bf16.xpose.msra.mxu0 0
        %930 = vmatprep.subr.bf16.mxu0 0
        %931 = vmatpush1.bf16.xpose.msra.mxu0 0
        %932 = vmatprep.subr.bf16.mxu0 0
        %933 = vmatpush1.bf16.xpose.msra.mxu0 0
        %934 = vmatprep.subr.bf16.mxu0 0
        %935 = vmatpush1.bf16.xpose.msra.mxu0 0
        %936 = vmatprep.subr.bf16.mxu0 0
        %937 = vmatpush1.bf16.xpose.msra.mxu0 0
        %938 = vmatprep.subr.bf16.mxu0 0
        %939 = vmatpush1.bf16.xpose.msra.mxu0 0
        %940 = vmatprep.subr.bf16.mxu0 0
        %941 = vmatpush1.bf16.xpose.msra.mxu0 0
        %942 = vmatprep.subr.bf16.mxu0 0
        %943 = vmatpush1.bf16.xpose.msra.mxu0 0
        %944 = vmatprep.subr.bf16.mxu0 0
        %945 = vmatpush1.bf16.xpose.msra.mxu0 0
        %946 = vmatprep.subr.bf16.mxu0 0
        %947 = vmatpush1.bf16.xpose.msra.mxu0 0
        %948 = vmatprep.subr.bf16.mxu0 0
        %949 = vmatpush1.bf16.xpose.msra.mxu0 0
        %950 = vmatprep.subr.bf16.mxu0 0
        %951 = vmatpush1.bf16.xpose.msra.mxu0 0
        %952 = vmatprep.subr.bf16.mxu0 0
        %953 = vmatpush1.bf16.xpose.msra.mxu0 0
        %954 = vmatprep.mubr.bf16.mxu0 0
        %955 = vmatmul.mubr.bf16.gmra.mrb[0].mxu0 %v917
        %v956 = vpop.f32.mrb[0].mxu0
        %v957 = vadd.f32 0.0, %v956
        %v958 = vpop.f32.mrb[0].mxu0
        %v959 = vpop.f32.mrb[0].mxu0
        %v960 = vpop.f32.mrb[0].mxu0
        %961 = vdwg.mxu0
        %v962 = vsel %vm730, -1e+09, %v957
        %v963 = vsel %vm678, %v962, -inf
        %964 = vmax.xlane.f32.xlu0 %v963
        %v965 = vpop.xlane.xlu0 %964
        %v966 = vsub.f32 %v962, %v965
        %v967 = vmul.f32 %v966, 1.442695
        %v968 = vpow.pop %v967
        %v969 = vsel %vm678, %v968, 0.0
        %970 = vadd.xlane.f32.xlu0 %v969
        %v971 = vpop.xlane.xlu0 %970
        %v972 = vrcp.pop %v971
        %v973 = vmul.f32 %v968, %v972
        %s974 = scalar_lea.vmem %s462, 16 [#allocation4]
        %975 = vst.msk [vmem:[%s974] sm:$0xff] %vm678, %v973
        %v976 = vpack.c.bf16 %v973, %v973
        %977 = vrot.lane.b32.xlu0 %v863, 112
        %v978 = vpop.permute.xlu0 %977
        %v980 = vsel %vm678, %v976, 0
        %v983 = vsel %vm748, %v978, 0
        %985 = vmatprep.subr.bf16.mxu0 0
        %986 = vmatpush1.bf16.msra.mxu0 %v983
        %987 = vmatprep.subr.bf16.mxu0 0
        %988 = vmatpush1.bf16.msra.mxu0 0
        %989 = vmatprep.subr.bf16.mxu0 0
        %990 = vmatpush1.bf16.msra.mxu0 0
        %991 = vmatprep.subr.bf16.mxu0 0
        %992 = vmatpush1.bf16.msra.mxu0 0
        %993 = vmatprep.subr.bf16.mxu0 0
        %994 = vmatpush1.bf16.msra.mxu0 0
        %995 = vmatprep.subr.bf16.mxu0 0
        %996 = vmatpush1.bf16.msra.mxu0 0
        %997 = vmatprep.subr.bf16.mxu0 0
        %998 = vmatpush1.bf16.msra.mxu0 0
        %999 = vmatprep.subr.bf16.mxu0 0
        %1000 = vmatpush1.bf16.msra.mxu0 0
        %1001 = vmatprep.subr.bf16.mxu0 0
        %1002 = vmatpush1.bf16.msra.mxu0 0
        %1003 = vmatprep.subr.bf16.mxu0 0
        %1004 = vmatpush1.bf16.msra.mxu0 0
        %1005 = vmatprep.subr.bf16.mxu0 0
        %1006 = vmatpush1.bf16.msra.mxu0 0
        %1007 = vmatprep.subr.bf16.mxu0 0
        %1008 = vmatpush1.bf16.msra.mxu0 0
        %1009 = vmatprep.subr.bf16.mxu0 0
        %1010 = vmatpush1.bf16.msra.mxu0 0
        %1011 = vmatprep.subr.bf16.mxu0 0
        %1012 = vmatpush1.bf16.msra.mxu0 0
        %1013 = vmatprep.subr.bf16.mxu0 0
        %1014 = vmatpush1.bf16.msra.mxu0 0
        %1015 = vmatprep.subr.bf16.mxu0 0
        %1016 = vmatpush1.bf16.msra.mxu0 0
        %1017 = vmatprep.mubr.bf16.mxu0 0
        %1018 = vmatmul.mubr.bf16.gmra.mrb[0].mxu0 %v980
        %v1019 = vpop.f32.mrb[0].mxu0
        %v1020 = vadd.f32 0.0, %v1019
        %v1021 = vpop.f32.mrb[0].mxu0
        %v1022 = vpop.f32.mrb[0].mxu0
        %v1023 = vpop.f32.mrb[0].mxu0
        %1024 = vdwg.mxu0
        %1025 = vrot.lane.b32.xlu0 %v668, 104
        %v1026 = vpop.permute.xlu0 %1025
        %1027 = vrot.lane.b32.xlu0 %v797, 104
        %v1028 = vpop.permute.xlu0 %1027
        %v1030 = vsel %vm678, %v1026, 0
        %v1033 = vsel %vm678, %v1028, 0
        %1035 = vmatprep.subr.bf16.mxu0 0
        %1036 = vmatpush1.bf16.xpose.msra.mxu0 %v1033
        %1037 = vmatprep.subr.bf16.mxu0 0
        %1038 = vmatpush1.bf16.xpose.msra.mxu0 0
        %1039 = vmatprep.subr.bf16.mxu0 0
        %1040 = vmatpush1.bf16.xpose.msra.mxu0 0
        %1041 = vmatprep.subr.bf16.mxu0 0
        %1042 = vmatpush1.bf16.xpose.msra.mxu0 0
        %1043 = vmatprep.subr.bf16.mxu0 0
        %1044 = vmatpush1.bf16.xpose.msra.mxu0 0
        %1045 = vmatprep.subr.bf16.mxu0 0
        %1046 = vmatpush1.bf16.xpose.msra.mxu0 0
        %1047 = vmatprep.subr.bf16.mxu0 0
        %1048 = vmatpush1.bf16.xpose.msra.mxu0 0
        %1049 = vmatprep.subr.bf16.mxu0 0
        %1050 = vmatpush1.bf16.xpose.msra.mxu0 0
        %1051 = vmatprep.subr.bf16.mxu0 0
        %1052 = vmatpush1.bf16.xpose.msra.mxu0 0
        %1053 = vmatprep.subr.bf16.mxu0 0
        %1054 = vmatpush1.bf16.xpose.msra.mxu0 0
        %1055 = vmatprep.subr.bf16.mxu0 0
        %1056 = vmatpush1.bf16.xpose.msra.mxu0 0
        %1057 = vmatprep.subr.bf16.mxu0 0
        %1058 = vmatpush1.bf16.xpose.msra.mxu0 0
        %1059 = vmatprep.subr.bf16.mxu0 0
        %1060 = vmatpush1.bf16.xpose.msra.mxu0 0
        %1061 = vmatprep.subr.bf16.mxu0 0
        %1062 = vmatpush1.bf16.xpose.msra.mxu0 0
        %1063 = vmatprep.subr.bf16.mxu0 0
        %1064 = vmatpush1.bf16.xpose.msra.mxu0 0
        %1065 = vmatprep.subr.bf16.mxu0 0
        %1066 = vmatpush1.bf16.xpose.msra.mxu0 0
        %1067 = vmatprep.mubr.bf16.mxu0 0
        %1068 = vmatmul.mubr.bf16.gmra.mrb[0].mxu0 %v1030
        %v1069 = vpop.f32.mrb[0].mxu0
        %v1070 = vadd.f32 0.0, %v1069
        %v1071 = vpop.f32.mrb[0].mxu0
        %v1072 = vpop.f32.mrb[0].mxu0
        %v1073 = vpop.f32.mrb[0].mxu0
        %1074 = vdwg.mxu0
        %v1075 = vsel %vm730, -1e+09, %v1070
        %v1076 = vsel %vm678, %v1075, -inf
        %1077 = vmax.xlane.f32.xlu0 %v1076
        %v1078 = vpop.xlane.xlu0 %1077
        %v1079 = vsub.f32 %v1075, %v1078
        %v1080 = vmul.f32 %v1079, 1.442695
        %v1081 = vpow.pop %v1080
        %v1082 = vsel %vm678, %v1081, 0.0
        %1083 = vadd.xlane.f32.xlu0 %v1082
        %v1084 = vpop.xlane.xlu0 %1083
        %v1085 = vrcp.pop %v1084
        %v1086 = vmul.f32 %v1081, %v1085
        %s1087 = scalar_lea.vmem %s462, 24 [#allocation4]
        %1088 = vst.msk [vmem:[%s1087] sm:$0xff] %vm678, %v1086
        %v1089 = vpack.c.bf16 %v1086, %v1086
        %1090 = vrot.lane.b32.xlu0 %v863, 104
        %v1091 = vpop.permute.xlu0 %1090
        %v1093 = vsel %vm678, %v1089, 0
        %v1096 = vsel %vm748, %v1091, 0
        %1098 = vmatprep.subr.bf16.mxu0 0
        %1099 = vmatpush1.bf16.msra.mxu0 %v1096
        %1100 = vmatprep.subr.bf16.mxu0 0
        %1101 = vmatpush1.bf16.msra.mxu0 0
        %1102 = vmatprep.subr.bf16.mxu0 0
        %1103 = vmatpush1.bf16.msra.mxu0 0
        %1104 = vmatprep.subr.bf16.mxu0 0
        %1105 = vmatpush1.bf16.msra.mxu0 0
        %1106 = vmatprep.subr.bf16.mxu0 0
        %1107 = vmatpush1.bf16.msra.mxu0 0
        %1108 = vmatprep.subr.bf16.mxu0 0
        %1109 = vmatpush1.bf16.msra.mxu0 0
        %1110 = vmatprep.subr.bf16.mxu0 0
        %1111 = vmatpush1.bf16.msra.mxu0 0
        %1112 = vmatprep.subr.bf16.mxu0 0
        %1113 = vmatpush1.bf16.msra.mxu0 0
        %1114 = vmatprep.subr.bf16.mxu0 0
        %1115 = vmatpush1.bf16.msra.mxu0 0
        %1116 = vmatprep.subr.bf16.mxu0 0
        %1117 = vmatpush1.bf16.msra.mxu0 0
        %1118 = vmatprep.subr.bf16.mxu0 0
        %1119 = vmatpush1.bf16.msra.mxu0 0
        %1120 = vmatprep.subr.bf16.mxu0 0
        %1121 = vmatpush1.bf16.msra.mxu0 0
        %1122 = vmatprep.subr.bf16.mxu0 0
        %1123 = vmatpush1.bf16.msra.mxu0 0
        %1124 = vmatprep.subr.bf16.mxu0 0
        %1125 = vmatpush1.bf16.msra.mxu0 0
        %1126 = vmatprep.subr.bf16.mxu0 0
        %1127 = vmatpush1.bf16.msra.mxu0 0
        %1128 = vmatprep.subr.bf16.mxu0 0
        %1129 = vmatpush1.bf16.msra.mxu0 0
        %1130 = vmatprep.mubr.bf16.mxu0 0
        %1131 = vmatmul.mubr.bf16.gmra.mrb[0].mxu0 %v1093
        %v1132 = vpop.f32.mrb[0].mxu0
        %v1133 = vadd.f32 0.0, %v1132
        %v1134 = vpop.f32.mrb[0].mxu0
        %v1135 = vpop.f32.mrb[0].mxu0
        %v1136 = vpop.f32.mrb[0].mxu0
        %1137 = vdwg.mxu0
        %1139 = vrot.lane.b32.xlu0 %v907, 8
        %v1140 = vpop.permute.xlu0 %1139
        %1143 = vrot.lane.b32.xlu0 %v1020, 16
        %v1144 = vpop.permute.xlu0 %1143
        %1147 = vrot.lane.b32.xlu0 %v1133, 24
        %v1148 = vpop.permute.xlu0 %1147
        %v1150 = vsel %vm678, %v787, %v1140
        %vm1151 = vcmask 130048
        %v1152 = vsel %vm1151, %v1150, %v1144
        %vm1153 = vcmask 195584
        %v1154 = vsel %vm1153, %v1152, %v1148
        %v1155 = vpack.c.bf16 %v1154, %v1154
        %v1157 = vlaneseq
        %v1158 = vshrl.u32 %v1157, 7
        %v1159 = vsub.s32 0, %v1158
        %v1160 = vrot.slane %v677, %v1159
        %v1162 = vadd.f32 %v568, %v1160
        %v1167 = vunpack.c.l.b16 %v673
        %v1168 = vunpack.c.l.b16 %v674
        %v1169 = vunpack.c.l.b16 %v675
        %v1170 = vunpack.c.l.b16 %v676
        %v1171 = vpack.c.b16 %v1168, %v1167
        %v1172 = vpack.c.b16 %v1170, %v1169
        %v1176 = vsel %vm571, %v1155, 0
        %1178 = vmatprep.subr.bf16.mxu0 0
        %1179 = vmatpush1.bf16.msra.mxu0 %v1171
        %1180 = vmatprep.subr.bf16.mxu0 0
        %1181 = vmatpush1.bf16.msra.mxu0 %v1172
        %1182 = vmatprep.subr.bf16.mxu0 0
        %1183 = vmatpush1.bf16.msra.mxu0 0
        %1184 = vmatprep.subr.bf16.mxu0 0
        %1185 = vmatpush1.bf16.msra.mxu0 0
        %1186 = vmatprep.subr.bf16.mxu0 0
        %1187 = vmatpush1.bf16.msra.mxu0 0
        %1188 = vmatprep.subr.bf16.mxu0 0
        %1189 = vmatpush1.bf16.msra.mxu0 0
        %1190 = vmatprep.subr.bf16.mxu0 0
        %1191 = vmatpush1.bf16.msra.mxu0 0
        %1192 = vmatprep.subr.bf16.mxu0 0
        %1193 = vmatpush1.bf16.msra.mxu0 0
        %1194 = vmatprep.subr.bf16.mxu0 0
        %1195 = vmatpush1.bf16.msra.mxu0 0
        %1196 = vmatprep.subr.bf16.mxu0 0
        %1197 = vmatpush1.bf16.msra.mxu0 0
        %1198 = vmatprep.subr.bf16.mxu0 0
        %1199 = vmatpush1.bf16.msra.mxu0 0
        %1200 = vmatprep.subr.bf16.mxu0 0
        %1201 = vmatpush1.bf16.msra.mxu0 0
        %1202 = vmatprep.subr.bf16.mxu0 0
        %1203 = vmatpush1.bf16.msra.mxu0 0
        %1204 = vmatprep.subr.bf16.mxu0 0
        %1205 = vmatpush1.bf16.msra.mxu0 0
        %1206 = vmatprep.subr.bf16.mxu0 0
        %1207 = vmatpush1.bf16.msra.mxu0 0
        %1208 = vmatprep.subr.bf16.mxu0 0
        %1209 = vmatpush1.bf16.msra.mxu0 0
        %1210 = vmatprep.mubr.bf16.mxu0 0
        %1211 = vmatmul.mubr.bf16.gmra.mrb[0].mxu0 %v1176
        %v1212 = vpop.f32.mrb[0].mxu0
        %v1213 = vadd.f32 0.0, %v1212
        %v1214 = vpop.f32.mrb[0].mxu0
        %v1215 = vpop.f32.mrb[0].mxu0
        %v1216 = vpop.f32.mrb[0].mxu0
        %1217 = vdwg.mxu0
        %v1218 = vadd.f32 %v1162, %v1213
        %1219 = vst.msk [vmem:[%s483] sm:$0xff] %vm571, %v1218
        %p1220 = scmp.lt.s32.totalorder %s31, 1
        %s1221 = scalar_select %p1220, %s31, 1
        %p1222 = scmp.lt.s32.totalorder %s32, 0
        %s1223 = scalar_select %p1222, %s32, 0
        %s1224 = sadd.s32 %s1223, %s1221
        %s1225 = smul.addr %s1224, 8
        %s1226 = scalar_lea.vmem %s11, %s1225
        %s1227 = sand.u32 %s325, 1
        %s1228 = scalar_lea.sflag [#allocation5], %s1227
        %s1229 = sand.u32 %s325, 1
        %s1230 = smul.addr %s1229, 32
        %s1231 = scalar_lea.vmem [#allocation4], %s1230
        // Predicated region
        $region69: #{decoder_layer.4} parent=63 // pred_check
          %p1232 = pneg %p307
        $region70: #{decoder_layer.4} parent=63 // pred_check_branch
          %1234 = sbr.rel (%p1232) target = $region72
        $region71: #{decoder_layer.4} parent=63 // pred_region
          _
        $region72: #{decoder_layer.4} parent=63 // pred_fallthru
          _
        // Predicated region
        $region73: #{decoder_layer.4} parent=63 // pred_check
          %p1235 = pneg %p335
        $region74: #{decoder_layer.4} parent=63 // pred_check_branch
          %1237 = sbr.rel (%p1235) target = $region76
        $region75: #{decoder_layer.4} parent=63 // pred_region
          %s1239 = ssub.s32 512, 512
          %1240 = vsyncadd %s1228, %s1239
          %s1241 = smul.addr %s31, 4
          %s1242 = sadd.s32 %s32, %s1241
          %s1243 = smul.addr %s1242, 128
          %s1244 = scalar_lea.hbm %s12, %s1243
          %s1245 = sshll.u32 %s1231, 4
          %s1246 = int_to_ptr.vmem [resolvable:$true] %s1245
          %1251 = dma.vmem_to_hbm [thread:$0]  %s1246, 512, %s1244, %s1228, 128, 128, 8
        $region76: #{decoder_layer.4} parent=63 // pred_fallthru
          _
      $region64: #{decoder_layer.4} parent=5 // pred_fallthru
        _
      %p1252 = scmp.le.s32.totalorder 2, %s22
      // Predicated region
      $region77: #{decoder_layer.4} parent=5 // pred_check
        %p1253 = pneg %p1252
      $region78: #{decoder_layer.4} parent=5 // pred_check_branch
        %1255 = sbr.rel (%p1253) target = $region80
      $region79: #{decoder_layer.4} parent=5 // pred_region
        %s1256 = ssub.s32 %s22, 2
        // Predicated region
        $region81: #{decoder_layer.4} parent=79 // pred_check
          %p1257 = pneg %p313
        $region82: #{decoder_layer.4} parent=79 // pred_check_branch
          %1259 = sbr.rel (%p1257) target = $region84
        $region83: #{decoder_layer.4} parent=79 // pred_region
          %p1260 = scmp.lt.s32.totalorder %s33, 1
          %s1261 = scalar_select %p1260, %s33, 1
          %p1262 = scmp.lt.s32.totalorder %s34, 0
          %s1263 = scalar_select %p1262, %s34, 0
          %s1264 = sadd.s32 %s1263, %s1261
          %s1265 = smul.addr %s1264, 8
          %s1266 = scalar_lea.vmem %s11, %s1265
        $region84: #{decoder_layer.4} parent=79 // pred_fallthru
          _
        // Predicated region
        $region85: #{decoder_layer.4} parent=79 // pred_check
          %p1267 = pneg %p341
        $region86: #{decoder_layer.4} parent=79 // pred_check_branch
          %1269 = sbr.rel (%p1267) target = $region88
        $region87: #{decoder_layer.4} parent=79 // pred_region
          %s1270 = sand.u32 %s326, 1
          %s1271 = scalar_lea.sflag [#allocation5], %s1270
          %s1272 = sand.u32 %s326, 1
          %s1273 = smul.addr %s1272, 32
          %s1274 = scalar_lea.vmem [#allocation4], %s1273
          %1275 = dma.done %s1271, 512
        $region88: #{decoder_layer.4} parent=79 // pred_fallthru
          _
      $region80: #{decoder_layer.4} parent=5 // pred_fallthru
        _
    $region6: #{decoder_layer.4} parent=1 // loop_footer
      %s26 = sadd.s32 1, %s22
    $region7: #{decoder_layer.4} parent=1 // loop_footer_branch
      %21 = sbr.rel target = $region3
    $region8: #{decoder_layer.4} parent=1 // loop_exit
      _
    %1276 = vsyncpa [#allocation5], 1
    %s1277 = scalar_lea.sflag [#allocation5], 1
    %1278 = vsyncpa %s1277, 1

</llo_original>
